<compile_context>
chip_gen: v6e
topology: v6e:2x2x1
jax: 0.10.0
libtpu: 0.0.40
codegen_flags: <defaults>
</compile_context>

<pallas_src>
import functools

import jax
import jax.numpy as jnp
from jax.experimental import pallas as pl
from jax.experimental.pallas import tpu as pltpu


# ---------------------------------------------------------------------------
# Tiling helpers
# ---------------------------------------------------------------------------

def _fit_tile(dim, target):
    """Largest divisor of `dim` (by halving) not exceeding `target`."""
    t = min(target, dim)
    while t > 1 and dim % t != 0:
        t //= 2
    return max(t, 1)


def _pick_tiles(M, K, N, tm_target=512, tk_target=512, tn_target=512):
    tm = _fit_tile(M, tm_target)
    # Keep >= 2 blocks on the parallel M axis when possible (v7x has 2 TCs).
    if M // tm < 2 and tm >= 256 and M % (tm // 2) == 0:
        tm //= 2
    tk = _fit_tile(K, tk_target)
    tn = _fit_tile(N, tn_target)
    return tm, tk, tn


_DIM_SEM = pltpu.CompilerParams(
    dimension_semantics=("parallel", "parallel", "arbitrary"))


# ---------------------------------------------------------------------------
# Kernel 1: plain linear  o = x @ w + b   (lin1 / lin2)
# ---------------------------------------------------------------------------

def _linear_kernel_single_k(x_ref, w_ref, b_ref, o_ref):
    xb = x_ref[...].astype(jnp.bfloat16)
    acc = jnp.dot(xb, w_ref[...], preferred_element_type=jnp.float32)
    o_ref[...] = (acc + b_ref[...]).astype(o_ref.dtype)


def _linear_kernel_multi_k(x_ref, w_ref, b_ref, o_ref, acc_ref):
    @pl.when(pl.program_id(2) == 0)
    def _():
        acc_ref[...] = jnp.zeros_like(acc_ref)

    xb = x_ref[...].astype(jnp.bfloat16)
    acc_ref[...] += jnp.dot(xb, w_ref[...], preferred_element_type=jnp.float32)

    @pl.when(pl.program_id(2) == pl.num_programs(2) - 1)
    def _():
        o_ref[...] = (acc_ref[...] + b_ref[...]).astype(o_ref.dtype)


def pallas_linear(x, w, b, out_dtype=jnp.float32,
                  tm_target=512, tk_target=512, tn_target=512):
    """x:[M,K] @ w:[K,N] + b:[N] -> [M,N]; bf16 operands, f32 accumulate."""
    M, K = x.shape
    K2, N = w.shape
    assert K == K2
    tm, tk, tn = _pick_tiles(M, K, N, tm_target, tk_target, tn_target)
    grid = (M // tm, N // tn, K // tk)
    multi_k = grid[2] > 1

    w_bf = w.astype(jnp.bfloat16)
    b2 = b.reshape(1, N).astype(jnp.float32)

    kernel = _linear_kernel_multi_k if multi_k else _linear_kernel_single_k
    scratch = (pltpu.VMEM((tm, tn), jnp.float32),) if multi_k else ()

    return pl.pallas_call(
        kernel,
        out_shape=jax.ShapeDtypeStruct((M, N), out_dtype),
        grid_spec=pltpu.PrefetchScalarGridSpec(
            num_scalar_prefetch=0,
            grid=grid,
            in_specs=[
                pl.BlockSpec((tm, tk), lambda i, j, k: (i, k)),
                pl.BlockSpec((tk, tn), lambda i, j, k: (k, j)),
                pl.BlockSpec((1, tn), lambda i, j, k: (0, j)),
            ],
            out_specs=pl.BlockSpec((tm, tn), lambda i, j, k: (i, j)),
            scratch_shapes=scratch,
        ),
        compiler_params=_DIM_SEM,
    )(x, w_bf, b2)


# ---------------------------------------------------------------------------
# Kernel 2: fused BatchNorm(eval) + ReLU prologue + X @ W   (GNNBlock front)
#   h = relu(x * scale + shift) @ W
# ---------------------------------------------------------------------------

def _bn_relu_mm_kernel_single_k(x_ref, s_ref, t_ref, w_ref, o_ref):
    xb = jnp.maximum(x_ref[...] * s_ref[...] + t_ref[...], 0.0)
    o_ref[...] = jnp.dot(xb.astype(jnp.bfloat16), w_ref[...],
                         preferred_element_type=jnp.float32).astype(o_ref.dtype)


def _bn_relu_mm_kernel_multi_k(x_ref, s_ref, t_ref, w_ref, o_ref, acc_ref):
    @pl.when(pl.program_id(2) == 0)
    def _():
        acc_ref[...] = jnp.zeros_like(acc_ref)

    xb = jnp.maximum(x_ref[...] * s_ref[...] + t_ref[...], 0.0)
    acc_ref[...] += jnp.dot(xb.astype(jnp.bfloat16), w_ref[...],
                            preferred_element_type=jnp.float32)

    @pl.when(pl.program_id(2) == pl.num_programs(2) - 1)
    def _():
        o_ref[...] = acc_ref[...].astype(o_ref.dtype)


def pallas_bn_relu_matmul(x, scale, shift, w, out_dtype=jnp.bfloat16,
                          tm_target=512, tk_target=512, tn_target=512):
    """relu(x * scale + shift) @ w  with per-channel scale/shift over K."""
    M, K = x.shape
    K2, N = w.shape
    assert K == K2
    tm, tk, tn = _pick_tiles(M, K, N, tm_target, tk_target, tn_target)
    grid = (M // tm, N // tn, K // tk)
    multi_k = grid[2] > 1

    w_bf = w.astype(jnp.bfloat16)
    s2 = scale.reshape(1, K).astype(jnp.float32)
    t2 = shift.reshape(1, K).astype(jnp.float32)

    kernel = _bn_relu_mm_kernel_multi_k if multi_k else _bn_relu_mm_kernel_single_k
    scratch = (pltpu.VMEM((tm, tn), jnp.float32),) if multi_k else ()

    return pl.pallas_call(
        kernel,
        out_shape=jax.ShapeDtypeStruct((M, N), out_dtype),
        grid_spec=pltpu.PrefetchScalarGridSpec(
            num_scalar_prefetch=0,
            grid=grid,
            in_specs=[
                pl.BlockSpec((tm, tk), lambda i, j, k: (i, k)),
                pl.BlockSpec((1, tk), lambda i, j, k: (0, k)),
                pl.BlockSpec((1, tk), lambda i, j, k: (0, k)),
                pl.BlockSpec((tk, tn), lambda i, j, k: (k, j)),
            ],
            out_specs=pl.BlockSpec((tm, tn), lambda i, j, k: (i, j)),
            scratch_shapes=scratch,
        ),
        compiler_params=_DIM_SEM,
    )(x, s2, t2, w_bf)


# ---------------------------------------------------------------------------
# Kernel 3: GCN aggregation + bias + residual + JK accumulation epilogue
#   x_new     = A_norm @ h + b + x_prev
#   x_local'  = x_local + x_new
# ---------------------------------------------------------------------------

def _agg_res_kernel_single_k(a_ref, h_ref, b_ref, xp_ref, xl_ref,
                             ox_ref, ol_ref):
    xn = jnp.dot(a_ref[...], h_ref[...], preferred_element_type=jnp.float32)
    xn = xn + b_ref[...] + xp_ref[...]
    ox_ref[...] = xn.astype(ox_ref.dtype)
    ol_ref[...] = (xl_ref[...] + xn).astype(ol_ref.dtype)


def _agg_res_kernel_multi_k(a_ref, h_ref, b_ref, xp_ref, xl_ref,
                            ox_ref, ol_ref, acc_ref):
    @pl.when(pl.program_id(2) == 0)
    def _():
        acc_ref[...] = jnp.zeros_like(acc_ref)

    acc_ref[...] += jnp.dot(a_ref[...], h_ref[...],
                            preferred_element_type=jnp.float32)

    @pl.when(pl.program_id(2) == pl.num_programs(2) - 1)
    def _():
        xn = acc_ref[...] + b_ref[...] + xp_ref[...]
        ox_ref[...] = xn.astype(ox_ref.dtype)
        ol_ref[...] = (xl_ref[...] + xn).astype(ol_ref.dtype)


def pallas_agg_residual(a_norm_bf16, h, bias, x_prev, x_local,
                        tm_target=512, tk_target=512, tn_target=512):
    M, K = a_norm_bf16.shape
    K2, N = h.shape
    assert K == K2
    tm, tk, tn = _pick_tiles(M, K, N, tm_target, tk_target, tn_target)
    grid = (M // tm, N // tn, K // tk)
    multi_k = grid[2] > 1

    b2 = bias.reshape(1, N).astype(jnp.float32)
    kernel = _agg_res_kernel_multi_k if multi_k else _agg_res_kernel_single_k
    scratch = (pltpu.VMEM((tm, tn), jnp.float32),) if multi_k else ()

    x_new, x_local_new = pl.pallas_call(
        kernel,
        out_shape=(jax.ShapeDtypeStruct((M, N), jnp.float32),
                   jax.ShapeDtypeStruct((M, N), jnp.float32)),
        grid_spec=pltpu.PrefetchScalarGridSpec(
            num_scalar_prefetch=0,
            grid=grid,
            in_specs=[
                pl.BlockSpec((tm, tk), lambda i, j, k: (i, k)),   # A_norm
                pl.BlockSpec((tk, tn), lambda i, j, k: (k, j)),   # h = relu(bn(x)) @ W
                pl.BlockSpec((1, tn), lambda i, j, k: (0, j)),    # conv bias
                pl.BlockSpec((tm, tn), lambda i, j, k: (i, j)),   # x_prev (residual)
                pl.BlockSpec((tm, tn), lambda i, j, k: (i, j)),   # x_local (JK)
            ],
            out_specs=[
                pl.BlockSpec((tm, tn), lambda i, j, k: (i, j)),
                pl.BlockSpec((tm, tn), lambda i, j, k: (i, j)),
            ],
            scratch_shapes=scratch,
        ),
        compiler_params=_DIM_SEM,
    )(a_norm_bf16, h, b2, x_prev, x_local)
    return x_new, x_local_new


# ---------------------------------------------------------------------------
# Glue: dense GCN-normalized adjacency + parameter init + forward pass
# ---------------------------------------------------------------------------

def build_gcn_adj(edge_index, num_nodes):
    """Dense D^-1/2 (A + I) D^-1/2 from edge_index [2, E] (src, dst)."""
    # TODO(synk): replace the dense N x N adjacency with a CSR / block-sparse
    # gather aggregation (scalar-prefetch row pointers + manual DMA) for
    # realistic ogbn-products scale; dense is used here for the small example.
    src, dst = edge_index[0], edge_index[1]
    A = jnp.zeros((num_nodes, num_nodes), jnp.float32)
    A = A.at[dst, src].add(1.0)                 # A[i, j] counts edges j -> i
    A_hat = A + jnp.eye(num_nodes, dtype=jnp.float32)
    deg = A_hat.sum(axis=1)
    dinv = jnp.where(deg > 0, jax.lax.rsqrt(deg), 0.0)
    return dinv[:, None] * A_hat * dinv[None, :]


def init_params(key, in_c, hid, out_c, num_layers):
    def glorot(key, shape):
        fan_in, fan_out = shape[0], shape[1]
        lim = (6.0 / (fan_in + fan_out)) ** 0.5
        return jax.random.uniform(key, shape, jnp.float32, -lim, lim)

    keys = jax.random.split(key, 4 + 2 * num_layers)
    params = {
        "lin1_w": glorot(keys[0], (in_c, hid)),
        "lin1_b": jax.random.normal(keys[1], (hid,), jnp.float32) * 0.01,
        "lin2_w": glorot(keys[2], (hid, out_c)),
        "lin2_b": jax.random.normal(keys[3], (out_c,), jnp.float32) * 0.01,
        # final BatchNorm1d(hidden) — unused under jk=True (kept for fidelity)
        "norm_gamma": jnp.ones((hid,), jnp.float32),
        "norm_beta": jnp.zeros((hid,), jnp.float32),
        "norm_mean": jnp.zeros((hid,), jnp.float32),
        "norm_var": jnp.ones((hid,), jnp.float32),
        "layers": [],
    }
    for l in range(num_layers):
        kw, kb = keys[4 + 2 * l], keys[5 + 2 * l]
        params["layers"].append({
            "gamma": jnp.ones((hid,), jnp.float32),
            "beta": jnp.zeros((hid,), jnp.float32),
            "mean": jnp.zeros((hid,), jnp.float32),
            "var": jnp.ones((hid,), jnp.float32),
            "conv_w": glorot(kw, (hid, hid)),
            "conv_b": jax.random.normal(kb, (hid,), jnp.float32) * 0.01,
        })
    return params


@functools.partial(jax.jit)
def gnn_forward(x, a_norm, params):
    eps = 1e-5
    a_bf16 = a_norm.astype(jnp.bfloat16)          # halve HBM bytes for A_norm

    # x = lin1(x);  x_local += x
    x = pallas_linear(x, params["lin1_w"], params["lin1_b"])
    x_local = x

    for layer in params["layers"]:
        # GNNBlock: BatchNorm1d(eval) -> ReLU -> dropout(identity) -> GCNConv
        # TODO(synk): dropout is identity in eval mode (training=False)
        scale = layer["gamma"] * jax.lax.rsqrt(layer["var"] + eps)
        shift = layer["beta"] - layer["mean"] * scale
        # h = relu(bn(x)) @ W   (BN+ReLU fused as matmul prologue)
        h = pallas_bn_relu_matmul(x, scale, shift, layer["conv_w"])
        # x = A_norm @ h + b + x ; x_local += x   (residual + JK fused epilogue)
        x, x_local = pallas_agg_residual(a_bf16, h, layer["conv_b"], x, x_local)

    # Post-loop norm+relu+dropout operate on `x`, which is then replaced by
    # x_local (jk=True) before lin2 — dead compute in the reference; skipped.

    # lin2 on the jumping-knowledge sum; pad out_channels to 128 lanes for
    # lane-dense stores, slice back afterwards.
    hid, out_c = params["lin2_w"].shape
    n_pad = max(128, ((out_c + 127) // 128) * 128)
    w2 = jnp.zeros((hid, n_pad), jnp.float32).at[:, :out_c].set(params["lin2_w"])
    b2 = jnp.zeros((n_pad,), jnp.float32).at[:out_c].set(params["lin2_b"])
    out = pallas_linear(x_local, w2, b2)
    return out[:, :out_c]


if __name__ == "__main__":
    key = jax.random.PRNGKey(0)
    k_feat, k_edge, k_par = jax.random.split(key, 3)

    num_nodes = 256
    in_channels = 64
    hidden_channels = 128
    out_channels = 32
    num_layers = 2
    num_edges = 1024

    x = jax.random.normal(k_feat, (num_nodes, in_channels), jnp.float32)
    edge_index = jax.random.randint(k_edge, (2, num_edges), 0, num_nodes,
                                    dtype=jnp.int32)

    a_norm = build_gcn_adj(edge_index, num_nodes)
    params = init_params(k_par, in_channels, hidden_channels, out_channels,
                         num_layers)

    out = gnn_forward(x, a_norm, params)
    jax.block_until_ready(out)
    assert out.shape == (num_nodes, out_channels)
    print("KERNEL_OK")
</pallas_src>

<mosaic_0001>
module attributes {stable_mosaic.version = 11 : i64} {
  func.func @_linear_kernel_single_k(%arg0: i32, %arg1: i32, %arg2: i32, %arg3: memref<128x64xf32, #tpu.memory_space<vmem>>, %arg4: memref<64x128xbf16, #tpu.memory_space<vmem>>, %arg5: memref<1x128xf32, #tpu.memory_space<vmem>>, %arg6: memref<128x128xf32, #tpu.memory_space<vmem>>) attributes {dimension_semantics = [#tpu.dimension_semantics<parallel>, #tpu.dimension_semantics<parallel>, #tpu.dimension_semantics<arbitrary>], iteration_bounds = array<i64: 2, 1, 1>, scalar_prefetch = 0 : i64, scratch_operands = 0 : i64, tpu.core_type = #tpu.core_type<tc>, window_params = [{transform_indices = @transform_0, window_bounds = array<i64: 128, 64>}, {transform_indices = @transform_1, window_bounds = array<i64: 64, 128>}, {transform_indices = @transform_2, window_bounds = array<i64: 1, 128>}, {transform_indices = @transform_3, window_bounds = array<i64: 128, 128>}]} {
    %c0 = arith.constant 0 : index
    %c0_0 = arith.constant 0 : index
    %0 = vector.load %arg3[%c0, %c0_0] : memref<128x64xf32, #tpu.memory_space<vmem>>, vector<128x64xf32>
    %1 = arith.truncf %0 : vector<128x64xf32> to vector<128x64xbf16>
    %c0_1 = arith.constant 0 : index
    %c0_2 = arith.constant 0 : index
    %2 = vector.load %arg4[%c0_1, %c0_2] : memref<64x128xbf16, #tpu.memory_space<vmem>>, vector<64x128xbf16>
    %cst = arith.constant dense<0.000000e+00> : vector<128x128xf32>
    %3 = tpu.matmul %1, %2, %cst {dimension_numbers = #tpu.dot_dimension_numbers<[1], [0], [0], [1], [0, 0, 1, 1], [], []>} : vector<128x64xbf16>, vector<64x128xbf16>, vector<128x128xf32> -> vector<128x128xf32>
    %c0_3 = arith.constant 0 : index
    %c0_4 = arith.constant 0 : index
    %4 = vector.load %arg5[%c0_3, %c0_4] : memref<1x128xf32, #tpu.memory_space<vmem>>, vector<1x128xf32>
    %5 = vector.broadcast %4 : vector<1x128xf32> to vector<128x128xf32>
    %6 = arith.addf %3, %5 : vector<128x128xf32>
    %c0_5 = arith.constant 0 : index
    %c0_6 = arith.constant 0 : index
    %7 = vector.load %arg6[%c0_5, %c0_6] : memref<128x128xf32, #tpu.memory_space<vmem>>, vector<128x128xf32>
    tpu.vector_store %arg6[%c0_5, %c0_6], %6 {strides = array<i32>} : memref<128x128xf32, #tpu.memory_space<vmem>>, vector<128x128xf32>,
    return
  }
  func.func @transform_0(%arg0: i32, %arg1: i32, %arg2: i32) -> (i32, i32) {
    %c0_i32 = arith.constant 0 : i32
    return %arg0, %arg2 : i32, i32
  }
  func.func @transform_1(%arg0: i32, %arg1: i32, %arg2: i32) -> (i32, i32) {
    %c0_i32 = arith.constant 0 : i32
    return %arg2, %arg1 : i32, i32
  }
  func.func @transform_2(%arg0: i32, %arg1: i32, %arg2: i32) -> (i32, i32) {
    %c0_i32 = arith.constant 0 : i32
    %c0_i32_0 = arith.constant 0 : i32
    return %c0_i32, %arg1 : i32, i32
  }
  func.func @transform_3(%arg0: i32, %arg1: i32, %arg2: i32) -> (i32, i32) {
    %c0_i32 = arith.constant 0 : i32
    return %arg0, %arg1 : i32, i32
  }
}

module attributes {stable_mosaic.version = 11 : i64} {
  func.func @_agg_res_kernel_single_k(%arg0: i32, %arg1: i32, %arg2: i32, %arg3: memref<128x256xbf16, #tpu.memory_space<vmem>>, %arg4: memref<256x128xbf16, #tpu.memory_space<vmem>>, %arg5: memref<1x128xf32, #tpu.memory_space<vmem>>, %arg6: memref<128x128xf32, #tpu.memory_space<vmem>>, %arg7: memref<128x128xf32, #tpu.memory_space<vmem>>, %arg8: memref<128x128xf32, #tpu.memory_space<vmem>>, %arg9: memref<128x128xf32, #tpu.memory_space<vmem>>) attributes {dimension_semantics = [#tpu.dimension_semantics<parallel>, #tpu.dimension_semantics<parallel>, #tpu.dimension_semantics<arbitrary>], iteration_bounds = array<i64: 2, 1, 1>, scalar_prefetch = 0 : i64, scratch_operands = 0 : i64, tpu.core_type = #tpu.core_type<tc>, window_params = [{transform_indices = @transform_0, window_bounds = array<i64: 128, 256>}, {transform_indices = @transform_1, window_bounds = array<i64: 256, 128>}, {transform_indices = @transform_2, window_bounds = array<i64: 1, 128>}, {transform_indices = @transform_3, window_bounds = array<i64: 128, 128>}, {transform_indices = @transform_4, window_bounds = array<i64: 128, 128>}, {transform_indices = @transform_5, window_bounds = array<i64: 128, 128>}, {transform_indices = @transform_6, window_bounds = array<i64: 128, 128>}]} {
    %c0 = arith.constant 0 : index
    %c0_0 = arith.constant 0 : index
    %0 = vector.load %arg3[%c0, %c0_0] : memref<128x256xbf16, #tpu.memory_space<vmem>>, vector<128x256xbf16>
    %c0_1 = arith.constant 0 : index
    %c0_2 = arith.constant 0 : index
    %1 = vector.load %arg4[%c0_1, %c0_2] : memref<256x128xbf16, #tpu.memory_space<vmem>>, vector<256x128xbf16>
    %cst = arith.constant dense<0.000000e+00> : vector<128x128xf32>
    %2 = tpu.matmul %0, %1, %cst {dimension_numbers = #tpu.dot_dimension_numbers<[1], [0], [0], [1], [0, 0, 1, 1], [], []>} : vector<128x256xbf16>, vector<256x128xbf16>, vector<128x128xf32> -> vector<128x128xf32>
    %c0_3 = arith.constant 0 : index
    %c0_4 = arith.constant 0 : index
    %3 = vector.load %arg5[%c0_3, %c0_4] : memref<1x128xf32, #tpu.memory_space<vmem>>, vector<1x128xf32>
    %4 = vector.broadcast %3 : vector<1x128xf32> to vector<128x128xf32>
    %5 = arith.addf %2, %4 : vector<128x128xf32>
    %c0_5 = arith.constant 0 : index
    %c0_6 = arith.constant 0 : index
    %6 = vector.load %arg6[%c0_5, %c0_6] : memref<128x128xf32, #tpu.memory_space<vmem>>, vector<128x128xf32>
    %7 = arith.addf %5, %6 : vector<128x128xf32>
    %c0_7 = arith.constant 0 : index
    %c0_8 = arith.constant 0 : index
    %8 = vector.load %arg8[%c0_7, %c0_8] : memref<128x128xf32, #tpu.memory_space<vmem>>, vector<128x128xf32>
    tpu.vector_store %arg8[%c0_7, %c0_8], %7 {strides = array<i32>} : memref<128x128xf32, #tpu.memory_space<vmem>>, vector<128x128xf32>,
    %c0_9 = arith.constant 0 : index
    %c0_10 = arith.constant 0 : index
    %9 = vector.load %arg7[%c0_9, %c0_10] : memref<128x128xf32, #tpu.memory_space<vmem>>, vector<128x128xf32>
    %10 = arith.addf %9, %7 : vector<128x128xf32>
    %c0_11 = arith.constant 0 : index
    %c0_12 = arith.constant 0 : index
    %11 = vector.load %arg9[%c0_11, %c0_12] : memref<128x128xf32, #tpu.memory_space<vmem>>, vector<128x128xf32>
    tpu.vector_store %arg9[%c0_11, %c0_12], %10 {strides = array<i32>} : memref<128x128xf32, #tpu.memory_space<vmem>>, vector<128x128xf32>,
    return
  }
  func.func @transform_0(%arg0: i32, %arg1: i32, %arg2: i32) -> (i32, i32) {
    %c0_i32 = arith.constant 0 : i32
    return %arg0, %arg2 : i32, i32
  }
  func.func @transform_1(%arg0: i32, %arg1: i32, %arg2: i32) -> (i32, i32) {
    %c0_i32 = arith.constant 0 : i32
    return %arg2, %arg1 : i32, i32
  }
  func.func @transform_2(%arg0: i32, %arg1: i32, %arg2: i32) -> (i32, i32) {
    %c0_i32 = arith.constant 0 : i32
    %c0_i32_0 = arith.constant 0 : i32
    return %c0_i32, %arg1 : i32, i32
  }
  func.func @transform_3(%arg0: i32, %arg1: i32, %arg2: i32) -> (i32, i32) {
    %c0_i32 = arith.constant 0 : i32
    return %arg0, %arg1 : i32, i32
  }
  func.func @transform_4(%arg0: i32, %arg1: i32, %arg2: i32) -> (i32, i32) {
    %c0_i32 = arith.constant 0 : i32
    return %arg0, %arg1 : i32, i32
  }
  func.func @transform_5(%arg0: i32, %arg1: i32, %arg2: i32) -> (i32, i32) {
    %c0_i32 = arith.constant 0 : i32
    return %arg0, %arg1 : i32, i32
  }
  func.func @transform_6(%arg0: i32, %arg1: i32, %arg2: i32) -> (i32, i32) {
    %c0_i32 = arith.constant 0 : i32
    return %arg0, %arg1 : i32, i32
  }
}

module attributes {stable_mosaic.version = 11 : i64} {
  func.func @_bn_relu_mm_kernel_single_k(%arg0: i32, %arg1: i32, %arg2: i32, %arg3: memref<128x128xf32, #tpu.memory_space<vmem>>, %arg4: memref<1x128xf32, #tpu.memory_space<vmem>>, %arg5: memref<1x128xf32, #tpu.memory_space<vmem>>, %arg6: memref<128x128xbf16, #tpu.memory_space<vmem>>, %arg7: memref<128x128xbf16, #tpu.memory_space<vmem>>) attributes {dimension_semantics = [#tpu.dimension_semantics<parallel>, #tpu.dimension_semantics<parallel>, #tpu.dimension_semantics<arbitrary>], iteration_bounds = array<i64: 2, 1, 1>, scalar_prefetch = 0 : i64, scratch_operands = 0 : i64, tpu.core_type = #tpu.core_type<tc>, window_params = [{transform_indices = @transform_0, window_bounds = array<i64: 128, 128>}, {transform_indices = @transform_1, window_bounds = array<i64: 1, 128>}, {transform_indices = @transform_2, window_bounds = array<i64: 1, 128>}, {transform_indices = @transform_3, window_bounds = array<i64: 128, 128>}, {transform_indices = @transform_4, window_bounds = array<i64: 128, 128>}]} {
    %c0 = arith.constant 0 : index
    %c0_0 = arith.constant 0 : index
    %0 = vector.load %arg3[%c0, %c0_0] : memref<128x128xf32, #tpu.memory_space<vmem>>, vector<128x128xf32>
    %c0_1 = arith.constant 0 : index
    %c0_2 = arith.constant 0 : index
    %1 = vector.load %arg4[%c0_1, %c0_2] : memref<1x128xf32, #tpu.memory_space<vmem>>, vector<1x128xf32>
    %2 = vector.broadcast %1 : vector<1x128xf32> to vector<128x128xf32>
    %3 = arith.mulf %0, %2 : vector<128x128xf32>
    %c0_3 = arith.constant 0 : index
    %c0_4 = arith.constant 0 : index
    %4 = vector.load %arg5[%c0_3, %c0_4] : memref<1x128xf32, #tpu.memory_space<vmem>>, vector<1x128xf32>
    %5 = vector.broadcast %4 : vector<1x128xf32> to vector<128x128xf32>
    %6 = arith.addf %3, %5 : vector<128x128xf32>
    %cst = arith.constant 0.000000e+00 : f32
    %7 = vector.broadcast %cst : f32 to vector<128x128xf32>
    %8 = arith.maximumf %6, %7 : vector<128x128xf32>
    %9 = arith.truncf %8 : vector<128x128xf32> to vector<128x128xbf16>
    %c0_5 = arith.constant 0 : index
    %c0_6 = arith.constant 0 : index
    %10 = vector.load %arg6[%c0_5, %c0_6] : memref<128x128xbf16, #tpu.memory_space<vmem>>, vector<128x128xbf16>
    %cst_7 = arith.constant dense<0.000000e+00> : vector<128x128xf32>
    %11 = tpu.matmul %9, %10, %cst_7 {dimension_numbers = #tpu.dot_dimension_numbers<[1], [0], [0], [1], [0, 0, 1, 1], [], []>} : vector<128x128xbf16>, vector<128x128xbf16>, vector<128x128xf32> -> vector<128x128xf32>
    %12 = arith.truncf %11 : vector<128x128xf32> to vector<128x128xbf16>
    %c0_8 = arith.constant 0 : index
    %c0_9 = arith.constant 0 : index
    %13 = vector.load %arg7[%c0_8, %c0_9] : memref<128x128xbf16, #tpu.memory_space<vmem>>, vector<128x128xbf16>
    tpu.vector_store %arg7[%c0_8, %c0_9], %12 {strides = array<i32>} : memref<128x128xbf16, #tpu.memory_space<vmem>>, vector<128x128xbf16>,
    return
  }
  func.func @transform_0(%arg0: i32, %arg1: i32, %arg2: i32) -> (i32, i32) {
    %c0_i32 = arith.constant 0 : i32
    return %arg0, %arg2 : i32, i32
  }
  func.func @transform_1(%arg0: i32, %arg1: i32, %arg2: i32) -> (i32, i32) {
    %c0_i32 = arith.constant 0 : i32
    %c0_i32_0 = arith.constant 0 : i32
    return %c0_i32, %arg2 : i32, i32
  }
  func.func @transform_2(%arg0: i32, %arg1: i32, %arg2: i32) -> (i32, i32) {
    %c0_i32 = arith.constant 0 : i32
    %c0_i32_0 = arith.constant 0 : i32
    return %c0_i32, %arg2 : i32, i32
  }
  func.func @transform_3(%arg0: i32, %arg1: i32, %arg2: i32) -> (i32, i32) {
    %c0_i32 = arith.constant 0 : i32
    return %arg2, %arg1 : i32, i32
  }
  func.func @transform_4(%arg0: i32, %arg1: i32, %arg2: i32) -> (i32, i32) {
    %c0_i32 = arith.constant 0 : i32
    return %arg0, %arg1 : i32, i32
  }
}

module attributes {stable_mosaic.version = 11 : i64} {
  func.func @_agg_res_kernel_single_k(%arg0: i32, %arg1: i32, %arg2: i32, %arg3: memref<128x256xbf16, #tpu.memory_space<vmem>>, %arg4: memref<256x128xbf16, #tpu.memory_space<vmem>>, %arg5: memref<1x128xf32, #tpu.memory_space<vmem>>, %arg6: memref<128x128xf32, #tpu.memory_space<vmem>>, %arg7: memref<128x128xf32, #tpu.memory_space<vmem>>, %arg8: memref<128x128xf32, #tpu.memory_space<vmem>>, %arg9: memref<128x128xf32, #tpu.memory_space<vmem>>) attributes {dimension_semantics = [#tpu.dimension_semantics<parallel>, #tpu.dimension_semantics<parallel>, #tpu.dimension_semantics<arbitrary>], iteration_bounds = array<i64: 2, 1, 1>, scalar_prefetch = 0 : i64, scratch_operands = 0 : i64, tpu.core_type = #tpu.core_type<tc>, window_params = [{transform_indices = @transform_0, window_bounds = array<i64: 128, 256>}, {transform_indices = @transform_1, window_bounds = array<i64: 256, 128>}, {transform_indices = @transform_2, window_bounds = array<i64: 1, 128>}, {transform_indices = @transform_3, window_bounds = array<i64: 128, 128>}, {transform_indices = @transform_4, window_bounds = array<i64: 128, 128>}, {transform_indices = @transform_5, window_bounds = array<i64: 128, 128>}, {transform_indices = @transform_6, window_bounds = array<i64: 128, 128>}]} {
    %c0 = arith.constant 0 : index
    %c0_0 = arith.constant 0 : index
    %0 = vector.load %arg3[%c0, %c0_0] : memref<128x256xbf16, #tpu.memory_space<vmem>>, vector<128x256xbf16>
    %c0_1 = arith.constant 0 : index
    %c0_2 = arith.constant 0 : index
    %1 = vector.load %arg4[%c0_1, %c0_2] : memref<256x128xbf16, #tpu.memory_space<vmem>>, vector<256x128xbf16>
    %cst = arith.constant dense<0.000000e+00> : vector<128x128xf32>
    %2 = tpu.matmul %0, %1, %cst {dimension_numbers = #tpu.dot_dimension_numbers<[1], [0], [0], [1], [0, 0, 1, 1], [], []>} : vector<128x256xbf16>, vector<256x128xbf16>, vector<128x128xf32> -> vector<128x128xf32>
    %c0_3 = arith.constant 0 : index
    %c0_4 = arith.constant 0 : index
    %3 = vector.load %arg5[%c0_3, %c0_4] : memref<1x128xf32, #tpu.memory_space<vmem>>, vector<1x128xf32>
    %4 = vector.broadcast %3 : vector<1x128xf32> to vector<128x128xf32>
    %5 = arith.addf %2, %4 : vector<128x128xf32>
    %c0_5 = arith.constant 0 : index
    %c0_6 = arith.constant 0 : index
    %6 = vector.load %arg6[%c0_5, %c0_6] : memref<128x128xf32, #tpu.memory_space<vmem>>, vector<128x128xf32>
    %7 = arith.addf %5, %6 : vector<128x128xf32>
    %c0_7 = arith.constant 0 : index
    %c0_8 = arith.constant 0 : index
    %8 = vector.load %arg8[%c0_7, %c0_8] : memref<128x128xf32, #tpu.memory_space<vmem>>, vector<128x128xf32>
    tpu.vector_store %arg8[%c0_7, %c0_8], %7 {strides = array<i32>} : memref<128x128xf32, #tpu.memory_space<vmem>>, vector<128x128xf32>,
    %c0_9 = arith.constant 0 : index
    %c0_10 = arith.constant 0 : index
    %9 = vector.load %arg7[%c0_9, %c0_10] : memref<128x128xf32, #tpu.memory_space<vmem>>, vector<128x128xf32>
    %10 = arith.addf %9, %7 : vector<128x128xf32>
    %c0_11 = arith.constant 0 : index
    %c0_12 = arith.constant 0 : index
    %11 = vector.load %arg9[%c0_11, %c0_12] : memref<128x128xf32, #tpu.memory_space<vmem>>, vector<128x128xf32>
    tpu.vector_store %arg9[%c0_11, %c0_12], %10 {strides = array<i32>} : memref<128x128xf32, #tpu.memory_space<vmem>>, vector<128x128xf32>,
    return
  }
  func.func @transform_0(%arg0: i32, %arg1: i32, %arg2: i32) -> (i32, i32) {
    %c0_i32 = arith.constant 0 : i32
    return %arg0, %arg2 : i32, i32
  }
  func.func @transform_1(%arg0: i32, %arg1: i32, %arg2: i32) -> (i32, i32) {
    %c0_i32 = arith.constant 0 : i32
    return %arg2, %arg1 : i32, i32
  }
  func.func @transform_2(%arg0: i32, %arg1: i32, %arg2: i32) -> (i32, i32) {
    %c0_i32 = arith.constant 0 : i32
    %c0_i32_0 = arith.constant 0 : i32
    return %c0_i32, %arg1 : i32, i32
  }
  func.func @transform_3(%arg0: i32, %arg1: i32, %arg2: i32) -> (i32, i32) {
    %c0_i32 = arith.constant 0 : i32
    return %arg0, %arg1 : i32, i32
  }
  func.func @transform_4(%arg0: i32, %arg1: i32, %arg2: i32) -> (i32, i32) {
    %c0_i32 = arith.constant 0 : i32
    return %arg0, %arg1 : i32, i32
  }
  func.func @transform_5(%arg0: i32, %arg1: i32, %arg2: i32) -> (i32, i32) {
    %c0_i32 = arith.constant 0 : i32
    return %arg0, %arg1 : i32, i32
  }
  func.func @transform_6(%arg0: i32, %arg1: i32, %arg2: i32) -> (i32, i32) {
    %c0_i32 = arith.constant 0 : i32
    return %arg0, %arg1 : i32, i32
  }
}

module attributes {stable_mosaic.version = 11 : i64} {
  func.func @_linear_kernel_single_k(%arg0: i32, %arg1: i32, %arg2: i32, %arg3: memref<128x128xf32, #tpu.memory_space<vmem>>, %arg4: memref<128x128xbf16, #tpu.memory_space<vmem>>, %arg5: memref<1x128xf32, #tpu.memory_space<vmem>>, %arg6: memref<128x128xf32, #tpu.memory_space<vmem>>) attributes {dimension_semantics = [#tpu.dimension_semantics<parallel>, #tpu.dimension_semantics<parallel>, #tpu.dimension_semantics<arbitrary>], iteration_bounds = array<i64: 2, 1, 1>, scalar_prefetch = 0 : i64, scratch_operands = 0 : i64, tpu.core_type = #tpu.core_type<tc>, window_params = [{transform_indices = @transform_0, window_bounds = array<i64: 128, 128>}, {transform_indices = @transform_1, window_bounds = array<i64: 128, 128>}, {transform_indices = @transform_2, window_bounds = array<i64: 1, 128>}, {transform_indices = @transform_3, window_bounds = array<i64: 128, 128>}]} {
    %c0 = arith.constant 0 : index
    %c0_0 = arith.constant 0 : index
    %0 = vector.load %arg3[%c0, %c0_0] : memref<128x128xf32, #tpu.memory_space<vmem>>, vector<128x128xf32>
    %1 = arith.truncf %0 : vector<128x128xf32> to vector<128x128xbf16>
    %c0_1 = arith.constant 0 : index
    %c0_2 = arith.constant 0 : index
    %2 = vector.load %arg4[%c0_1, %c0_2] : memref<128x128xbf16, #tpu.memory_space<vmem>>, vector<128x128xbf16>
    %cst = arith.constant dense<0.000000e+00> : vector<128x128xf32>
    %3 = tpu.matmul %1, %2, %cst {dimension_numbers = #tpu.dot_dimension_numbers<[1], [0], [0], [1], [0, 0, 1, 1], [], []>} : vector<128x128xbf16>, vector<128x128xbf16>, vector<128x128xf32> -> vector<128x128xf32>
    %c0_3 = arith.constant 0 : index
    %c0_4 = arith.constant 0 : index
    %4 = vector.load %arg5[%c0_3, %c0_4] : memref<1x128xf32, #tpu.memory_space<vmem>>, vector<1x128xf32>
    %5 = vector.broadcast %4 : vector<1x128xf32> to vector<128x128xf32>
    %6 = arith.addf %3, %5 : vector<128x128xf32>
    %c0_5 = arith.constant 0 : index
    %c0_6 = arith.constant 0 : index
    %7 = vector.load %arg6[%c0_5, %c0_6] : memref<128x128xf32, #tpu.memory_space<vmem>>, vector<128x128xf32>
    tpu.vector_store %arg6[%c0_5, %c0_6], %6 {strides = array<i32>} : memref<128x128xf32, #tpu.memory_space<vmem>>, vector<128x128xf32>,
    return
  }
  func.func @transform_0(%arg0: i32, %arg1: i32, %arg2: i32) -> (i32, i32) {
    %c0_i32 = arith.constant 0 : i32
    return %arg0, %arg2 : i32, i32
  }
  func.func @transform_1(%arg0: i32, %arg1: i32, %arg2: i32) -> (i32, i32) {
    %c0_i32 = arith.constant 0 : i32
    return %arg2, %arg1 : i32, i32
  }
  func.func @transform_2(%arg0: i32, %arg1: i32, %arg2: i32) -> (i32, i32) {
    %c0_i32 = arith.constant 0 : i32
    %c0_i32_0 = arith.constant 0 : i32
    return %c0_i32, %arg1 : i32, i32
  }
  func.func @transform_3(%arg0: i32, %arg1: i32, %arg2: i32) -> (i32, i32) {
    %c0_i32 = arith.constant 0 : i32
    return %arg0, %arg1 : i32, i32
  }
}

</mosaic_0001>

<llo_original>
// kernel: gnn_forward.8
$region0: #{gnn_forward.8}
  #allocation0 [shape = 'u32[]', space=smem, size = 0x4, offset = 0x4, fixed_abs, tag = 'smem constant byte address 0x4 - core index']
  #allocation1 [shape = 'u32[144,128]{1,0:T(1,128)}', space=vmem, size = 0x12000, scoped, tag = 'internal scratch']
  %s0 = inlined_call_operand.vmem [shape: bf16[256,256], index: 0, kind: input, shape index: {}]
  %s1 = inlined_call_operand.vmem [shape: bf16[256,128], index: 1, kind: input, shape index: {}]
  %s2 = inlined_call_operand.vmem [shape: f32[1,128], index: 2, kind: input, shape index: {}]
  %s3 = inlined_call_operand.vmem [shape: f32[256,128], index: 3, kind: input, shape index: {}, may-alias: {3,4}]
  %s4 = inlined_call_operand.vmem [shape: f32[256,128], index: 4, kind: input, shape index: {}, may-alias: {3,4}]
  %s5 = inlined_call_operand.vmem [shape: f32[256,128], index: 5, kind: output, shape index: {0}]
  %s6 = inlined_call_operand.vmem [shape: f32[256,128], index: 6, kind: output, shape index: {1}]
  %7 = xla_tuple %s5, %s6
  %s8 = sld [smem:[#allocation0]]
  $region61: #{gnn_forward.8} parent=0
    _
  %s10 = ssub.s32 1, %s8
  %s11 = scalar_select 0, %s10, %s8
  loop: start=0, step=1, limit=4
  $region2: #{gnn_forward.8} parent=0 // loop_pre_header
    _
  $region3: #{gnn_forward.8} parent=0 // loop_header
    %s13 = sphi 0, %s17
    %p14 = scmp.ge.s32.totalorder %s13, 4
    %s20 = sphi 0, %s39
    %s21 = sphi 0, %s35
    %s22 = sphi 0, %s31
    %s23 = sphi 0, %s20
    %s24 = sphi 0, %s21
    %s25 = sphi 0, %s22
    %s26 = sphi 0, %s23
    %s27 = sphi 0, %s24
    %s28 = sphi 0, %s25
    %s44 = sphi 0, %s46
    %s47 = sphi 0, %s44
    %s48 = sphi 0, %s47
    %s64 = sphi 0, %s48
    %s72 = sphi 0, %s74
    %s75 = sphi 0, %s72
    %s76 = sphi 0, %s75
    %s92 = sphi 0, %s76
    %s98 = sphi 0, %s100
    %s101 = sphi 0, %s98
    %s102 = sphi 0, %s101
    %s118 = sphi 0, %s102
    %s126 = sphi 0, %s128
    %s129 = sphi 0, %s126
    %s130 = sphi 0, %s129
    %s146 = sphi 0, %s130
    %s154 = sphi 0, %s156
    %s157 = sphi 0, %s154
    %s158 = sphi 0, %s157
    %s174 = sphi 0, %s158
    %s182 = sphi 0, %s184
    %s185 = sphi 0, %s182
    %s186 = sphi 0, %s185
    %s202 = sphi 0, %s186
    %s210 = sphi 0, %s212
    %s213 = sphi 0, %s210
    %s214 = sphi 0, %s213
    %s230 = sphi 0, %s214
  $region4: #{gnn_forward.8} parent=0 // loop_header_branch
    %16 = sbr.rel (%p14) target = $region8
  $region5: #{gnn_forward.8} parent=0 // loop_body
    %s18 = ssub.s32 %s13, 1
    %s19 = ssub.s32 %s13, 2
    %s29 = sadd.s32 1, %s22
    %p30 = scmp.ge.s32.totalorder %s29, 1
    %s31 = scalar_select %p30, 0, %s29
    %s32 = sadd.s32 1, %s21
    %s33 = scalar_select %p30, %s32, %s21
    %p34 = scmp.ge.s32.totalorder %s33, 1
    %s35 = scalar_select %p34, 0, %s33
    %s36 = sadd.s32 1, %s20
    %s37 = scalar_select %p34, %s36, %s20
    %p38 = scmp.ge.s32.totalorder %s37, 2
    %s39 = scalar_select %p38, 0, %s37
    %s40 = ssub.s32 %s20, %s39
    %s41 = ssub.s32 %s22, %s31
    %s42 = sor.u32 %s40, %s41
    %p43 = scmp.eq.s32.totalorder %s42, 0
    %s45 = sadd.s32 %s44, 1
    %s46 = scalar_select %p43, %s44, %s45
    %p49 = pneg %p43
    %p50 = scmp.eq.s32.totalorder %s13, 1
    %p51 = por %p49, %p50
    %p52 = scmp.ne.s32.totalorder %s44, %s47
    %p53 = scmp.eq.s32.totalorder %s13, 0
    %p54 = por %p52, %p53
    %p55 = scmp.ne.s32.totalorder %s44, %s47
    %p56 = scmp.eq.s32.totalorder %s18, 1
    %p57 = por %p55, %p56
    %p58 = scmp.ne.s32.totalorder %s47, %s48
    %p59 = scmp.eq.s32.totalorder %s18, 0
    %p60 = por %p58, %p59
    %p61 = scmp.ne.s32.totalorder %s47, %s48
    %p62 = scmp.eq.s32.totalorder %s19, 1
    %p63 = por %p61, %p62
    %p65 = scmp.ne.s32.totalorder %s48, %s64
    %p66 = scmp.eq.s32.totalorder %s19, 0
    %p67 = por %p65, %p66
    %s68 = ssub.s32 %s22, %s31
    %s69 = ssub.s32 %s21, %s35
    %s70 = sor.u32 %s68, %s69
    %p71 = scmp.eq.s32.totalorder %s70, 0
    %s73 = sadd.s32 %s72, 1
    %s74 = scalar_select %p71, %s72, %s73
    %p77 = pneg %p71
    %p78 = scmp.eq.s32.totalorder %s13, 1
    %p79 = por %p77, %p78
    %p80 = scmp.ne.s32.totalorder %s72, %s75
    %p81 = scmp.eq.s32.totalorder %s13, 0
    %p82 = por %p80, %p81
    %p83 = scmp.ne.s32.totalorder %s72, %s75
    %p84 = scmp.eq.s32.totalorder %s18, 1
    %p85 = por %p83, %p84
    %p86 = scmp.ne.s32.totalorder %s75, %s76
    %p87 = scmp.eq.s32.totalorder %s18, 0
    %p88 = por %p86, %p87
    %p89 = scmp.ne.s32.totalorder %s75, %s76
    %p90 = scmp.eq.s32.totalorder %s19, 1
    %p91 = por %p89, %p90
    %p93 = scmp.ne.s32.totalorder %s76, %s92
    %p94 = scmp.eq.s32.totalorder %s19, 0
    %p95 = por %p93, %p94
    %s96 = ssub.s32 %s21, %s35
    %p97 = scmp.eq.s32.totalorder %s96, 0
    %s99 = sadd.s32 %s98, 1
    %s100 = scalar_select %p97, %s98, %s99
    %p103 = pneg %p97
    %p104 = scmp.eq.s32.totalorder %s13, 1
    %p105 = por %p103, %p104
    %p106 = scmp.ne.s32.totalorder %s98, %s101
    %p107 = scmp.eq.s32.totalorder %s13, 0
    %p108 = por %p106, %p107
    %p109 = scmp.ne.s32.totalorder %s98, %s101
    %p110 = scmp.eq.s32.totalorder %s18, 1
    %p111 = por %p109, %p110
    %p112 = scmp.ne.s32.totalorder %s101, %s102
    %p113 = scmp.eq.s32.totalorder %s18, 0
    %p114 = por %p112, %p113
    %p115 = scmp.ne.s32.totalorder %s101, %s102
    %p116 = scmp.eq.s32.totalorder %s19, 1
    %p117 = por %p115, %p116
    %p119 = scmp.ne.s32.totalorder %s102, %s118
    %p120 = scmp.eq.s32.totalorder %s19, 0
    %p121 = por %p119, %p120
    %s122 = ssub.s32 %s20, %s39
    %s123 = ssub.s32 %s21, %s35
    %s124 = sor.u32 %s122, %s123
    %p125 = scmp.eq.s32.totalorder %s124, 0
    %s127 = sadd.s32 %s126, 1
    %s128 = scalar_select %p125, %s126, %s127
    %p131 = pneg %p125
    %p132 = scmp.eq.s32.totalorder %s13, 1
    %p133 = por %p131, %p132
    %p134 = scmp.ne.s32.totalorder %s126, %s129
    %p135 = scmp.eq.s32.totalorder %s13, 0
    %p136 = por %p134, %p135
    %p137 = scmp.ne.s32.totalorder %s126, %s129
    %p138 = scmp.eq.s32.totalorder %s18, 1
    %p139 = por %p137, %p138
    %p140 = scmp.ne.s32.totalorder %s129, %s130
    %p141 = scmp.eq.s32.totalorder %s18, 0
    %p142 = por %p140, %p141
    %p143 = scmp.ne.s32.totalorder %s129, %s130
    %p144 = scmp.eq.s32.totalorder %s19, 1
    %p145 = por %p143, %p144
    %p147 = scmp.ne.s32.totalorder %s130, %s146
    %p148 = scmp.eq.s32.totalorder %s19, 0
    %p149 = por %p147, %p148
    %s150 = ssub.s32 %s20, %s39
    %s151 = ssub.s32 %s21, %s35
    %s152 = sor.u32 %s150, %s151
    %p153 = scmp.eq.s32.totalorder %s152, 0
    %s155 = sadd.s32 %s154, 1
    %s156 = scalar_select %p153, %s154, %s155
    %p159 = pneg %p153
    %p160 = scmp.eq.s32.totalorder %s13, 1
    %p161 = por %p159, %p160
    %p162 = scmp.ne.s32.totalorder %s154, %s157
    %p163 = scmp.eq.s32.totalorder %s13, 0
    %p164 = por %p162, %p163
    %p165 = scmp.ne.s32.totalorder %s154, %s157
    %p166 = scmp.eq.s32.totalorder %s18, 1
    %p167 = por %p165, %p166
    %p168 = scmp.ne.s32.totalorder %s157, %s158
    %p169 = scmp.eq.s32.totalorder %s18, 0
    %p170 = por %p168, %p169
    %p171 = scmp.ne.s32.totalorder %s157, %s158
    %p172 = scmp.eq.s32.totalorder %s19, 1
    %p173 = por %p171, %p172
    %p175 = scmp.ne.s32.totalorder %s158, %s174
    %p176 = scmp.eq.s32.totalorder %s19, 0
    %p177 = por %p175, %p176
    %s178 = ssub.s32 %s20, %s39
    %s179 = ssub.s32 %s21, %s35
    %s180 = sor.u32 %s178, %s179
    %p181 = scmp.eq.s32.totalorder %s180, 0
    %s183 = sadd.s32 %s182, 1
    %s184 = scalar_select %p181, %s182, %s183
    %p187 = pneg %p181
    %p188 = scmp.eq.s32.totalorder %s13, 1
    %p189 = por %p187, %p188
    %p190 = scmp.ne.s32.totalorder %s182, %s185
    %p191 = scmp.eq.s32.totalorder %s13, 0
    %p192 = por %p190, %p191
    %p193 = scmp.ne.s32.totalorder %s182, %s185
    %p194 = scmp.eq.s32.totalorder %s18, 1
    %p195 = por %p193, %p194
    %p196 = scmp.ne.s32.totalorder %s185, %s186
    %p197 = scmp.eq.s32.totalorder %s18, 0
    %p198 = por %p196, %p197
    %p199 = scmp.ne.s32.totalorder %s185, %s186
    %p200 = scmp.eq.s32.totalorder %s19, 1
    %p201 = por %p199, %p200
    %p203 = scmp.ne.s32.totalorder %s186, %s202
    %p204 = scmp.eq.s32.totalorder %s19, 0
    %p205 = por %p203, %p204
    %s206 = ssub.s32 %s20, %s39
    %s207 = ssub.s32 %s21, %s35
    %s208 = sor.u32 %s206, %s207
    %p209 = scmp.eq.s32.totalorder %s208, 0
    %s211 = sadd.s32 %s210, 1
    %s212 = scalar_select %p209, %s210, %s211
    %p215 = pneg %p209
    %p216 = scmp.eq.s32.totalorder %s13, 1
    %p217 = por %p215, %p216
    %p218 = scmp.ne.s32.totalorder %s210, %s213
    %p219 = scmp.eq.s32.totalorder %s13, 0
    %p220 = por %p218, %p219
    %p221 = scmp.ne.s32.totalorder %s210, %s213
    %p222 = scmp.eq.s32.totalorder %s18, 1
    %p223 = por %p221, %p222
    %p224 = scmp.ne.s32.totalorder %s213, %s214
    %p225 = scmp.eq.s32.totalorder %s18, 0
    %p226 = por %p224, %p225
    %p227 = scmp.ne.s32.totalorder %s213, %s214
    %p228 = scmp.eq.s32.totalorder %s19, 1
    %p229 = por %p227, %p228
    %p231 = scmp.ne.s32.totalorder %s214, %s230
    %p232 = scmp.eq.s32.totalorder %s19, 0
    %p233 = por %p231, %p232
    %p234 = scmp.le.s32.totalorder 1, %s13
    %p235 = scmp.lt.s32.totalorder %s13, 3
    %p236 = pnand %p234, %p235
    %p237 = pneg %p236
    // Predicated region
    $region9: #{gnn_forward.8} parent=5 // pred_check
      _
    $region10: #{gnn_forward.8} parent=5 // pred_check_branch
      %239 = sbr.rel (%p236) target = $region12
    $region11: #{gnn_forward.8} parent=5 // pred_region
      %s240 = ssub.s32 %s13, 1
      // Predicated region
      $region13: #{gnn_forward.8} parent=11 // pred_check
        %p241 = pneg %p88
      $region14: #{gnn_forward.8} parent=11 // pred_check_branch
        %243 = sbr.rel (%p241) target = $region16
      $region15: #{gnn_forward.8} parent=11 // pred_region
        %s244 = smul.u32 32, %s25
        %p245 = scmp.lt.s32.totalorder %s244, 31
        %s246 = scalar_select %p245, %s244, 31
        %p247 = scmp.lt.s32.totalorder %s24, 0
        %s248 = scalar_select %p247, %s24, 0
        %s249 = sadd.s32 %s248, %s246
        %s250 = smul.addr %s249, 4
        %s251 = scalar_lea.vmem %s1, %s250
        %s252 = smul.u32 32, %s25
      $region16: #{gnn_forward.8} parent=11 // pred_fallthru
        _
      // Predicated region
      $region17: #{gnn_forward.8} parent=11 // pred_check
        %p253 = pneg %p114
      $region18: #{gnn_forward.8} parent=11 // pred_check_branch
        %255 = sbr.rel (%p253) target = $region20
      $region19: #{gnn_forward.8} parent=11 // pred_region
        %p256 = scmp.lt.s32.totalorder %s24, 0
        %s257 = scalar_select %p256, %s24, 0
        %s258 = scalar_lea.vmem %s2, %s257
      $region20: #{gnn_forward.8} parent=11 // pred_fallthru
        _
    $region12: #{gnn_forward.8} parent=5 // pred_fallthru
      _
    %p259 = scmp.lt.s32.totalorder %s13, 2
    // Predicated region
    $region21: #{gnn_forward.8} parent=5 // pred_check
      %p260 = pneg %p259
    $region22: #{gnn_forward.8} parent=5 // pred_check_branch
      %262 = sbr.rel (%p260) target = $region24
    $region23: #{gnn_forward.8} parent=5 // pred_region
      // Predicated region
      $region25: #{gnn_forward.8} parent=23 // pred_check
        %p263 = pneg %p54
      $region26: #{gnn_forward.8} parent=23 // pred_check_branch
        %265 = sbr.rel (%p263) target = $region28
      $region27: #{gnn_forward.8} parent=23 // pred_region
        %s266 = smul.u32 16, %s20
        %s267 = smul.u32 2, %s22
        %p268 = scmp.lt.s32.totalorder %s266, 31
        %s269 = scalar_select %p268, %s266, 31
        %p270 = scmp.lt.s32.totalorder %s267, 1
        %s271 = scalar_select %p270, %s267, 1
        %s272 = smul.addr %s269, 2
        %s273 = sadd.s32 %s271, %s272
        %s274 = smul.addr %s273, 4
        %s275 = scalar_lea.vmem %s0, %s274
        %s276 = smul.u32 16, %s20
        %s277 = smul.u32 2, %s22
      $region28: #{gnn_forward.8} parent=23 // pred_fallthru
        _
      // Predicated region
      $region29: #{gnn_forward.8} parent=23 // pred_check
        %p278 = pneg %p136
      $region30: #{gnn_forward.8} parent=23 // pred_check_branch
        %280 = sbr.rel (%p278) target = $region32
      $region31: #{gnn_forward.8} parent=23 // pred_region
        %s281 = smul.u32 16, %s20
        %p282 = scmp.lt.s32.totalorder %s281, 31
        %s283 = scalar_select %p282, %s281, 31
        %p284 = scmp.lt.s32.totalorder %s21, 0
        %s285 = scalar_select %p284, %s21, 0
        %s286 = sadd.s32 %s285, %s283
        %s287 = smul.addr %s286, 8
        %s288 = scalar_lea.vmem %s3, %s287
        %s289 = smul.u32 16, %s20
      $region32: #{gnn_forward.8} parent=23 // pred_fallthru
        _
      // Predicated region
      $region33: #{gnn_forward.8} parent=23 // pred_check
        %p290 = pneg %p164
      $region34: #{gnn_forward.8} parent=23 // pred_check_branch
        %292 = sbr.rel (%p290) target = $region36
      $region35: #{gnn_forward.8} parent=23 // pred_region
        %s293 = smul.u32 16, %s20
        %p294 = scmp.lt.s32.totalorder %s293, 31
        %s295 = scalar_select %p294, %s293, 31
        %p296 = scmp.lt.s32.totalorder %s21, 0
        %s297 = scalar_select %p296, %s21, 0
        %s298 = sadd.s32 %s297, %s295
        %s299 = smul.addr %s298, 8
        %s300 = scalar_lea.vmem %s4, %s299
        %s301 = smul.u32 16, %s20
      $region36: #{gnn_forward.8} parent=23 // pred_fallthru
        _
    $region24: #{gnn_forward.8} parent=5 // pred_fallthru
      _
    %p302 = scmp.le.s32.totalorder 1, %s13
    %p303 = scmp.lt.s32.totalorder %s13, 3
    %p304 = pnand %p302, %p303
    %p305 = pneg %p304
    // Predicated region
    $region37: #{gnn_forward.8} parent=5 // pred_check
      _
    $region38: #{gnn_forward.8} parent=5 // pred_check_branch
      %307 = sbr.rel (%p304) target = $region40
    $region39: #{gnn_forward.8} parent=5 // pred_region
      %s308 = ssub.s32 %s13, 1
      %s309 = smul.u32 16, %s23
      %s310 = smul.u32 2, %s25
      %p311 = scmp.lt.s32.totalorder %s309, 31
      %s312 = scalar_select %p311, %s309, 31
      %p313 = scmp.lt.s32.totalorder %s310, 1
      %s314 = scalar_select %p313, %s310, 1
      %s315 = smul.addr %s312, 2
      %s316 = sadd.s32 %s314, %s315
      %s317 = smul.addr %s316, 4
      %s318 = scalar_lea.vmem %s0, %s317
      %p319 = pneg %p60
      %p320 = pneg %p57
      %s321 = smul.u32 32, %s25
      %p322 = scmp.lt.s32.totalorder %s321, 31
      %s323 = scalar_select %p322, %s321, 31
      %p324 = scmp.lt.s32.totalorder %s24, 0
      %s325 = scalar_select %p324, %s24, 0
      %s326 = sadd.s32 %s325, %s323
      %s327 = smul.addr %s326, 4
      %s328 = scalar_lea.vmem %s1, %s327
      %p329 = pneg %p88
      %p330 = pneg %p85
      %p331 = scmp.lt.s32.totalorder %s24, 0
      %s332 = scalar_select %p331, %s24, 0
      %s333 = scalar_lea.vmem %s2, %s332
      %p334 = pneg %p114
      %p335 = pneg %p111
      %s336 = smul.u32 16, %s23
      %p337 = scmp.lt.s32.totalorder %s336, 31
      %s338 = scalar_select %p337, %s336, 31
      %p339 = scmp.lt.s32.totalorder %s24, 0
      %s340 = scalar_select %p339, %s24, 0
      %s341 = sadd.s32 %s340, %s338
      %s342 = smul.addr %s341, 8
      %s343 = scalar_lea.vmem %s3, %s342
      %p344 = pneg %p142
      %p345 = pneg %p139
      %s346 = smul.u32 16, %s23
      %p347 = scmp.lt.s32.totalorder %s346, 31
      %s348 = scalar_select %p347, %s346, 31
      %p349 = scmp.lt.s32.totalorder %s24, 0
      %s350 = scalar_select %p349, %s24, 0
      %s351 = sadd.s32 %s350, %s348
      %s352 = smul.addr %s351, 8
      %s353 = scalar_lea.vmem %s4, %s352
      %p354 = pneg %p170
      %p355 = pneg %p167
      %p356 = pneg %p198
      %p357 = pneg %p195
      %s358 = smul.u32 16, %s23
      %p359 = scmp.lt.s32.totalorder %s358, 31
      %s360 = scalar_select %p359, %s358, 31
      %p361 = scmp.lt.s32.totalorder %s24, 0
      %s362 = scalar_select %p361, %s24, 0
      %s363 = sadd.s32 %s362, %s360
      %s364 = smul.addr %s363, 8
      %s365 = scalar_lea.vmem %s5, %s364
      %p366 = pneg %p226
      %p367 = pneg %p223
      %s368 = smul.u32 16, %s23
      %p369 = scmp.lt.s32.totalorder %s368, 31
      %s370 = scalar_select %p369, %s368, 31
      %p371 = scmp.lt.s32.totalorder %s24, 0
      %s372 = scalar_select %p371, %s24, 0
      %s373 = sadd.s32 %s372, %s370
      %s374 = smul.addr %s373, 8
      %s375 = scalar_lea.vmem %s6, %s374
      %s376 = smul.u32 16, %s23
      %s377 = smul.u32 2, %s25
      %p378 = scmp.lt.s32.totalorder %s376, 31
      %s379 = scalar_select %p378, %s376, 31
      %p380 = scmp.lt.s32.totalorder %s377, 1
      %s381 = scalar_select %p380, %s377, 1
      %s382 = smul.addr %s379, 2
      %s383 = sadd.s32 %s381, %s382
      %s384 = smul.addr %s383, 4
      %s385 = scalar_lea.vmem %s0, %s384
      %s386 = smul.u32 16, %s23
      %s387 = smul.u32 2, %s25
      %s388 = smul.u32 32, %s25
      %p389 = scmp.lt.s32.totalorder %s388, 31
      %s390 = scalar_select %p389, %s388, 31
      %p391 = scmp.lt.s32.totalorder %s24, 0
      %s392 = scalar_select %p391, %s24, 0
      %s393 = sadd.s32 %s392, %s390
      %s394 = smul.addr %s393, 4
      %s395 = scalar_lea.vmem %s1, %s394
      %s396 = smul.u32 32, %s25
      %p397 = scmp.lt.s32.totalorder %s24, 0
      %s398 = scalar_select %p397, %s24, 0
      %s399 = scalar_lea.vmem %s2, %s398
      %s400 = smul.u32 16, %s23
      %p401 = scmp.lt.s32.totalorder %s400, 31
      %s402 = scalar_select %p401, %s400, 31
      %p403 = scmp.lt.s32.totalorder %s24, 0
      %s404 = scalar_select %p403, %s24, 0
      %s405 = sadd.s32 %s404, %s402
      %s406 = smul.addr %s405, 8
      %s407 = scalar_lea.vmem %s3, %s406
      %s408 = smul.u32 16, %s23
      %s409 = smul.u32 16, %s23
      %p410 = scmp.lt.s32.totalorder %s409, 31
      %s411 = scalar_select %p410, %s409, 31
      %p412 = scmp.lt.s32.totalorder %s24, 0
      %s413 = scalar_select %p412, %s24, 0
      %s414 = sadd.s32 %s413, %s411
      %s415 = smul.addr %s414, 8
      %s416 = scalar_lea.vmem %s4, %s415
      %s417 = smul.u32 16, %s23
      %s418 = smul.u32 16, %s23
      %p419 = scmp.lt.s32.totalorder %s418, 31
      %s420 = scalar_select %p419, %s418, 31
      %p421 = scmp.lt.s32.totalorder %s24, 0
      %s422 = scalar_select %p421, %s24, 0
      %s423 = sadd.s32 %s422, %s420
      %s424 = smul.addr %s423, 8
      %s425 = scalar_lea.vmem %s5, %s424
      %s426 = smul.u32 16, %s23
      %s427 = smul.u32 16, %s23
      %p428 = scmp.lt.s32.totalorder %s427, 31
      %s429 = scalar_select %p428, %s427, 31
      %p430 = scmp.lt.s32.totalorder %s24, 0
      %s431 = scalar_select %p430, %s24, 0
      %s432 = sadd.s32 %s431, %s429
      %s433 = smul.addr %s432, 8
      %s434 = scalar_lea.vmem %s6, %s433
      %s435 = smul.u32 16, %s23
      %v437 = vld [vmem:[%s385] sm:$0xff]
      %v438 = vld [vmem:[%s385 + $0x8] sm:$0xff]
      %v439 = vld [vmem:[%s385 + $0x10] sm:$0xff]
      %v440 = vld [vmem:[%s385 + $0x18] sm:$0xff]
      %v441 = vld [vmem:[%s385 + $0x20] sm:$0xff]
      %v442 = vld [vmem:[%s385 + $0x28] sm:$0xff]
      %v443 = vld [vmem:[%s385 + $0x30] sm:$0xff]
      %v444 = vld [vmem:[%s385 + $0x38] sm:$0xff]
      %v445 = vld [vmem:[%s385 + $0x40] sm:$0xff]
      %v446 = vld [vmem:[%s385 + $0x48] sm:$0xff]
      %v447 = vld [vmem:[%s385 + $0x50] sm:$0xff]
      %v448 = vld [vmem:[%s385 + $0x58] sm:$0xff]
      %v449 = vld [vmem:[%s385 + $0x60] sm:$0xff]
      %v450 = vld [vmem:[%s385 + $0x68] sm:$0xff]
      %v451 = vld [vmem:[%s385 + $0x70] sm:$0xff]
      %v452 = vld [vmem:[%s385 + $0x78] sm:$0xff]
      %v453 = vld [vmem:[%s395] sm:$0xf]
      %v454 = vld [vmem:[%s395 + $0x4] sm:$0xf]
      %v455 = vld [vmem:[%s395 + $0x8] sm:$0xf]
      %v456 = vld [vmem:[%s395 + $0xc] sm:$0xf]
      %v457 = vld [vmem:[%s395 + $0x10] sm:$0xf]
      %v458 = vld [vmem:[%s395 + $0x14] sm:$0xf]
      %v459 = vld [vmem:[%s395 + $0x18] sm:$0xf]
      %v460 = vld [vmem:[%s395 + $0x1c] sm:$0xf]
      %v461 = vld [vmem:[%s395 + $0x20] sm:$0xf]
      %v462 = vld [vmem:[%s395 + $0x24] sm:$0xf]
      %v463 = vld [vmem:[%s395 + $0x28] sm:$0xf]
      %v464 = vld [vmem:[%s395 + $0x2c] sm:$0xf]
      %v465 = vld [vmem:[%s395 + $0x30] sm:$0xf]
      %v466 = vld [vmem:[%s395 + $0x34] sm:$0xf]
      %v467 = vld [vmem:[%s395 + $0x38] sm:$0xf]
      %v468 = vld [vmem:[%s395 + $0x3c] sm:$0xf]
      %v469 = vld [vmem:[%s395 + $0x40] sm:$0xf]
      %v470 = vld [vmem:[%s395 + $0x44] sm:$0xf]
      %v471 = vld [vmem:[%s395 + $0x48] sm:$0xf]
      %v472 = vld [vmem:[%s395 + $0x4c] sm:$0xf]
      %v473 = vld [vmem:[%s395 + $0x50] sm:$0xf]
      %v474 = vld [vmem:[%s395 + $0x54] sm:$0xf]
      %v475 = vld [vmem:[%s395 + $0x58] sm:$0xf]
      %v476 = vld [vmem:[%s395 + $0x5c] sm:$0xf]
      %v477 = vld [vmem:[%s395 + $0x60] sm:$0xf]
      %v478 = vld [vmem:[%s395 + $0x64] sm:$0xf]
      %v479 = vld [vmem:[%s395 + $0x68] sm:$0xf]
      %v480 = vld [vmem:[%s395 + $0x6c] sm:$0xf]
      %v481 = vld [vmem:[%s395 + $0x70] sm:$0xf]
      %v482 = vld [vmem:[%s395 + $0x74] sm:$0xf]
      %v483 = vld [vmem:[%s395 + $0x78] sm:$0xf]
      %v484 = vld [vmem:[%s395 + $0x7c] sm:$0xf]
      %v485 = vld [vmem:[%s399] sm:$0x1]
      %v487 = vlaneseq
      %v488 = vshrl.u32 %v487, 7
      %v489 = vsub.s32 0, %v488
      %v490 = vrot.slane %v485, %v489
      %v508 = vunpack.c.l.b16 %v437
      %v509 = vunpack.c.h.b16 %v437
      %v510 = vunpack.c.l.b16 %v438
      %v511 = vunpack.c.h.b16 %v438
      %v512 = vunpack.c.l.b16 %v439
      %v513 = vunpack.c.h.b16 %v439
      %v514 = vunpack.c.l.b16 %v440
      %v515 = vunpack.c.h.b16 %v440
      %v516 = vunpack.c.l.b16 %v441
      %v517 = vunpack.c.h.b16 %v441
      %v518 = vunpack.c.l.b16 %v442
      %v519 = vunpack.c.h.b16 %v442
      %v520 = vunpack.c.l.b16 %v443
      %v521 = vunpack.c.h.b16 %v443
      %v522 = vunpack.c.l.b16 %v444
      %v523 = vunpack.c.h.b16 %v444
      %v524 = vunpack.c.l.b16 %v445
      %v525 = vunpack.c.h.b16 %v445
      %v526 = vunpack.c.l.b16 %v446
      %v527 = vunpack.c.h.b16 %v446
      %v528 = vunpack.c.l.b16 %v447
      %v529 = vunpack.c.h.b16 %v447
      %v530 = vunpack.c.l.b16 %v448
      %v531 = vunpack.c.h.b16 %v448
      %v532 = vunpack.c.l.b16 %v449
      %v533 = vunpack.c.h.b16 %v449
      %v534 = vunpack.c.l.b16 %v450
      %v535 = vunpack.c.h.b16 %v450
      %v536 = vunpack.c.l.b16 %v451
      %v537 = vunpack.c.h.b16 %v451
      %v538 = vunpack.c.l.b16 %v452
      %v539 = vunpack.c.h.b16 %v452
      %v540 = vpack.c.b16 %v510, %v508
      %v541 = vpack.c.b16 %v511, %v509
      %v542 = vpack.c.b16 %v514, %v512
      %v543 = vpack.c.b16 %v515, %v513
      %v544 = vpack.c.b16 %v518, %v516
      %v545 = vpack.c.b16 %v519, %v517
      %v546 = vpack.c.b16 %v522, %v520
      %v547 = vpack.c.b16 %v523, %v521
      %v548 = vpack.c.b16 %v526, %v524
      %v549 = vpack.c.b16 %v527, %v525
      %v550 = vpack.c.b16 %v530, %v528
      %v551 = vpack.c.b16 %v531, %v529
      %v552 = vpack.c.b16 %v534, %v532
      %v553 = vpack.c.b16 %v535, %v533
      %v554 = vpack.c.b16 %v538, %v536
      %v555 = vpack.c.b16 %v539, %v537
      %v604 = vunpack.c.l.b16 %v453
      %v605 = vunpack.c.l.b16 %v454
      %v606 = vunpack.c.l.b16 %v455
      %v607 = vunpack.c.l.b16 %v456
      %v608 = vunpack.c.l.b16 %v457
      %v609 = vunpack.c.l.b16 %v458
      %v610 = vunpack.c.l.b16 %v459
      %v611 = vunpack.c.l.b16 %v460
      %v612 = vunpack.c.l.b16 %v461
      %v613 = vunpack.c.l.b16 %v462
      %v614 = vunpack.c.l.b16 %v463
      %v615 = vunpack.c.l.b16 %v464
      %v616 = vunpack.c.l.b16 %v465
      %v617 = vunpack.c.l.b16 %v466
      %v618 = vunpack.c.l.b16 %v467
      %v619 = vunpack.c.l.b16 %v468
      %v620 = vunpack.c.l.b16 %v469
      %v621 = vunpack.c.l.b16 %v470
      %v622 = vunpack.c.l.b16 %v471
      %v623 = vunpack.c.l.b16 %v472
      %v624 = vunpack.c.l.b16 %v473
      %v625 = vunpack.c.l.b16 %v474
      %v626 = vunpack.c.l.b16 %v475
      %v627 = vunpack.c.l.b16 %v476
      %v628 = vunpack.c.l.b16 %v477
      %v629 = vunpack.c.l.b16 %v478
      %v630 = vunpack.c.l.b16 %v479
      %v631 = vunpack.c.l.b16 %v480
      %v632 = vunpack.c.l.b16 %v481
      %v633 = vunpack.c.l.b16 %v482
      %v634 = vunpack.c.l.b16 %v483
      %v635 = vunpack.c.l.b16 %v484
      %v636 = vpack.c.b16 %v605, %v604
      %v637 = vpack.c.b16 %v607, %v606
      %v638 = vpack.c.b16 %v609, %v608
      %v639 = vpack.c.b16 %v611, %v610
      %v640 = vpack.c.b16 %v613, %v612
      %v641 = vpack.c.b16 %v615, %v614
      %v642 = vpack.c.b16 %v617, %v616
      %v643 = vpack.c.b16 %v619, %v618
      %v644 = vpack.c.b16 %v621, %v620
      %v645 = vpack.c.b16 %v623, %v622
      %v646 = vpack.c.b16 %v625, %v624
      %v647 = vpack.c.b16 %v627, %v626
      %v648 = vpack.c.b16 %v629, %v628
      %v649 = vpack.c.b16 %v631, %v630
      %v650 = vpack.c.b16 %v633, %v632
      %v651 = vpack.c.b16 %v635, %v634
      %668 = vmatprep.subr.bf16.mxu0 0
      %669 = vmatpush1.bf16.msra.mxu0 %v643
      %670 = vmatprep.subr.bf16.mxu0 0
      %671 = vmatpush1.bf16.msra.mxu0 %v642
      %672 = vmatprep.subr.bf16.mxu0 0
      %673 = vmatpush1.bf16.msra.mxu0 %v641
      %674 = vmatprep.subr.bf16.mxu0 0
      %675 = vmatpush1.bf16.msra.mxu0 %v640
      %676 = vmatprep.subr.bf16.mxu0 0
      %677 = vmatpush1.bf16.msra.mxu0 %v639
      %678 = vmatprep.subr.bf16.mxu0 0
      %679 = vmatpush1.bf16.msra.mxu0 %v638
      %680 = vmatprep.subr.bf16.mxu0 0
      %681 = vmatpush1.bf16.msra.mxu0 %v637
      %682 = vmatprep.subr.bf16.mxu0 0
      %683 = vmatpush1.bf16.msra.mxu0 %v636
      %684 = vmatprep.subr.bf16.mxu0 0
      %685 = vmatpush2.bf16.msra.mxu0 %v651
      %686 = vmatprep.subr.bf16.mxu0 0
      %687 = vmatpush2.bf16.msra.mxu0 %v650
      %688 = vmatprep.subr.bf16.mxu0 0
      %689 = vmatpush2.bf16.msra.mxu0 %v649
      %690 = vmatprep.subr.bf16.mxu0 0
      %691 = vmatpush2.bf16.msra.mxu0 %v648
      %692 = vmatprep.subr.bf16.mxu0 0
      %693 = vmatpush2.bf16.msra.mxu0 %v647
      %694 = vmatprep.subr.bf16.mxu0 0
      %695 = vmatpush2.bf16.msra.mxu0 %v646
      %696 = vmatprep.subr.bf16.mxu0 0
      %697 = vmatpush2.bf16.msra.mxu0 %v645
      %698 = vmatprep.subr.bf16.mxu0 0
      %699 = vmatpush2.bf16.msra.mxu0 %v644
      %700 = vmatprep.mubr.bf16.mxu0 %v541
      %701 = vmatmul.mubr.bf16.gmra.mxu0 %v540
      %v702 = vpop.f32.mrf.mxu0
      %v703 = vadd.f32 %v490, %v702
      %v704 = vpop.f32.mrf.mxu0
      %v705 = vpop.f32.mrf.mxu0
      %v706 = vadd.f32 %v490, %v705
      %v707 = vpop.f32.mrf.mxu0
      %708 = vmatprep.mubr.bf16.mxu0 %v543
      %709 = vmatmul.mubr.bf16.gmra.mxu0 %v542
      %v710 = vpop.f32.mrf.mxu0
      %v711 = vadd.f32 %v490, %v710
      %v712 = vpop.f32.mrf.mxu0
      %v713 = vpop.f32.mrf.mxu0
      %v714 = vadd.f32 %v490, %v713
      %v715 = vpop.f32.mrf.mxu0
      %716 = vmatprep.mubr.bf16.mxu0 %v545
      %717 = vmatmul.mubr.bf16.gmra.mxu0 %v544
      %v718 = vpop.f32.mrf.mxu0
      %v719 = vadd.f32 %v490, %v718
      %v720 = vpop.f32.mrf.mxu0
      %v721 = vpop.f32.mrf.mxu0
      %v722 = vadd.f32 %v490, %v721
      %v723 = vpop.f32.mrf.mxu0
      %724 = vmatprep.mubr.bf16.mxu0 %v547
      %725 = vmatmul.mubr.bf16.gmra.mxu0 %v546
      %v726 = vpop.f32.mrf.mxu0
      %v727 = vadd.f32 %v490, %v726
      %v728 = vpop.f32.mrf.mxu0
      %v729 = vpop.f32.mrf.mxu0
      %v730 = vadd.f32 %v490, %v729
      %v731 = vpop.f32.mrf.mxu0
      %732 = vmatprep.mubr.bf16.mxu0 %v549
      %733 = vmatmul.mubr.bf16.gmra.mxu0 %v548
      %v734 = vpop.f32.mrf.mxu0
      %v735 = vadd.f32 %v490, %v734
      %v736 = vpop.f32.mrf.mxu0
      %v737 = vpop.f32.mrf.mxu0
      %v738 = vadd.f32 %v490, %v737
      %v739 = vpop.f32.mrf.mxu0
      %740 = vmatprep.mubr.bf16.mxu0 %v551
      %741 = vmatmul.mubr.bf16.gmra.mxu0 %v550
      %v742 = vpop.f32.mrf.mxu0
      %v743 = vadd.f32 %v490, %v742
      %v744 = vpop.f32.mrf.mxu0
      %v745 = vpop.f32.mrf.mxu0
      %v746 = vadd.f32 %v490, %v745
      %v747 = vpop.f32.mrf.mxu0
      %748 = vmatprep.mubr.bf16.mxu0 %v553
      %749 = vmatmul.mubr.bf16.gmra.mxu0 %v552
      %v750 = vpop.f32.mrf.mxu0
      %v751 = vadd.f32 %v490, %v750
      %v752 = vpop.f32.mrf.mxu0
      %v753 = vpop.f32.mrf.mxu0
      %v754 = vadd.f32 %v490, %v753
      %v755 = vpop.f32.mrf.mxu0
      %756 = vmatprep.mubr.bf16.mxu0 %v555
      %757 = vmatmul.mubr.bf16.gmra.mxu0 %v554
      %v758 = vpop.f32.mrf.mxu0
      %v759 = vadd.f32 %v490, %v758
      %v760 = vpop.f32.mrf.mxu0
      %v761 = vpop.f32.mrf.mxu0
      %v762 = vadd.f32 %v490, %v761
      %v763 = vpop.f32.mrf.mxu0
      %764 = vdwg.mxu0
      %v765 = vld [vmem:[%s407] sm:$0xff]
      %v766 = vld [vmem:[%s407 + $0x8] sm:$0xff]
      %v767 = vld [vmem:[%s407 + $0x10] sm:$0xff]
      %v768 = vld [vmem:[%s407 + $0x18] sm:$0xff]
      %v769 = vld [vmem:[%s407 + $0x20] sm:$0xff]
      %v770 = vld [vmem:[%s407 + $0x28] sm:$0xff]
      %v771 = vld [vmem:[%s407 + $0x30] sm:$0xff]
      %v772 = vld [vmem:[%s407 + $0x38] sm:$0xff]
      %v773 = vld [vmem:[%s407 + $0x40] sm:$0xff]
      %v774 = vld [vmem:[%s407 + $0x48] sm:$0xff]
      %v775 = vld [vmem:[%s407 + $0x50] sm:$0xff]
      %v776 = vld [vmem:[%s407 + $0x58] sm:$0xff]
      %v777 = vld [vmem:[%s407 + $0x60] sm:$0xff]
      %v778 = vld [vmem:[%s407 + $0x68] sm:$0xff]
      %v779 = vld [vmem:[%s407 + $0x70] sm:$0xff]
      %v780 = vld [vmem:[%s407 + $0x78] sm:$0xff]
      %v781 = vadd.f32 %v703, %v765
      %v782 = vadd.f32 %v706, %v766
      %v783 = vadd.f32 %v711, %v767
      %v784 = vadd.f32 %v714, %v768
      %v785 = vadd.f32 %v719, %v769
      %v786 = vadd.f32 %v722, %v770
      %v787 = vadd.f32 %v727, %v771
      %v788 = vadd.f32 %v730, %v772
      %v789 = vadd.f32 %v735, %v773
      %v790 = vadd.f32 %v738, %v774
      %v791 = vadd.f32 %v743, %v775
      %v792 = vadd.f32 %v746, %v776
      %v793 = vadd.f32 %v751, %v777
      %v794 = vadd.f32 %v754, %v778
      %v795 = vadd.f32 %v759, %v779
      %v796 = vadd.f32 %v762, %v780
      %797 = vst [vmem:[%s425] sm:$0xff] %v781
      %798 = vst [vmem:[%s425 + $0x8] sm:$0xff] %v782
      %799 = vst [vmem:[%s425 + $0x10] sm:$0xff] %v783
      %800 = vst [vmem:[%s425 + $0x18] sm:$0xff] %v784
      %801 = vst [vmem:[%s425 + $0x20] sm:$0xff] %v785
      %802 = vst [vmem:[%s425 + $0x28] sm:$0xff] %v786
      %803 = vst [vmem:[%s425 + $0x30] sm:$0xff] %v787
      %804 = vst [vmem:[%s425 + $0x38] sm:$0xff] %v788
      %805 = vst [vmem:[%s425 + $0x40] sm:$0xff] %v789
      %806 = vst [vmem:[%s425 + $0x48] sm:$0xff] %v790
      %807 = vst [vmem:[%s425 + $0x50] sm:$0xff] %v791
      %808 = vst [vmem:[%s425 + $0x58] sm:$0xff] %v792
      %809 = vst [vmem:[%s425 + $0x60] sm:$0xff] %v793
      %810 = vst [vmem:[%s425 + $0x68] sm:$0xff] %v794
      %811 = vst [vmem:[%s425 + $0x70] sm:$0xff] %v795
      %812 = vst [vmem:[%s425 + $0x78] sm:$0xff] %v796
      %v813 = vld [vmem:[%s416] sm:$0xff]
      %v814 = vld [vmem:[%s416 + $0x8] sm:$0xff]
      %v815 = vld [vmem:[%s416 + $0x10] sm:$0xff]
      %v816 = vld [vmem:[%s416 + $0x18] sm:$0xff]
      %v817 = vld [vmem:[%s416 + $0x20] sm:$0xff]
      %v818 = vld [vmem:[%s416 + $0x28] sm:$0xff]
      %v819 = vld [vmem:[%s416 + $0x30] sm:$0xff]
      %v820 = vld [vmem:[%s416 + $0x38] sm:$0xff]
      %v821 = vld [vmem:[%s416 + $0x40] sm:$0xff]
      %v822 = vld [vmem:[%s416 + $0x48] sm:$0xff]
      %v823 = vld [vmem:[%s416 + $0x50] sm:$0xff]
      %v824 = vld [vmem:[%s416 + $0x58] sm:$0xff]
      %v825 = vld [vmem:[%s416 + $0x60] sm:$0xff]
      %v826 = vld [vmem:[%s416 + $0x68] sm:$0xff]
      %v827 = vld [vmem:[%s416 + $0x70] sm:$0xff]
      %v828 = vld [vmem:[%s416 + $0x78] sm:$0xff]
      %v829 = vadd.f32 %v813, %v781
      %v830 = vadd.f32 %v814, %v782
      %v831 = vadd.f32 %v815, %v783
      %v832 = vadd.f32 %v816, %v784
      %v833 = vadd.f32 %v817, %v785
      %v834 = vadd.f32 %v818, %v786
      %v835 = vadd.f32 %v819, %v787
      %v836 = vadd.f32 %v820, %v788
      %v837 = vadd.f32 %v821, %v789
      %v838 = vadd.f32 %v822, %v790
      %v839 = vadd.f32 %v823, %v791
      %v840 = vadd.f32 %v824, %v792
      %v841 = vadd.f32 %v825, %v793
      %v842 = vadd.f32 %v826, %v794
      %v843 = vadd.f32 %v827, %v795
      %v844 = vadd.f32 %v828, %v796
      %845 = vst [vmem:[%s434] sm:$0xff] %v829
      %846 = vst [vmem:[%s434 + $0x8] sm:$0xff] %v830
      %847 = vst [vmem:[%s434 + $0x10] sm:$0xff] %v831
      %848 = vst [vmem:[%s434 + $0x18] sm:$0xff] %v832
      %849 = vst [vmem:[%s434 + $0x20] sm:$0xff] %v833
      %850 = vst [vmem:[%s434 + $0x28] sm:$0xff] %v834
      %851 = vst [vmem:[%s434 + $0x30] sm:$0xff] %v835
      %852 = vst [vmem:[%s434 + $0x38] sm:$0xff] %v836
      %853 = vst [vmem:[%s434 + $0x40] sm:$0xff] %v837
      %854 = vst [vmem:[%s434 + $0x48] sm:$0xff] %v838
      %855 = vst [vmem:[%s434 + $0x50] sm:$0xff] %v839
      %856 = vst [vmem:[%s434 + $0x58] sm:$0xff] %v840
      %857 = vst [vmem:[%s434 + $0x60] sm:$0xff] %v841
      %858 = vst [vmem:[%s434 + $0x68] sm:$0xff] %v842
      %859 = vst [vmem:[%s434 + $0x70] sm:$0xff] %v843
      %860 = vst [vmem:[%s434 + $0x78] sm:$0xff] %v844
      %s861 = smul.u32 16, %s23
      %p862 = scmp.lt.s32.totalorder %s861, 31
      %s863 = scalar_select %p862, %s861, 31
      %p864 = scmp.lt.s32.totalorder %s24, 0
      %s865 = scalar_select %p864, %s24, 0
      %s866 = sadd.s32 %s865, %s863
      %s867 = smul.addr %s866, 8
      %s868 = scalar_lea.vmem %s5, %s867
      %s869 = smul.u32 16, %s23
      %p870 = scmp.lt.s32.totalorder %s869, 31
      %s871 = scalar_select %p870, %s869, 31
      %p872 = scmp.lt.s32.totalorder %s24, 0
      %s873 = scalar_select %p872, %s24, 0
      %s874 = sadd.s32 %s873, %s871
      %s875 = smul.addr %s874, 8
      %s876 = scalar_lea.vmem %s6, %s875
      // Predicated region
      $region41: #{gnn_forward.8} parent=39 // pred_check
        %p877 = pneg %p195
      $region42: #{gnn_forward.8} parent=39 // pred_check_branch
        %879 = sbr.rel (%p877) target = $region44
      $region43: #{gnn_forward.8} parent=39 // pred_region
        %s880 = smul.u32 16, %s23
      $region44: #{gnn_forward.8} parent=39 // pred_fallthru
        _
      // Predicated region
      $region45: #{gnn_forward.8} parent=39 // pred_check
        %p881 = pneg %p223
      $region46: #{gnn_forward.8} parent=39 // pred_check_branch
        %883 = sbr.rel (%p881) target = $region48
      $region47: #{gnn_forward.8} parent=39 // pred_region
        %s884 = smul.u32 16, %s23
      $region48: #{gnn_forward.8} parent=39 // pred_fallthru
        _
    $region40: #{gnn_forward.8} parent=5 // pred_fallthru
      _
    %p885 = scmp.le.s32.totalorder 2, %s13
    // Predicated region
    $region49: #{gnn_forward.8} parent=5 // pred_check
      %p886 = pneg %p885
    $region50: #{gnn_forward.8} parent=5 // pred_check_branch
      %888 = sbr.rel (%p886) target = $region52
    $region51: #{gnn_forward.8} parent=5 // pred_region
      %s889 = ssub.s32 %s13, 2
      // Predicated region
      $region53: #{gnn_forward.8} parent=51 // pred_check
        %p890 = pneg %p201
      $region54: #{gnn_forward.8} parent=51 // pred_check_branch
        %892 = sbr.rel (%p890) target = $region56
      $region55: #{gnn_forward.8} parent=51 // pred_region
        %s893 = smul.u32 16, %s26
        %p894 = scmp.lt.s32.totalorder %s893, 31
        %s895 = scalar_select %p894, %s893, 31
        %p896 = scmp.lt.s32.totalorder %s27, 0
        %s897 = scalar_select %p896, %s27, 0
        %s898 = sadd.s32 %s897, %s895
        %s899 = smul.addr %s898, 8
        %s900 = scalar_lea.vmem %s5, %s899
      $region56: #{gnn_forward.8} parent=51 // pred_fallthru
        _
      // Predicated region
      $region57: #{gnn_forward.8} parent=51 // pred_check
        %p901 = pneg %p229
      $region58: #{gnn_forward.8} parent=51 // pred_check_branch
        %903 = sbr.rel (%p901) target = $region60
      $region59: #{gnn_forward.8} parent=51 // pred_region
        %s904 = smul.u32 16, %s26
        %p905 = scmp.lt.s32.totalorder %s904, 31
        %s906 = scalar_select %p905, %s904, 31
        %p907 = scmp.lt.s32.totalorder %s27, 0
        %s908 = scalar_select %p907, %s27, 0
        %s909 = sadd.s32 %s908, %s906
        %s910 = smul.addr %s909, 8
        %s911 = scalar_lea.vmem %s6, %s910
      $region60: #{gnn_forward.8} parent=51 // pred_fallthru
        _
    $region52: #{gnn_forward.8} parent=5 // pred_fallthru
      _
  $region6: #{gnn_forward.8} parent=0 // loop_footer
    %s17 = sadd.s32 1, %s13
  $region7: #{gnn_forward.8} parent=0 // loop_footer_branch
    %12 = sbr.rel target = $region3
  $region8: #{gnn_forward.8} parent=0 // loop_exit
    _

// kernel: gnn_forward.6
$region0: #{gnn_forward.6}
  #allocation0 [shape = 'u32[]', space=smem, size = 0x4, offset = 0x4, fixed_abs, tag = 'smem constant byte address 0x4 - core index']
  #allocation1 [shape = 'u32[144,128]{1,0:T(1,128)}', space=vmem, size = 0x12000, scoped, tag = 'internal scratch']
  %s0 = inlined_call_operand.vmem [shape: f32[256,64], index: 0, kind: input, shape index: {}]
  %s1 = inlined_call_operand.vmem [shape: bf16[64,128], index: 1, kind: input, shape index: {}]
  %s2 = inlined_call_operand.vmem [shape: f32[1,128], index: 2, kind: input, shape index: {}]
  %s3 = inlined_call_operand.vmem [shape: f32[256,128], index: 3, kind: output, shape index: {}]
  %s4 = sld [smem:[#allocation0]]
  $region45: #{gnn_forward.6} parent=0
    _
  %s6 = ssub.s32 1, %s4
  %s7 = scalar_select 0, %s6, %s4
  loop: start=0, step=1, limit=4
  $region2: #{gnn_forward.6} parent=0 // loop_pre_header
    _
  $region3: #{gnn_forward.6} parent=0 // loop_header
    %s9 = sphi 0, %s13
    %p10 = scmp.ge.s32.totalorder %s9, 4
    %s16 = sphi 0, %s35
    %s17 = sphi 0, %s31
    %s18 = sphi 0, %s27
    %s19 = sphi 0, %s16
    %s20 = sphi 0, %s17
    %s21 = sphi 0, %s18
    %s22 = sphi 0, %s19
    %s23 = sphi 0, %s20
    %s24 = sphi 0, %s21
    %s40 = sphi 0, %s42
    %s43 = sphi 0, %s40
    %s44 = sphi 0, %s43
    %s60 = sphi 0, %s44
    %s68 = sphi 0, %s70
    %s71 = sphi 0, %s68
    %s72 = sphi 0, %s71
    %s88 = sphi 0, %s72
    %s94 = sphi 0, %s96
    %s97 = sphi 0, %s94
    %s98 = sphi 0, %s97
    %s114 = sphi 0, %s98
    %s122 = sphi 0, %s124
    %s125 = sphi 0, %s122
    %s126 = sphi 0, %s125
    %s142 = sphi 0, %s126
  $region4: #{gnn_forward.6} parent=0 // loop_header_branch
    %12 = sbr.rel (%p10) target = $region8
  $region5: #{gnn_forward.6} parent=0 // loop_body
    %s14 = ssub.s32 %s9, 1
    %s15 = ssub.s32 %s9, 2
    %s25 = sadd.s32 1, %s18
    %p26 = scmp.ge.s32.totalorder %s25, 1
    %s27 = scalar_select %p26, 0, %s25
    %s28 = sadd.s32 1, %s17
    %s29 = scalar_select %p26, %s28, %s17
    %p30 = scmp.ge.s32.totalorder %s29, 1
    %s31 = scalar_select %p30, 0, %s29
    %s32 = sadd.s32 1, %s16
    %s33 = scalar_select %p30, %s32, %s16
    %p34 = scmp.ge.s32.totalorder %s33, 2
    %s35 = scalar_select %p34, 0, %s33
    %s36 = ssub.s32 %s16, %s35
    %s37 = ssub.s32 %s18, %s27
    %s38 = sor.u32 %s36, %s37
    %p39 = scmp.eq.s32.totalorder %s38, 0
    %s41 = sadd.s32 %s40, 1
    %s42 = scalar_select %p39, %s40, %s41
    %p45 = pneg %p39
    %p46 = scmp.eq.s32.totalorder %s9, 1
    %p47 = por %p45, %p46
    %p48 = scmp.ne.s32.totalorder %s40, %s43
    %p49 = scmp.eq.s32.totalorder %s9, 0
    %p50 = por %p48, %p49
    %p51 = scmp.ne.s32.totalorder %s40, %s43
    %p52 = scmp.eq.s32.totalorder %s14, 1
    %p53 = por %p51, %p52
    %p54 = scmp.ne.s32.totalorder %s43, %s44
    %p55 = scmp.eq.s32.totalorder %s14, 0
    %p56 = por %p54, %p55
    %p57 = scmp.ne.s32.totalorder %s43, %s44
    %p58 = scmp.eq.s32.totalorder %s15, 1
    %p59 = por %p57, %p58
    %p61 = scmp.ne.s32.totalorder %s44, %s60
    %p62 = scmp.eq.s32.totalorder %s15, 0
    %p63 = por %p61, %p62
    %s64 = ssub.s32 %s18, %s27
    %s65 = ssub.s32 %s17, %s31
    %s66 = sor.u32 %s64, %s65
    %p67 = scmp.eq.s32.totalorder %s66, 0
    %s69 = sadd.s32 %s68, 1
    %s70 = scalar_select %p67, %s68, %s69
    %p73 = pneg %p67
    %p74 = scmp.eq.s32.totalorder %s9, 1
    %p75 = por %p73, %p74
    %p76 = scmp.ne.s32.totalorder %s68, %s71
    %p77 = scmp.eq.s32.totalorder %s9, 0
    %p78 = por %p76, %p77
    %p79 = scmp.ne.s32.totalorder %s68, %s71
    %p80 = scmp.eq.s32.totalorder %s14, 1
    %p81 = por %p79, %p80
    %p82 = scmp.ne.s32.totalorder %s71, %s72
    %p83 = scmp.eq.s32.totalorder %s14, 0
    %p84 = por %p82, %p83
    %p85 = scmp.ne.s32.totalorder %s71, %s72
    %p86 = scmp.eq.s32.totalorder %s15, 1
    %p87 = por %p85, %p86
    %p89 = scmp.ne.s32.totalorder %s72, %s88
    %p90 = scmp.eq.s32.totalorder %s15, 0
    %p91 = por %p89, %p90
    %s92 = ssub.s32 %s17, %s31
    %p93 = scmp.eq.s32.totalorder %s92, 0
    %s95 = sadd.s32 %s94, 1
    %s96 = scalar_select %p93, %s94, %s95
    %p99 = pneg %p93
    %p100 = scmp.eq.s32.totalorder %s9, 1
    %p101 = por %p99, %p100
    %p102 = scmp.ne.s32.totalorder %s94, %s97
    %p103 = scmp.eq.s32.totalorder %s9, 0
    %p104 = por %p102, %p103
    %p105 = scmp.ne.s32.totalorder %s94, %s97
    %p106 = scmp.eq.s32.totalorder %s14, 1
    %p107 = por %p105, %p106
    %p108 = scmp.ne.s32.totalorder %s97, %s98
    %p109 = scmp.eq.s32.totalorder %s14, 0
    %p110 = por %p108, %p109
    %p111 = scmp.ne.s32.totalorder %s97, %s98
    %p112 = scmp.eq.s32.totalorder %s15, 1
    %p113 = por %p111, %p112
    %p115 = scmp.ne.s32.totalorder %s98, %s114
    %p116 = scmp.eq.s32.totalorder %s15, 0
    %p117 = por %p115, %p116
    %s118 = ssub.s32 %s16, %s35
    %s119 = ssub.s32 %s17, %s31
    %s120 = sor.u32 %s118, %s119
    %p121 = scmp.eq.s32.totalorder %s120, 0
    %s123 = sadd.s32 %s122, 1
    %s124 = scalar_select %p121, %s122, %s123
    %p127 = pneg %p121
    %p128 = scmp.eq.s32.totalorder %s9, 1
    %p129 = por %p127, %p128
    %p130 = scmp.ne.s32.totalorder %s122, %s125
    %p131 = scmp.eq.s32.totalorder %s9, 0
    %p132 = por %p130, %p131
    %p133 = scmp.ne.s32.totalorder %s122, %s125
    %p134 = scmp.eq.s32.totalorder %s14, 1
    %p135 = por %p133, %p134
    %p136 = scmp.ne.s32.totalorder %s125, %s126
    %p137 = scmp.eq.s32.totalorder %s14, 0
    %p138 = por %p136, %p137
    %p139 = scmp.ne.s32.totalorder %s125, %s126
    %p140 = scmp.eq.s32.totalorder %s15, 1
    %p141 = por %p139, %p140
    %p143 = scmp.ne.s32.totalorder %s126, %s142
    %p144 = scmp.eq.s32.totalorder %s15, 0
    %p145 = por %p143, %p144
    %p146 = scmp.le.s32.totalorder 1, %s9
    %p147 = scmp.lt.s32.totalorder %s9, 3
    %p148 = pnand %p146, %p147
    %p149 = pneg %p148
    // Predicated region
    $region9: #{gnn_forward.6} parent=5 // pred_check
      _
    $region10: #{gnn_forward.6} parent=5 // pred_check_branch
      %151 = sbr.rel (%p148) target = $region12
    $region11: #{gnn_forward.6} parent=5 // pred_region
      %s152 = ssub.s32 %s9, 1
      // Predicated region
      $region13: #{gnn_forward.6} parent=11 // pred_check
        %p153 = pneg %p84
      $region14: #{gnn_forward.6} parent=11 // pred_check_branch
        %155 = sbr.rel (%p153) target = $region16
      $region15: #{gnn_forward.6} parent=11 // pred_region
        %s156 = smul.u32 8, %s21
        %p157 = scmp.lt.s32.totalorder %s156, 7
        %s158 = scalar_select %p157, %s156, 7
        %p159 = scmp.lt.s32.totalorder %s20, 0
        %s160 = scalar_select %p159, %s20, 0
        %s161 = sadd.s32 %s160, %s158
        %s162 = smul.addr %s161, 4
        %s163 = scalar_lea.vmem %s1, %s162
        %s164 = smul.u32 8, %s21
      $region16: #{gnn_forward.6} parent=11 // pred_fallthru
        _
      // Predicated region
      $region17: #{gnn_forward.6} parent=11 // pred_check
        %p165 = pneg %p110
      $region18: #{gnn_forward.6} parent=11 // pred_check_branch
        %167 = sbr.rel (%p165) target = $region20
      $region19: #{gnn_forward.6} parent=11 // pred_region
        %p168 = scmp.lt.s32.totalorder %s20, 0
        %s169 = scalar_select %p168, %s20, 0
        %s170 = scalar_lea.vmem %s2, %s169
      $region20: #{gnn_forward.6} parent=11 // pred_fallthru
        _
    $region12: #{gnn_forward.6} parent=5 // pred_fallthru
      _
    %p171 = scmp.lt.s32.totalorder %s9, 2
    // Predicated region
    $region21: #{gnn_forward.6} parent=5 // pred_check
      %p172 = pneg %p171
    $region22: #{gnn_forward.6} parent=5 // pred_check_branch
      %174 = sbr.rel (%p172) target = $region24
    $region23: #{gnn_forward.6} parent=5 // pred_region
      // Predicated region
      $region25: #{gnn_forward.6} parent=23 // pred_check
        %p175 = pneg %p50
      $region26: #{gnn_forward.6} parent=23 // pred_check_branch
        %177 = sbr.rel (%p175) target = $region28
      $region27: #{gnn_forward.6} parent=23 // pred_region
        %s178 = smul.u32 16, %s16
        %p179 = scmp.lt.s32.totalorder %s178, 31
        %s180 = scalar_select %p179, %s178, 31
        %p181 = scmp.lt.s32.totalorder %s18, 0
        %s182 = scalar_select %p181, %s18, 0
        %s183 = sadd.s32 %s182, %s180
        %s184 = smul.addr %s183, 8
        %s185 = scalar_lea.vmem %s0, %s184
        %s186 = smul.u32 16, %s16
      $region28: #{gnn_forward.6} parent=23 // pred_fallthru
        _
    $region24: #{gnn_forward.6} parent=5 // pred_fallthru
      _
    %p187 = scmp.le.s32.totalorder 1, %s9
    %p188 = scmp.lt.s32.totalorder %s9, 3
    %p189 = pnand %p187, %p188
    %p190 = pneg %p189
    // Predicated region
    $region29: #{gnn_forward.6} parent=5 // pred_check
      _
    $region30: #{gnn_forward.6} parent=5 // pred_check_branch
      %192 = sbr.rel (%p189) target = $region32
    $region31: #{gnn_forward.6} parent=5 // pred_region
      %s193 = ssub.s32 %s9, 1
      %s194 = smul.u32 16, %s19
      %p195 = scmp.lt.s32.totalorder %s194, 31
      %s196 = scalar_select %p195, %s194, 31
      %p197 = scmp.lt.s32.totalorder %s21, 0
      %s198 = scalar_select %p197, %s21, 0
      %s199 = sadd.s32 %s198, %s196
      %s200 = smul.addr %s199, 8
      %s201 = scalar_lea.vmem %s0, %s200
      %p202 = pneg %p56
      %p203 = pneg %p53
      %s204 = smul.u32 8, %s21
      %p205 = scmp.lt.s32.totalorder %s204, 7
      %s206 = scalar_select %p205, %s204, 7
      %p207 = scmp.lt.s32.totalorder %s20, 0
      %s208 = scalar_select %p207, %s20, 0
      %s209 = sadd.s32 %s208, %s206
      %s210 = smul.addr %s209, 4
      %s211 = scalar_lea.vmem %s1, %s210
      %p212 = pneg %p84
      %p213 = pneg %p81
      %p214 = scmp.lt.s32.totalorder %s20, 0
      %s215 = scalar_select %p214, %s20, 0
      %s216 = scalar_lea.vmem %s2, %s215
      %p217 = pneg %p110
      %p218 = pneg %p107
      %p219 = pneg %p138
      %p220 = pneg %p135
      %s221 = smul.u32 16, %s19
      %p222 = scmp.lt.s32.totalorder %s221, 31
      %s223 = scalar_select %p222, %s221, 31
      %p224 = scmp.lt.s32.totalorder %s20, 0
      %s225 = scalar_select %p224, %s20, 0
      %s226 = sadd.s32 %s225, %s223
      %s227 = smul.addr %s226, 8
      %s228 = scalar_lea.vmem %s3, %s227
      %s229 = smul.u32 16, %s19
      %p230 = scmp.lt.s32.totalorder %s229, 31
      %s231 = scalar_select %p230, %s229, 31
      %p232 = scmp.lt.s32.totalorder %s21, 0
      %s233 = scalar_select %p232, %s21, 0
      %s234 = sadd.s32 %s233, %s231
      %s235 = smul.addr %s234, 8
      %s236 = scalar_lea.vmem %s0, %s235
      %s237 = smul.u32 16, %s19
      %s238 = smul.u32 8, %s21
      %p239 = scmp.lt.s32.totalorder %s238, 7
      %s240 = scalar_select %p239, %s238, 7
      %p241 = scmp.lt.s32.totalorder %s20, 0
      %s242 = scalar_select %p241, %s20, 0
      %s243 = sadd.s32 %s242, %s240
      %s244 = smul.addr %s243, 4
      %s245 = scalar_lea.vmem %s1, %s244
      %s246 = smul.u32 8, %s21
      %p247 = scmp.lt.s32.totalorder %s20, 0
      %s248 = scalar_select %p247, %s20, 0
      %s249 = scalar_lea.vmem %s2, %s248
      %s250 = smul.u32 16, %s19
      %p251 = scmp.lt.s32.totalorder %s250, 31
      %s252 = scalar_select %p251, %s250, 31
      %p253 = scmp.lt.s32.totalorder %s20, 0
      %s254 = scalar_select %p253, %s20, 0
      %s255 = sadd.s32 %s254, %s252
      %s256 = smul.addr %s255, 8
      %s257 = scalar_lea.vmem %s3, %s256
      %s258 = smul.u32 16, %s19
      %v260 = vld [vmem:[%s236] sm:$0xff]
      %v261 = vld [vmem:[%s236 + $0x8] sm:$0xff]
      %v262 = vld [vmem:[%s236 + $0x10] sm:$0xff]
      %v263 = vld [vmem:[%s236 + $0x18] sm:$0xff]
      %v264 = vld [vmem:[%s236 + $0x20] sm:$0xff]
      %v265 = vld [vmem:[%s236 + $0x28] sm:$0xff]
      %v266 = vld [vmem:[%s236 + $0x30] sm:$0xff]
      %v267 = vld [vmem:[%s236 + $0x38] sm:$0xff]
      %v268 = vld [vmem:[%s236 + $0x40] sm:$0xff]
      %v269 = vld [vmem:[%s236 + $0x48] sm:$0xff]
      %v270 = vld [vmem:[%s236 + $0x50] sm:$0xff]
      %v271 = vld [vmem:[%s236 + $0x58] sm:$0xff]
      %v272 = vld [vmem:[%s236 + $0x60] sm:$0xff]
      %v273 = vld [vmem:[%s236 + $0x68] sm:$0xff]
      %v274 = vld [vmem:[%s236 + $0x70] sm:$0xff]
      %v275 = vld [vmem:[%s236 + $0x78] sm:$0xff]
      %v276 = vpack.c.bf16 %v261, %v260
      %v277 = vpack.c.bf16 %v263, %v262
      %v278 = vpack.c.bf16 %v265, %v264
      %v279 = vpack.c.bf16 %v267, %v266
      %v280 = vpack.c.bf16 %v269, %v268
      %v281 = vpack.c.bf16 %v271, %v270
      %v282 = vpack.c.bf16 %v273, %v272
      %v283 = vpack.c.bf16 %v275, %v274
      %v284 = vld [vmem:[%s245] sm:$0xf]
      %v285 = vld [vmem:[%s245 + $0x4] sm:$0xf]
      %v286 = vld [vmem:[%s245 + $0x8] sm:$0xf]
      %v287 = vld [vmem:[%s245 + $0xc] sm:$0xf]
      %v288 = vld [vmem:[%s245 + $0x10] sm:$0xf]
      %v289 = vld [vmem:[%s245 + $0x14] sm:$0xf]
      %v290 = vld [vmem:[%s245 + $0x18] sm:$0xf]
      %v291 = vld [vmem:[%s245 + $0x1c] sm:$0xf]
      %v292 = vld [vmem:[%s249] sm:$0x1]
      %v294 = vlaneseq
      %v295 = vshrl.u32 %v294, 7
      %v296 = vsub.s32 0, %v295
      %v297 = vrot.slane %v292, %v296
      %v307 = vunpack.c.l.b16 %v284
      %v308 = vunpack.c.l.b16 %v285
      %v309 = vunpack.c.l.b16 %v286
      %v310 = vunpack.c.l.b16 %v287
      %v311 = vunpack.c.l.b16 %v288
      %v312 = vunpack.c.l.b16 %v289
      %v313 = vunpack.c.l.b16 %v290
      %v314 = vunpack.c.l.b16 %v291
      %v315 = vpack.c.b16 %v308, %v307
      %v316 = vpack.c.b16 %v310, %v309
      %v317 = vpack.c.b16 %v312, %v311
      %v318 = vpack.c.b16 %v314, %v313
      %vm323 = vcmask 523264
      %v325 = vsel %vm323, %v276, 0
      %v328 = vsel %vm323, %v277, 0
      %v331 = vsel %vm323, %v278, 0
      %v334 = vsel %vm323, %v279, 0
      %v337 = vsel %vm323, %v280, 0
      %v340 = vsel %vm323, %v281, 0
      %v343 = vsel %vm323, %v282, 0
      %v346 = vsel %vm323, %v283, 0
      %348 = vmatprep.subr.bf16.mxu0 0
      %349 = vmatpush1.bf16.msra.mxu0 0
      %350 = vmatprep.subr.bf16.mxu0 0
      %351 = vmatpush1.bf16.msra.mxu0 0
      %352 = vmatprep.subr.bf16.mxu0 0
      %353 = vmatpush1.bf16.msra.mxu0 0
      %354 = vmatprep.subr.bf16.mxu0 0
      %355 = vmatpush1.bf16.msra.mxu0 0
      %356 = vmatprep.subr.bf16.mxu0 0
      %357 = vmatpush1.bf16.msra.mxu0 %v318
      %358 = vmatprep.subr.bf16.mxu0 0
      %359 = vmatpush1.bf16.msra.mxu0 %v317
      %360 = vmatprep.subr.bf16.mxu0 0
      %361 = vmatpush1.bf16.msra.mxu0 %v316
      %362 = vmatprep.subr.bf16.mxu0 0
      %363 = vmatpush1.bf16.msra.mxu0 %v315
      %364 = vmatprep.subr.bf16.mxu0 0
      %365 = vmatpush2.bf16.msra.mxu0 0
      %366 = vmatprep.subr.bf16.mxu0 0
      %367 = vmatpush2.bf16.msra.mxu0 0
      %368 = vmatprep.subr.bf16.mxu0 0
      %369 = vmatpush2.bf16.msra.mxu0 0
      %370 = vmatprep.subr.bf16.mxu0 0
      %371 = vmatpush2.bf16.msra.mxu0 0
      %372 = vmatprep.subr.bf16.mxu0 0
      %373 = vmatpush2.bf16.msra.mxu0 0
      %374 = vmatprep.subr.bf16.mxu0 0
      %375 = vmatpush2.bf16.msra.mxu0 0
      %376 = vmatprep.subr.bf16.mxu0 0
      %377 = vmatpush2.bf16.msra.mxu0 0
      %378 = vmatprep.subr.bf16.mxu0 0
      %379 = vmatpush2.bf16.msra.mxu0 0
      %380 = vmatprep.mubr.bf16.mxu0 0
      %381 = vmatmul.mubr.bf16.gmra.mxu0 %v325
      %v382 = vpop.f32.mrf.mxu0
      %v383 = vadd.f32 %v297, %v382
      %v384 = vpop.f32.mrf.mxu0
      %v385 = vpop.f32.mrf.mxu0
      %v386 = vadd.f32 %v297, %v385
      %v387 = vpop.f32.mrf.mxu0
      %388 = vmatprep.mubr.bf16.mxu0 0
      %389 = vmatmul.mubr.bf16.gmra.mxu0 %v328
      %v390 = vpop.f32.mrf.mxu0
      %v391 = vadd.f32 %v297, %v390
      %v392 = vpop.f32.mrf.mxu0
      %v393 = vpop.f32.mrf.mxu0
      %v394 = vadd.f32 %v297, %v393
      %v395 = vpop.f32.mrf.mxu0
      %396 = vmatprep.mubr.bf16.mxu0 0
      %397 = vmatmul.mubr.bf16.gmra.mxu0 %v331
      %v398 = vpop.f32.mrf.mxu0
      %v399 = vadd.f32 %v297, %v398
      %v400 = vpop.f32.mrf.mxu0
      %v401 = vpop.f32.mrf.mxu0
      %v402 = vadd.f32 %v297, %v401
      %v403 = vpop.f32.mrf.mxu0
      %404 = vmatprep.mubr.bf16.mxu0 0
      %405 = vmatmul.mubr.bf16.gmra.mxu0 %v334
      %v406 = vpop.f32.mrf.mxu0
      %v407 = vadd.f32 %v297, %v406
      %v408 = vpop.f32.mrf.mxu0
      %v409 = vpop.f32.mrf.mxu0
      %v410 = vadd.f32 %v297, %v409
      %v411 = vpop.f32.mrf.mxu0
      %412 = vmatprep.mubr.bf16.mxu0 0
      %413 = vmatmul.mubr.bf16.gmra.mxu0 %v337
      %v414 = vpop.f32.mrf.mxu0
      %v415 = vadd.f32 %v297, %v414
      %v416 = vpop.f32.mrf.mxu0
      %v417 = vpop.f32.mrf.mxu0
      %v418 = vadd.f32 %v297, %v417
      %v419 = vpop.f32.mrf.mxu0
      %420 = vmatprep.mubr.bf16.mxu0 0
      %421 = vmatmul.mubr.bf16.gmra.mxu0 %v340
      %v422 = vpop.f32.mrf.mxu0
      %v423 = vadd.f32 %v297, %v422
      %v424 = vpop.f32.mrf.mxu0
      %v425 = vpop.f32.mrf.mxu0
      %v426 = vadd.f32 %v297, %v425
      %v427 = vpop.f32.mrf.mxu0
      %428 = vmatprep.mubr.bf16.mxu0 0
      %429 = vmatmul.mubr.bf16.gmra.mxu0 %v343
      %v430 = vpop.f32.mrf.mxu0
      %v431 = vadd.f32 %v297, %v430
      %v432 = vpop.f32.mrf.mxu0
      %v433 = vpop.f32.mrf.mxu0
      %v434 = vadd.f32 %v297, %v433
      %v435 = vpop.f32.mrf.mxu0
      %436 = vmatprep.mubr.bf16.mxu0 0
      %437 = vmatmul.mubr.bf16.gmra.mxu0 %v346
      %v438 = vpop.f32.mrf.mxu0
      %v439 = vadd.f32 %v297, %v438
      %v440 = vpop.f32.mrf.mxu0
      %v441 = vpop.f32.mrf.mxu0
      %v442 = vadd.f32 %v297, %v441
      %v443 = vpop.f32.mrf.mxu0
      %444 = vdwg.mxu0
      %445 = vst [vmem:[%s257] sm:$0xff] %v383
      %446 = vst [vmem:[%s257 + $0x8] sm:$0xff] %v386
      %447 = vst [vmem:[%s257 + $0x10] sm:$0xff] %v391
      %448 = vst [vmem:[%s257 + $0x18] sm:$0xff] %v394
      %449 = vst [vmem:[%s257 + $0x20] sm:$0xff] %v399
      %450 = vst [vmem:[%s257 + $0x28] sm:$0xff] %v402
      %451 = vst [vmem:[%s257 + $0x30] sm:$0xff] %v407
      %452 = vst [vmem:[%s257 + $0x38] sm:$0xff] %v410
      %453 = vst [vmem:[%s257 + $0x40] sm:$0xff] %v415
      %454 = vst [vmem:[%s257 + $0x48] sm:$0xff] %v418
      %455 = vst [vmem:[%s257 + $0x50] sm:$0xff] %v423
      %456 = vst [vmem:[%s257 + $0x58] sm:$0xff] %v426
      %457 = vst [vmem:[%s257 + $0x60] sm:$0xff] %v431
      %458 = vst [vmem:[%s257 + $0x68] sm:$0xff] %v434
      %459 = vst [vmem:[%s257 + $0x70] sm:$0xff] %v439
      %460 = vst [vmem:[%s257 + $0x78] sm:$0xff] %v442
      %s461 = smul.u32 16, %s19
      %p462 = scmp.lt.s32.totalorder %s461, 31
      %s463 = scalar_select %p462, %s461, 31
      %p464 = scmp.lt.s32.totalorder %s20, 0
      %s465 = scalar_select %p464, %s20, 0
      %s466 = sadd.s32 %s465, %s463
      %s467 = smul.addr %s466, 8
      %s468 = scalar_lea.vmem %s3, %s467
      // Predicated region
      $region33: #{gnn_forward.6} parent=31 // pred_check
        %p469 = pneg %p135
      $region34: #{gnn_forward.6} parent=31 // pred_check_branch
        %471 = sbr.rel (%p469) target = $region36
      $region35: #{gnn_forward.6} parent=31 // pred_region
        %s472 = smul.u32 16, %s19
      $region36: #{gnn_forward.6} parent=31 // pred_fallthru
        _
    $region32: #{gnn_forward.6} parent=5 // pred_fallthru
      _
    %p473 = scmp.le.s32.totalorder 2, %s9
    // Predicated region
    $region37: #{gnn_forward.6} parent=5 // pred_check
      %p474 = pneg %p473
    $region38: #{gnn_forward.6} parent=5 // pred_check_branch
      %476 = sbr.rel (%p474) target = $region40
    $region39: #{gnn_forward.6} parent=5 // pred_region
      %s477 = ssub.s32 %s9, 2
      // Predicated region
      $region41: #{gnn_forward.6} parent=39 // pred_check
        %p478 = pneg %p141
      $region42: #{gnn_forward.6} parent=39 // pred_check_branch
        %480 = sbr.rel (%p478) target = $region44
      $region43: #{gnn_forward.6} parent=39 // pred_region
        %s481 = smul.u32 16, %s22
        %p482 = scmp.lt.s32.totalorder %s481, 31
        %s483 = scalar_select %p482, %s481, 31
        %p484 = scmp.lt.s32.totalorder %s23, 0
        %s485 = scalar_select %p484, %s23, 0
        %s486 = sadd.s32 %s485, %s483
        %s487 = smul.addr %s486, 8
        %s488 = scalar_lea.vmem %s3, %s487
      $region44: #{gnn_forward.6} parent=39 // pred_fallthru
        _
    $region40: #{gnn_forward.6} parent=5 // pred_fallthru
      _
  $region6: #{gnn_forward.6} parent=0 // loop_footer
    %s13 = sadd.s32 1, %s9
  $region7: #{gnn_forward.6} parent=0 // loop_footer_branch
    %8 = sbr.rel target = $region3
  $region8: #{gnn_forward.6} parent=0 // loop_exit
    _

// kernel: gnn_forward.7
$region0: #{gnn_forward.7}
  #allocation0 [shape = 'u32[]', space=smem, size = 0x4, offset = 0x4, fixed_abs, tag = 'smem constant byte address 0x4 - core index']
  #allocation1 [shape = 'u32[144,128]{1,0:T(1,128)}', space=vmem, size = 0x12000, scoped, tag = 'internal scratch']
  %s0 = inlined_call_operand.vmem [shape: f32[256,128], index: 0, kind: input, shape index: {}]
  %s1 = inlined_call_operand.vmem [shape: f32[1,128], index: 1, kind: input, shape index: {}]
  %s2 = inlined_call_operand.vmem [shape: f32[1,128], index: 2, kind: input, shape index: {}]
  %s3 = inlined_call_operand.vmem [shape: bf16[128,128], index: 3, kind: input, shape index: {}]
  %s4 = inlined_call_operand.vmem [shape: bf16[256,128], index: 4, kind: output, shape index: {}]
  %s5 = sld [smem:[#allocation0]]
  $region49: #{gnn_forward.7} parent=0
    _
  %s7 = ssub.s32 1, %s5
  %s8 = scalar_select 0, %s7, %s5
  loop: start=0, step=1, limit=4
  $region2: #{gnn_forward.7} parent=0 // loop_pre_header
    _
  $region3: #{gnn_forward.7} parent=0 // loop_header
    %s10 = sphi 0, %s14
    %p11 = scmp.ge.s32.totalorder %s10, 4
    %s17 = sphi 0, %s36
    %s18 = sphi 0, %s32
    %s19 = sphi 0, %s28
    %s20 = sphi 0, %s17
    %s21 = sphi 0, %s18
    %s22 = sphi 0, %s19
    %s23 = sphi 0, %s20
    %s24 = sphi 0, %s21
    %s25 = sphi 0, %s22
    %s41 = sphi 0, %s43
    %s44 = sphi 0, %s41
    %s45 = sphi 0, %s44
    %s61 = sphi 0, %s45
    %s67 = sphi 0, %s69
    %s70 = sphi 0, %s67
    %s71 = sphi 0, %s70
    %s87 = sphi 0, %s71
    %s93 = sphi 0, %s95
    %s96 = sphi 0, %s93
    %s97 = sphi 0, %s96
    %s113 = sphi 0, %s97
    %s121 = sphi 0, %s123
    %s124 = sphi 0, %s121
    %s125 = sphi 0, %s124
    %s141 = sphi 0, %s125
    %s149 = sphi 0, %s151
    %s152 = sphi 0, %s149
    %s153 = sphi 0, %s152
    %s169 = sphi 0, %s153
  $region4: #{gnn_forward.7} parent=0 // loop_header_branch
    %13 = sbr.rel (%p11) target = $region8
  $region5: #{gnn_forward.7} parent=0 // loop_body
    %s15 = ssub.s32 %s10, 1
    %s16 = ssub.s32 %s10, 2
    %s26 = sadd.s32 1, %s19
    %p27 = scmp.ge.s32.totalorder %s26, 1
    %s28 = scalar_select %p27, 0, %s26
    %s29 = sadd.s32 1, %s18
    %s30 = scalar_select %p27, %s29, %s18
    %p31 = scmp.ge.s32.totalorder %s30, 1
    %s32 = scalar_select %p31, 0, %s30
    %s33 = sadd.s32 1, %s17
    %s34 = scalar_select %p31, %s33, %s17
    %p35 = scmp.ge.s32.totalorder %s34, 2
    %s36 = scalar_select %p35, 0, %s34
    %s37 = ssub.s32 %s17, %s36
    %s38 = ssub.s32 %s19, %s28
    %s39 = sor.u32 %s37, %s38
    %p40 = scmp.eq.s32.totalorder %s39, 0
    %s42 = sadd.s32 %s41, 1
    %s43 = scalar_select %p40, %s41, %s42
    %p46 = pneg %p40
    %p47 = scmp.eq.s32.totalorder %s10, 1
    %p48 = por %p46, %p47
    %p49 = scmp.ne.s32.totalorder %s41, %s44
    %p50 = scmp.eq.s32.totalorder %s10, 0
    %p51 = por %p49, %p50
    %p52 = scmp.ne.s32.totalorder %s41, %s44
    %p53 = scmp.eq.s32.totalorder %s15, 1
    %p54 = por %p52, %p53
    %p55 = scmp.ne.s32.totalorder %s44, %s45
    %p56 = scmp.eq.s32.totalorder %s15, 0
    %p57 = por %p55, %p56
    %p58 = scmp.ne.s32.totalorder %s44, %s45
    %p59 = scmp.eq.s32.totalorder %s16, 1
    %p60 = por %p58, %p59
    %p62 = scmp.ne.s32.totalorder %s45, %s61
    %p63 = scmp.eq.s32.totalorder %s16, 0
    %p64 = por %p62, %p63
    %s65 = ssub.s32 %s19, %s28
    %p66 = scmp.eq.s32.totalorder %s65, 0
    %s68 = sadd.s32 %s67, 1
    %s69 = scalar_select %p66, %s67, %s68
    %p72 = pneg %p66
    %p73 = scmp.eq.s32.totalorder %s10, 1
    %p74 = por %p72, %p73
    %p75 = scmp.ne.s32.totalorder %s67, %s70
    %p76 = scmp.eq.s32.totalorder %s10, 0
    %p77 = por %p75, %p76
    %p78 = scmp.ne.s32.totalorder %s67, %s70
    %p79 = scmp.eq.s32.totalorder %s15, 1
    %p80 = por %p78, %p79
    %p81 = scmp.ne.s32.totalorder %s70, %s71
    %p82 = scmp.eq.s32.totalorder %s15, 0
    %p83 = por %p81, %p82
    %p84 = scmp.ne.s32.totalorder %s70, %s71
    %p85 = scmp.eq.s32.totalorder %s16, 1
    %p86 = por %p84, %p85
    %p88 = scmp.ne.s32.totalorder %s71, %s87
    %p89 = scmp.eq.s32.totalorder %s16, 0
    %p90 = por %p88, %p89
    %s91 = ssub.s32 %s19, %s28
    %p92 = scmp.eq.s32.totalorder %s91, 0
    %s94 = sadd.s32 %s93, 1
    %s95 = scalar_select %p92, %s93, %s94
    %p98 = pneg %p92
    %p99 = scmp.eq.s32.totalorder %s10, 1
    %p100 = por %p98, %p99
    %p101 = scmp.ne.s32.totalorder %s93, %s96
    %p102 = scmp.eq.s32.totalorder %s10, 0
    %p103 = por %p101, %p102
    %p104 = scmp.ne.s32.totalorder %s93, %s96
    %p105 = scmp.eq.s32.totalorder %s15, 1
    %p106 = por %p104, %p105
    %p107 = scmp.ne.s32.totalorder %s96, %s97
    %p108 = scmp.eq.s32.totalorder %s15, 0
    %p109 = por %p107, %p108
    %p110 = scmp.ne.s32.totalorder %s96, %s97
    %p111 = scmp.eq.s32.totalorder %s16, 1
    %p112 = por %p110, %p111
    %p114 = scmp.ne.s32.totalorder %s97, %s113
    %p115 = scmp.eq.s32.totalorder %s16, 0
    %p116 = por %p114, %p115
    %s117 = ssub.s32 %s19, %s28
    %s118 = ssub.s32 %s18, %s32
    %s119 = sor.u32 %s117, %s118
    %p120 = scmp.eq.s32.totalorder %s119, 0
    %s122 = sadd.s32 %s121, 1
    %s123 = scalar_select %p120, %s121, %s122
    %p126 = pneg %p120
    %p127 = scmp.eq.s32.totalorder %s10, 1
    %p128 = por %p126, %p127
    %p129 = scmp.ne.s32.totalorder %s121, %s124
    %p130 = scmp.eq.s32.totalorder %s10, 0
    %p131 = por %p129, %p130
    %p132 = scmp.ne.s32.totalorder %s121, %s124
    %p133 = scmp.eq.s32.totalorder %s15, 1
    %p134 = por %p132, %p133
    %p135 = scmp.ne.s32.totalorder %s124, %s125
    %p136 = scmp.eq.s32.totalorder %s15, 0
    %p137 = por %p135, %p136
    %p138 = scmp.ne.s32.totalorder %s124, %s125
    %p139 = scmp.eq.s32.totalorder %s16, 1
    %p140 = por %p138, %p139
    %p142 = scmp.ne.s32.totalorder %s125, %s141
    %p143 = scmp.eq.s32.totalorder %s16, 0
    %p144 = por %p142, %p143
    %s145 = ssub.s32 %s17, %s36
    %s146 = ssub.s32 %s18, %s32
    %s147 = sor.u32 %s145, %s146
    %p148 = scmp.eq.s32.totalorder %s147, 0
    %s150 = sadd.s32 %s149, 1
    %s151 = scalar_select %p148, %s149, %s150
    %p154 = pneg %p148
    %p155 = scmp.eq.s32.totalorder %s10, 1
    %p156 = por %p154, %p155
    %p157 = scmp.ne.s32.totalorder %s149, %s152
    %p158 = scmp.eq.s32.totalorder %s10, 0
    %p159 = por %p157, %p158
    %p160 = scmp.ne.s32.totalorder %s149, %s152
    %p161 = scmp.eq.s32.totalorder %s15, 1
    %p162 = por %p160, %p161
    %p163 = scmp.ne.s32.totalorder %s152, %s153
    %p164 = scmp.eq.s32.totalorder %s15, 0
    %p165 = por %p163, %p164
    %p166 = scmp.ne.s32.totalorder %s152, %s153
    %p167 = scmp.eq.s32.totalorder %s16, 1
    %p168 = por %p166, %p167
    %p170 = scmp.ne.s32.totalorder %s153, %s169
    %p171 = scmp.eq.s32.totalorder %s16, 0
    %p172 = por %p170, %p171
    %p173 = scmp.le.s32.totalorder 1, %s10
    %p174 = scmp.lt.s32.totalorder %s10, 3
    %p175 = pnand %p173, %p174
    %p176 = pneg %p175
    // Predicated region
    $region9: #{gnn_forward.7} parent=5 // pred_check
      _
    $region10: #{gnn_forward.7} parent=5 // pred_check_branch
      %178 = sbr.rel (%p175) target = $region12
    $region11: #{gnn_forward.7} parent=5 // pred_region
      %s179 = ssub.s32 %s10, 1
      // Predicated region
      $region13: #{gnn_forward.7} parent=11 // pred_check
        %p180 = pneg %p83
      $region14: #{gnn_forward.7} parent=11 // pred_check_branch
        %182 = sbr.rel (%p180) target = $region16
      $region15: #{gnn_forward.7} parent=11 // pred_region
        %p183 = scmp.lt.s32.totalorder %s22, 0
        %s184 = scalar_select %p183, %s22, 0
        %s185 = scalar_lea.vmem %s1, %s184
      $region16: #{gnn_forward.7} parent=11 // pred_fallthru
        _
      // Predicated region
      $region17: #{gnn_forward.7} parent=11 // pred_check
        %p186 = pneg %p109
      $region18: #{gnn_forward.7} parent=11 // pred_check_branch
        %188 = sbr.rel (%p186) target = $region20
      $region19: #{gnn_forward.7} parent=11 // pred_region
        %p189 = scmp.lt.s32.totalorder %s22, 0
        %s190 = scalar_select %p189, %s22, 0
        %s191 = scalar_lea.vmem %s2, %s190
      $region20: #{gnn_forward.7} parent=11 // pred_fallthru
        _
      // Predicated region
      $region21: #{gnn_forward.7} parent=11 // pred_check
        %p192 = pneg %p137
      $region22: #{gnn_forward.7} parent=11 // pred_check_branch
        %194 = sbr.rel (%p192) target = $region24
      $region23: #{gnn_forward.7} parent=11 // pred_region
        %s195 = smul.u32 16, %s22
        %p196 = scmp.lt.s32.totalorder %s195, 15
        %s197 = scalar_select %p196, %s195, 15
        %p198 = scmp.lt.s32.totalorder %s21, 0
        %s199 = scalar_select %p198, %s21, 0
        %s200 = sadd.s32 %s199, %s197
        %s201 = smul.addr %s200, 4
        %s202 = scalar_lea.vmem %s3, %s201
        %s203 = smul.u32 16, %s22
      $region24: #{gnn_forward.7} parent=11 // pred_fallthru
        _
    $region12: #{gnn_forward.7} parent=5 // pred_fallthru
      _
    %p204 = scmp.lt.s32.totalorder %s10, 2
    // Predicated region
    $region25: #{gnn_forward.7} parent=5 // pred_check
      %p205 = pneg %p204
    $region26: #{gnn_forward.7} parent=5 // pred_check_branch
      %207 = sbr.rel (%p205) target = $region28
    $region27: #{gnn_forward.7} parent=5 // pred_region
      // Predicated region
      $region29: #{gnn_forward.7} parent=27 // pred_check
        %p208 = pneg %p51
      $region30: #{gnn_forward.7} parent=27 // pred_check_branch
        %210 = sbr.rel (%p208) target = $region32
      $region31: #{gnn_forward.7} parent=27 // pred_region
        %s211 = smul.u32 16, %s17
        %p212 = scmp.lt.s32.totalorder %s211, 31
        %s213 = scalar_select %p212, %s211, 31
        %p214 = scmp.lt.s32.totalorder %s19, 0
        %s215 = scalar_select %p214, %s19, 0
        %s216 = sadd.s32 %s215, %s213
        %s217 = smul.addr %s216, 8
        %s218 = scalar_lea.vmem %s0, %s217
        %s219 = smul.u32 16, %s17
      $region32: #{gnn_forward.7} parent=27 // pred_fallthru
        _
    $region28: #{gnn_forward.7} parent=5 // pred_fallthru
      _
    %p220 = scmp.le.s32.totalorder 1, %s10
    %p221 = scmp.lt.s32.totalorder %s10, 3
    %p222 = pnand %p220, %p221
    %p223 = pneg %p222
    // Predicated region
    $region33: #{gnn_forward.7} parent=5 // pred_check
      _
    $region34: #{gnn_forward.7} parent=5 // pred_check_branch
      %225 = sbr.rel (%p222) target = $region36
    $region35: #{gnn_forward.7} parent=5 // pred_region
      %s226 = ssub.s32 %s10, 1
      %s227 = smul.u32 16, %s20
      %p228 = scmp.lt.s32.totalorder %s227, 31
      %s229 = scalar_select %p228, %s227, 31
      %p230 = scmp.lt.s32.totalorder %s22, 0
      %s231 = scalar_select %p230, %s22, 0
      %s232 = sadd.s32 %s231, %s229
      %s233 = smul.addr %s232, 8
      %s234 = scalar_lea.vmem %s0, %s233
      %p235 = pneg %p57
      %p236 = pneg %p54
      %p237 = scmp.lt.s32.totalorder %s22, 0
      %s238 = scalar_select %p237, %s22, 0
      %s239 = scalar_lea.vmem %s1, %s238
      %p240 = pneg %p83
      %p241 = pneg %p80
      %p242 = scmp.lt.s32.totalorder %s22, 0
      %s243 = scalar_select %p242, %s22, 0
      %s244 = scalar_lea.vmem %s2, %s243
      %p245 = pneg %p109
      %p246 = pneg %p106
      %s247 = smul.u32 16, %s22
      %p248 = scmp.lt.s32.totalorder %s247, 15
      %s249 = scalar_select %p248, %s247, 15
      %p250 = scmp.lt.s32.totalorder %s21, 0
      %s251 = scalar_select %p250, %s21, 0
      %s252 = sadd.s32 %s251, %s249
      %s253 = smul.addr %s252, 4
      %s254 = scalar_lea.vmem %s3, %s253
      %p255 = pneg %p137
      %p256 = pneg %p134
      %p257 = pneg %p165
      %p258 = pneg %p162
      %s259 = smul.u32 16, %s20
      %p260 = scmp.lt.s32.totalorder %s259, 31
      %s261 = scalar_select %p260, %s259, 31
      %p262 = scmp.lt.s32.totalorder %s21, 0
      %s263 = scalar_select %p262, %s21, 0
      %s264 = sadd.s32 %s263, %s261
      %s265 = smul.addr %s264, 4
      %s266 = scalar_lea.vmem %s4, %s265
      %s267 = smul.u32 16, %s20
      %p268 = scmp.lt.s32.totalorder %s267, 31
      %s269 = scalar_select %p268, %s267, 31
      %p270 = scmp.lt.s32.totalorder %s22, 0
      %s271 = scalar_select %p270, %s22, 0
      %s272 = sadd.s32 %s271, %s269
      %s273 = smul.addr %s272, 8
      %s274 = scalar_lea.vmem %s0, %s273
      %s275 = smul.u32 16, %s20
      %p276 = scmp.lt.s32.totalorder %s22, 0
      %s277 = scalar_select %p276, %s22, 0
      %s278 = scalar_lea.vmem %s1, %s277
      %p279 = scmp.lt.s32.totalorder %s22, 0
      %s280 = scalar_select %p279, %s22, 0
      %s281 = scalar_lea.vmem %s2, %s280
      %s282 = smul.u32 16, %s22
      %p283 = scmp.lt.s32.totalorder %s282, 15
      %s284 = scalar_select %p283, %s282, 15
      %p285 = scmp.lt.s32.totalorder %s21, 0
      %s286 = scalar_select %p285, %s21, 0
      %s287 = sadd.s32 %s286, %s284
      %s288 = smul.addr %s287, 4
      %s289 = scalar_lea.vmem %s3, %s288
      %s290 = smul.u32 16, %s22
      %s291 = smul.u32 16, %s20
      %p292 = scmp.lt.s32.totalorder %s291, 31
      %s293 = scalar_select %p292, %s291, 31
      %p294 = scmp.lt.s32.totalorder %s21, 0
      %s295 = scalar_select %p294, %s21, 0
      %s296 = sadd.s32 %s295, %s293
      %s297 = smul.addr %s296, 4
      %s298 = scalar_lea.vmem %s4, %s297
      %s299 = smul.u32 16, %s20
      %v301 = vld [vmem:[%s274] sm:$0xff]
      %v302 = vld [vmem:[%s274 + $0x8] sm:$0xff]
      %v303 = vld [vmem:[%s274 + $0x10] sm:$0xff]
      %v304 = vld [vmem:[%s274 + $0x18] sm:$0xff]
      %v305 = vld [vmem:[%s274 + $0x20] sm:$0xff]
      %v306 = vld [vmem:[%s274 + $0x28] sm:$0xff]
      %v307 = vld [vmem:[%s274 + $0x30] sm:$0xff]
      %v308 = vld [vmem:[%s274 + $0x38] sm:$0xff]
      %v309 = vld [vmem:[%s274 + $0x40] sm:$0xff]
      %v310 = vld [vmem:[%s274 + $0x48] sm:$0xff]
      %v311 = vld [vmem:[%s274 + $0x50] sm:$0xff]
      %v312 = vld [vmem:[%s274 + $0x58] sm:$0xff]
      %v313 = vld [vmem:[%s274 + $0x60] sm:$0xff]
      %v314 = vld [vmem:[%s274 + $0x68] sm:$0xff]
      %v315 = vld [vmem:[%s274 + $0x70] sm:$0xff]
      %v316 = vld [vmem:[%s274 + $0x78] sm:$0xff]
      %v317 = vld [vmem:[%s278] sm:$0x1]
      %v319 = vlaneseq
      %v320 = vshrl.u32 %v319, 7
      %v321 = vsub.s32 0, %v320
      %v322 = vrot.slane %v317, %v321
      %v324 = vmul.f32 %v301, %v322
      %v325 = vmul.f32 %v302, %v322
      %v326 = vmul.f32 %v303, %v322
      %v327 = vmul.f32 %v304, %v322
      %v328 = vmul.f32 %v305, %v322
      %v329 = vmul.f32 %v306, %v322
      %v330 = vmul.f32 %v307, %v322
      %v331 = vmul.f32 %v308, %v322
      %v332 = vmul.f32 %v309, %v322
      %v333 = vmul.f32 %v310, %v322
      %v334 = vmul.f32 %v311, %v322
      %v335 = vmul.f32 %v312, %v322
      %v336 = vmul.f32 %v313, %v322
      %v337 = vmul.f32 %v314, %v322
      %v338 = vmul.f32 %v315, %v322
      %v339 = vmul.f32 %v316, %v322
      %v340 = vld [vmem:[%s281] sm:$0x1]
      %v342 = vlaneseq
      %v343 = vshrl.u32 %v342, 7
      %v344 = vsub.s32 0, %v343
      %v345 = vrot.slane %v340, %v344
      %v347 = vadd.f32 %v324, %v345
      %v348 = vadd.f32 %v325, %v345
      %v349 = vadd.f32 %v326, %v345
      %v350 = vadd.f32 %v327, %v345
      %v351 = vadd.f32 %v328, %v345
      %v352 = vadd.f32 %v329, %v345
      %v353 = vadd.f32 %v330, %v345
      %v354 = vadd.f32 %v331, %v345
      %v355 = vadd.f32 %v332, %v345
      %v356 = vadd.f32 %v333, %v345
      %v357 = vadd.f32 %v334, %v345
      %v358 = vadd.f32 %v335, %v345
      %v359 = vadd.f32 %v336, %v345
      %v360 = vadd.f32 %v337, %v345
      %v361 = vadd.f32 %v338, %v345
      %v362 = vadd.f32 %v339, %v345
      %v363 = vmax.f32 %v347, 0.0
      %v364 = vmax.f32 %v348, 0.0
      %v365 = vmax.f32 %v349, 0.0
      %v366 = vmax.f32 %v350, 0.0
      %v367 = vmax.f32 %v351, 0.0
      %v368 = vmax.f32 %v352, 0.0
      %v369 = vmax.f32 %v353, 0.0
      %v370 = vmax.f32 %v354, 0.0
      %v371 = vmax.f32 %v355, 0.0
      %v372 = vmax.f32 %v356, 0.0
      %v373 = vmax.f32 %v357, 0.0
      %v374 = vmax.f32 %v358, 0.0
      %v375 = vmax.f32 %v359, 0.0
      %v376 = vmax.f32 %v360, 0.0
      %v377 = vmax.f32 %v361, 0.0
      %v378 = vmax.f32 %v362, 0.0
      %v379 = vpack.c.bf16 %v364, %v363
      %v380 = vpack.c.bf16 %v366, %v365
      %v381 = vpack.c.bf16 %v368, %v367
      %v382 = vpack.c.bf16 %v370, %v369
      %v383 = vpack.c.bf16 %v372, %v371
      %v384 = vpack.c.bf16 %v374, %v373
      %v385 = vpack.c.bf16 %v376, %v375
      %v386 = vpack.c.bf16 %v378, %v377
      %v387 = vld [vmem:[%s289] sm:$0xf]
      %v388 = vld [vmem:[%s289 + $0x4] sm:$0xf]
      %v389 = vld [vmem:[%s289 + $0x8] sm:$0xf]
      %v390 = vld [vmem:[%s289 + $0xc] sm:$0xf]
      %v391 = vld [vmem:[%s289 + $0x10] sm:$0xf]
      %v392 = vld [vmem:[%s289 + $0x14] sm:$0xf]
      %v393 = vld [vmem:[%s289 + $0x18] sm:$0xf]
      %v394 = vld [vmem:[%s289 + $0x1c] sm:$0xf]
      %v395 = vld [vmem:[%s289 + $0x20] sm:$0xf]
      %v396 = vld [vmem:[%s289 + $0x24] sm:$0xf]
      %v397 = vld [vmem:[%s289 + $0x28] sm:$0xf]
      %v398 = vld [vmem:[%s289 + $0x2c] sm:$0xf]
      %v399 = vld [vmem:[%s289 + $0x30] sm:$0xf]
      %v400 = vld [vmem:[%s289 + $0x34] sm:$0xf]
      %v401 = vld [vmem:[%s289 + $0x38] sm:$0xf]
      %v402 = vld [vmem:[%s289 + $0x3c] sm:$0xf]
      %v419 = vunpack.c.l.b16 %v387
      %v420 = vunpack.c.l.b16 %v388
      %v421 = vunpack.c.l.b16 %v389
      %v422 = vunpack.c.l.b16 %v390
      %v423 = vunpack.c.l.b16 %v391
      %v424 = vunpack.c.l.b16 %v392
      %v425 = vunpack.c.l.b16 %v393
      %v426 = vunpack.c.l.b16 %v394
      %v427 = vunpack.c.l.b16 %v395
      %v428 = vunpack.c.l.b16 %v396
      %v429 = vunpack.c.l.b16 %v397
      %v430 = vunpack.c.l.b16 %v398
      %v431 = vunpack.c.l.b16 %v399
      %v432 = vunpack.c.l.b16 %v400
      %v433 = vunpack.c.l.b16 %v401
      %v434 = vunpack.c.l.b16 %v402
      %v435 = vpack.c.b16 %v420, %v419
      %v436 = vpack.c.b16 %v422, %v421
      %v437 = vpack.c.b16 %v424, %v423
      %v438 = vpack.c.b16 %v426, %v425
      %v439 = vpack.c.b16 %v428, %v427
      %v440 = vpack.c.b16 %v430, %v429
      %v441 = vpack.c.b16 %v432, %v431
      %v442 = vpack.c.b16 %v434, %v433
      %451 = vmatprep.subr.bf16.mxu0 0
      %452 = vmatpush1.bf16.msra.mxu0 %v442
      %453 = vmatprep.subr.bf16.mxu0 0
      %454 = vmatpush1.bf16.msra.mxu0 %v441
      %455 = vmatprep.subr.bf16.mxu0 0
      %456 = vmatpush1.bf16.msra.mxu0 %v440
      %457 = vmatprep.subr.bf16.mxu0 0
      %458 = vmatpush1.bf16.msra.mxu0 %v439
      %459 = vmatprep.subr.bf16.mxu0 0
      %460 = vmatpush1.bf16.msra.mxu0 %v438
      %461 = vmatprep.subr.bf16.mxu0 0
      %462 = vmatpush1.bf16.msra.mxu0 %v437
      %463 = vmatprep.subr.bf16.mxu0 0
      %464 = vmatpush1.bf16.msra.mxu0 %v436
      %465 = vmatprep.subr.bf16.mxu0 0
      %466 = vmatpush1.bf16.msra.mxu0 %v435
      %467 = vmatprep.subr.bf16.mxu0 0
      %468 = vmatpush2.bf16.msra.mxu0 0
      %469 = vmatprep.subr.bf16.mxu0 0
      %470 = vmatpush2.bf16.msra.mxu0 0
      %471 = vmatprep.subr.bf16.mxu0 0
      %472 = vmatpush2.bf16.msra.mxu0 0
      %473 = vmatprep.subr.bf16.mxu0 0
      %474 = vmatpush2.bf16.msra.mxu0 0
      %475 = vmatprep.subr.bf16.mxu0 0
      %476 = vmatpush2.bf16.msra.mxu0 0
      %477 = vmatprep.subr.bf16.mxu0 0
      %478 = vmatpush2.bf16.msra.mxu0 0
      %479 = vmatprep.subr.bf16.mxu0 0
      %480 = vmatpush2.bf16.msra.mxu0 0
      %481 = vmatprep.subr.bf16.mxu0 0
      %482 = vmatpush2.bf16.msra.mxu0 0
      %483 = vmatprep.mubr.bf16.mxu0 0
      %484 = vmatmul.mubr.bf16.gmra.mxu0 %v379
      %v485 = vpop.f32.mrf.mxu0
      %v486 = vadd.f32 0.0, %v485
      %v487 = vpop.f32.mrf.mxu0
      %v488 = vpop.f32.mrf.mxu0
      %v489 = vadd.f32 0.0, %v488
      %v490 = vpop.f32.mrf.mxu0
      %491 = vmatprep.mubr.bf16.mxu0 0
      %492 = vmatmul.mubr.bf16.gmra.mxu0 %v380
      %v493 = vpop.f32.mrf.mxu0
      %v494 = vadd.f32 0.0, %v493
      %v495 = vpop.f32.mrf.mxu0
      %v496 = vpop.f32.mrf.mxu0
      %v497 = vadd.f32 0.0, %v496
      %v498 = vpop.f32.mrf.mxu0
      %499 = vmatprep.mubr.bf16.mxu0 0
      %500 = vmatmul.mubr.bf16.gmra.mxu0 %v381
      %v501 = vpop.f32.mrf.mxu0
      %v502 = vadd.f32 0.0, %v501
      %v503 = vpop.f32.mrf.mxu0
      %v504 = vpop.f32.mrf.mxu0
      %v505 = vadd.f32 0.0, %v504
      %v506 = vpop.f32.mrf.mxu0
      %507 = vmatprep.mubr.bf16.mxu0 0
      %508 = vmatmul.mubr.bf16.gmra.mxu0 %v382
      %v509 = vpop.f32.mrf.mxu0
      %v510 = vadd.f32 0.0, %v509
      %v511 = vpop.f32.mrf.mxu0
      %v512 = vpop.f32.mrf.mxu0
      %v513 = vadd.f32 0.0, %v512
      %v514 = vpop.f32.mrf.mxu0
      %515 = vmatprep.mubr.bf16.mxu0 0
      %516 = vmatmul.mubr.bf16.gmra.mxu0 %v383
      %v517 = vpop.f32.mrf.mxu0
      %v518 = vadd.f32 0.0, %v517
      %v519 = vpop.f32.mrf.mxu0
      %v520 = vpop.f32.mrf.mxu0
      %v521 = vadd.f32 0.0, %v520
      %v522 = vpop.f32.mrf.mxu0
      %523 = vmatprep.mubr.bf16.mxu0 0
      %524 = vmatmul.mubr.bf16.gmra.mxu0 %v384
      %v525 = vpop.f32.mrf.mxu0
      %v526 = vadd.f32 0.0, %v525
      %v527 = vpop.f32.mrf.mxu0
      %v528 = vpop.f32.mrf.mxu0
      %v529 = vadd.f32 0.0, %v528
      %v530 = vpop.f32.mrf.mxu0
      %531 = vmatprep.mubr.bf16.mxu0 0
      %532 = vmatmul.mubr.bf16.gmra.mxu0 %v385
      %v533 = vpop.f32.mrf.mxu0
      %v534 = vadd.f32 0.0, %v533
      %v535 = vpop.f32.mrf.mxu0
      %v536 = vpop.f32.mrf.mxu0
      %v537 = vadd.f32 0.0, %v536
      %v538 = vpop.f32.mrf.mxu0
      %539 = vmatprep.mubr.bf16.mxu0 0
      %540 = vmatmul.mubr.bf16.gmra.mxu0 %v386
      %v541 = vpop.f32.mrf.mxu0
      %v542 = vadd.f32 0.0, %v541
      %v543 = vpop.f32.mrf.mxu0
      %v544 = vpop.f32.mrf.mxu0
      %v545 = vadd.f32 0.0, %v544
      %v546 = vpop.f32.mrf.mxu0
      %547 = vdwg.mxu0
      %v548 = vpack.c.bf16 %v489, %v486
      %v549 = vpack.c.bf16 %v497, %v494
      %v550 = vpack.c.bf16 %v505, %v502
      %v551 = vpack.c.bf16 %v513, %v510
      %v552 = vpack.c.bf16 %v521, %v518
      %v553 = vpack.c.bf16 %v529, %v526
      %v554 = vpack.c.bf16 %v537, %v534
      %v555 = vpack.c.bf16 %v545, %v542
      %v564 = vunpack.c.l.b16 %v548
      %v565 = vunpack.c.h.b16 %v548
      %v566 = vunpack.c.l.b16 %v549
      %v567 = vunpack.c.h.b16 %v549
      %v568 = vunpack.c.l.b16 %v550
      %v569 = vunpack.c.h.b16 %v550
      %v570 = vunpack.c.l.b16 %v551
      %v571 = vunpack.c.h.b16 %v551
      %v572 = vunpack.c.l.b16 %v552
      %v573 = vunpack.c.h.b16 %v552
      %v574 = vunpack.c.l.b16 %v553
      %v575 = vunpack.c.h.b16 %v553
      %v576 = vunpack.c.l.b16 %v554
      %v577 = vunpack.c.h.b16 %v554
      %v578 = vunpack.c.l.b16 %v555
      %v579 = vunpack.c.h.b16 %v555
      %v580 = vpack.c.b16 %v564, %v564
      %v581 = vpack.c.b16 %v565, %v565
      %v582 = vpack.c.b16 %v566, %v566
      %v583 = vpack.c.b16 %v567, %v567
      %v584 = vpack.c.b16 %v568, %v568
      %v585 = vpack.c.b16 %v569, %v569
      %v586 = vpack.c.b16 %v570, %v570
      %v587 = vpack.c.b16 %v571, %v571
      %v588 = vpack.c.b16 %v572, %v572
      %v589 = vpack.c.b16 %v573, %v573
      %v590 = vpack.c.b16 %v574, %v574
      %v591 = vpack.c.b16 %v575, %v575
      %v592 = vpack.c.b16 %v576, %v576
      %v593 = vpack.c.b16 %v577, %v577
      %v594 = vpack.c.b16 %v578, %v578
      %v595 = vpack.c.b16 %v579, %v579
      %612 = vst [vmem:[%s298] sm:$0xf] %v580
      %613 = vst [vmem:[%s298 + $0x4] sm:$0xf] %v581
      %614 = vst [vmem:[%s298 + $0x8] sm:$0xf] %v582
      %615 = vst [vmem:[%s298 + $0xc] sm:$0xf] %v583
      %616 = vst [vmem:[%s298 + $0x10] sm:$0xf] %v584
      %617 = vst [vmem:[%s298 + $0x14] sm:$0xf] %v585
      %618 = vst [vmem:[%s298 + $0x18] sm:$0xf] %v586
      %619 = vst [vmem:[%s298 + $0x1c] sm:$0xf] %v587
      %620 = vst [vmem:[%s298 + $0x20] sm:$0xf] %v588
      %621 = vst [vmem:[%s298 + $0x24] sm:$0xf] %v589
      %622 = vst [vmem:[%s298 + $0x28] sm:$0xf] %v590
      %623 = vst [vmem:[%s298 + $0x2c] sm:$0xf] %v591
      %624 = vst [vmem:[%s298 + $0x30] sm:$0xf] %v592
      %625 = vst [vmem:[%s298 + $0x34] sm:$0xf] %v593
      %626 = vst [vmem:[%s298 + $0x38] sm:$0xf] %v594
      %627 = vst [vmem:[%s298 + $0x3c] sm:$0xf] %v595
      %s628 = smul.u32 16, %s20
      %p629 = scmp.lt.s32.totalorder %s628, 31
      %s630 = scalar_select %p629, %s628, 31
      %p631 = scmp.lt.s32.totalorder %s21, 0
      %s632 = scalar_select %p631, %s21, 0
      %s633 = sadd.s32 %s632, %s630
      %s634 = smul.addr %s633, 4
      %s635 = scalar_lea.vmem %s4, %s634
      // Predicated region
      $region37: #{gnn_forward.7} parent=35 // pred_check
        %p636 = pneg %p162
      $region38: #{gnn_forward.7} parent=35 // pred_check_branch
        %638 = sbr.rel (%p636) target = $region40
      $region39: #{gnn_forward.7} parent=35 // pred_region
        %s639 = smul.u32 16, %s20
      $region40: #{gnn_forward.7} parent=35 // pred_fallthru
        _
    $region36: #{gnn_forward.7} parent=5 // pred_fallthru
      _
    %p640 = scmp.le.s32.totalorder 2, %s10
    // Predicated region
    $region41: #{gnn_forward.7} parent=5 // pred_check
      %p641 = pneg %p640
    $region42: #{gnn_forward.7} parent=5 // pred_check_branch
      %643 = sbr.rel (%p641) target = $region44
    $region43: #{gnn_forward.7} parent=5 // pred_region
      %s644 = ssub.s32 %s10, 2
      // Predicated region
      $region45: #{gnn_forward.7} parent=43 // pred_check
        %p645 = pneg %p168
      $region46: #{gnn_forward.7} parent=43 // pred_check_branch
        %647 = sbr.rel (%p645) target = $region48
      $region47: #{gnn_forward.7} parent=43 // pred_region
        %s648 = smul.u32 16, %s23
        %p649 = scmp.lt.s32.totalorder %s648, 31
        %s650 = scalar_select %p649, %s648, 31
        %p651 = scmp.lt.s32.totalorder %s24, 0
        %s652 = scalar_select %p651, %s24, 0
        %s653 = sadd.s32 %s652, %s650
        %s654 = smul.addr %s653, 4
        %s655 = scalar_lea.vmem %s4, %s654
      $region48: #{gnn_forward.7} parent=43 // pred_fallthru
        _
    $region44: #{gnn_forward.7} parent=5 // pred_fallthru
      _
  $region6: #{gnn_forward.7} parent=0 // loop_footer
    %s14 = sadd.s32 1, %s10
  $region7: #{gnn_forward.7} parent=0 // loop_footer_branch
    %9 = sbr.rel target = $region3
  $region8: #{gnn_forward.7} parent=0 // loop_exit
    _

// kernel: gnn_forward.10
$region0: #{gnn_forward.10}
  #allocation0 [shape = 'u32[]', space=smem, size = 0x4, offset = 0x4, fixed_abs, tag = 'smem constant byte address 0x4 - core index']
  #allocation1 [shape = 'u32[144,128]{1,0:T(1,128)}', space=vmem, size = 0x12000, scoped, tag = 'internal scratch']
  %s0 = inlined_call_operand.vmem [shape: bf16[256,256], index: 0, kind: input, shape index: {}]
  %s1 = inlined_call_operand.vmem [shape: bf16[256,128], index: 1, kind: input, shape index: {}]
  %s2 = inlined_call_operand.vmem [shape: f32[1,128], index: 2, kind: input, shape index: {}]
  %s3 = inlined_call_operand.vmem [shape: f32[256,128], index: 3, kind: input, shape index: {}]
  %s4 = inlined_call_operand.vmem [shape: f32[256,128], index: 4, kind: input, shape index: {}]
  %s5 = inlined_call_operand.hbm [shape: f32[256,128], index: 5, kind: output, shape index: {0}]
  %s6 = inlined_call_operand.vmem [shape: f32[256,128], index: 6, kind: output, shape index: {1}]
  %7 = xla_tuple %s5, %s6
  %s8 = sld [smem:[#allocation0]]
  $region61: #{gnn_forward.10} parent=0
    _
  %s10 = ssub.s32 1, %s8
  %s11 = scalar_select 0, %s10, %s8
  $region1: #{gnn_forward.10} parent=0
    #allocation2 [shape = 'u8[131072]{0}', space=vmem, size = 0x20000, scoped, tag = 'output window, operand 0']
    #allocation3 [shape = 's32[2]{0}', space=sflag, size = 0x8, scoped, tag = 'scoped memory for gnn_forward.10']
    %12 = vsyncpa [#allocation3], 0
    %s13 = scalar_lea.sflag [#allocation3], 1
    %14 = vsyncpa %s13, 0
    loop: start=0, step=1, limit=4
    $region2: #{gnn_forward.10} parent=1 // loop_pre_header
      _
    $region3: #{gnn_forward.10} parent=1 // loop_header
      %s16 = sphi 0, %s20
      %p17 = scmp.ge.s32.totalorder %s16, 4
      %s23 = sphi 0, %s42
      %s24 = sphi 0, %s38
      %s25 = sphi 0, %s34
      %s26 = sphi 0, %s23
      %s27 = sphi 0, %s24
      %s28 = sphi 0, %s25
      %s29 = sphi 0, %s26
      %s30 = sphi 0, %s27
      %s31 = sphi 0, %s28
      %s47 = sphi 0, %s49
      %s50 = sphi 0, %s47
      %s51 = sphi 0, %s50
      %s67 = sphi 0, %s51
      %s75 = sphi 0, %s77
      %s78 = sphi 0, %s75
      %s79 = sphi 0, %s78
      %s95 = sphi 0, %s79
      %s101 = sphi 0, %s103
      %s104 = sphi 0, %s101
      %s105 = sphi 0, %s104
      %s121 = sphi 0, %s105
      %s129 = sphi 0, %s131
      %s132 = sphi 0, %s129
      %s133 = sphi 0, %s132
      %s149 = sphi 0, %s133
      %s157 = sphi 0, %s159
      %s160 = sphi 0, %s157
      %s161 = sphi 0, %s160
      %s177 = sphi 0, %s161
      %s185 = sphi 0, %s187
      %s188 = sphi 0, %s185
      %s189 = sphi 0, %s188
      %s205 = sphi 0, %s189
      %s213 = sphi 0, %s215
      %s216 = sphi 0, %s213
      %s217 = sphi 0, %s216
      %s233 = sphi 0, %s217
    $region4: #{gnn_forward.10} parent=1 // loop_header_branch
      %19 = sbr.rel (%p17) target = $region8
    $region5: #{gnn_forward.10} parent=1 // loop_body
      %s21 = ssub.s32 %s16, 1
      %s22 = ssub.s32 %s16, 2
      %s32 = sadd.s32 1, %s25
      %p33 = scmp.ge.s32.totalorder %s32, 1
      %s34 = scalar_select %p33, 0, %s32
      %s35 = sadd.s32 1, %s24
      %s36 = scalar_select %p33, %s35, %s24
      %p37 = scmp.ge.s32.totalorder %s36, 1
      %s38 = scalar_select %p37, 0, %s36
      %s39 = sadd.s32 1, %s23
      %s40 = scalar_select %p37, %s39, %s23
      %p41 = scmp.ge.s32.totalorder %s40, 2
      %s42 = scalar_select %p41, 0, %s40
      %s43 = ssub.s32 %s23, %s42
      %s44 = ssub.s32 %s25, %s34
      %s45 = sor.u32 %s43, %s44
      %p46 = scmp.eq.s32.totalorder %s45, 0
      %s48 = sadd.s32 %s47, 1
      %s49 = scalar_select %p46, %s47, %s48
      %p52 = pneg %p46
      %p53 = scmp.eq.s32.totalorder %s16, 1
      %p54 = por %p52, %p53
      %p55 = scmp.ne.s32.totalorder %s47, %s50
      %p56 = scmp.eq.s32.totalorder %s16, 0
      %p57 = por %p55, %p56
      %p58 = scmp.ne.s32.totalorder %s47, %s50
      %p59 = scmp.eq.s32.totalorder %s21, 1
      %p60 = por %p58, %p59
      %p61 = scmp.ne.s32.totalorder %s50, %s51
      %p62 = scmp.eq.s32.totalorder %s21, 0
      %p63 = por %p61, %p62
      %p64 = scmp.ne.s32.totalorder %s50, %s51
      %p65 = scmp.eq.s32.totalorder %s22, 1
      %p66 = por %p64, %p65
      %p68 = scmp.ne.s32.totalorder %s51, %s67
      %p69 = scmp.eq.s32.totalorder %s22, 0
      %p70 = por %p68, %p69
      %s71 = ssub.s32 %s25, %s34
      %s72 = ssub.s32 %s24, %s38
      %s73 = sor.u32 %s71, %s72
      %p74 = scmp.eq.s32.totalorder %s73, 0
      %s76 = sadd.s32 %s75, 1
      %s77 = scalar_select %p74, %s75, %s76
      %p80 = pneg %p74
      %p81 = scmp.eq.s32.totalorder %s16, 1
      %p82 = por %p80, %p81
      %p83 = scmp.ne.s32.totalorder %s75, %s78
      %p84 = scmp.eq.s32.totalorder %s16, 0
      %p85 = por %p83, %p84
      %p86 = scmp.ne.s32.totalorder %s75, %s78
      %p87 = scmp.eq.s32.totalorder %s21, 1
      %p88 = por %p86, %p87
      %p89 = scmp.ne.s32.totalorder %s78, %s79
      %p90 = scmp.eq.s32.totalorder %s21, 0
      %p91 = por %p89, %p90
      %p92 = scmp.ne.s32.totalorder %s78, %s79
      %p93 = scmp.eq.s32.totalorder %s22, 1
      %p94 = por %p92, %p93
      %p96 = scmp.ne.s32.totalorder %s79, %s95
      %p97 = scmp.eq.s32.totalorder %s22, 0
      %p98 = por %p96, %p97
      %s99 = ssub.s32 %s24, %s38
      %p100 = scmp.eq.s32.totalorder %s99, 0
      %s102 = sadd.s32 %s101, 1
      %s103 = scalar_select %p100, %s101, %s102
      %p106 = pneg %p100
      %p107 = scmp.eq.s32.totalorder %s16, 1
      %p108 = por %p106, %p107
      %p109 = scmp.ne.s32.totalorder %s101, %s104
      %p110 = scmp.eq.s32.totalorder %s16, 0
      %p111 = por %p109, %p110
      %p112 = scmp.ne.s32.totalorder %s101, %s104
      %p113 = scmp.eq.s32.totalorder %s21, 1
      %p114 = por %p112, %p113
      %p115 = scmp.ne.s32.totalorder %s104, %s105
      %p116 = scmp.eq.s32.totalorder %s21, 0
      %p117 = por %p115, %p116
      %p118 = scmp.ne.s32.totalorder %s104, %s105
      %p119 = scmp.eq.s32.totalorder %s22, 1
      %p120 = por %p118, %p119
      %p122 = scmp.ne.s32.totalorder %s105, %s121
      %p123 = scmp.eq.s32.totalorder %s22, 0
      %p124 = por %p122, %p123
      %s125 = ssub.s32 %s23, %s42
      %s126 = ssub.s32 %s24, %s38
      %s127 = sor.u32 %s125, %s126
      %p128 = scmp.eq.s32.totalorder %s127, 0
      %s130 = sadd.s32 %s129, 1
      %s131 = scalar_select %p128, %s129, %s130
      %p134 = pneg %p128
      %p135 = scmp.eq.s32.totalorder %s16, 1
      %p136 = por %p134, %p135
      %p137 = scmp.ne.s32.totalorder %s129, %s132
      %p138 = scmp.eq.s32.totalorder %s16, 0
      %p139 = por %p137, %p138
      %p140 = scmp.ne.s32.totalorder %s129, %s132
      %p141 = scmp.eq.s32.totalorder %s21, 1
      %p142 = por %p140, %p141
      %p143 = scmp.ne.s32.totalorder %s132, %s133
      %p144 = scmp.eq.s32.totalorder %s21, 0
      %p145 = por %p143, %p144
      %p146 = scmp.ne.s32.totalorder %s132, %s133
      %p147 = scmp.eq.s32.totalorder %s22, 1
      %p148 = por %p146, %p147
      %p150 = scmp.ne.s32.totalorder %s133, %s149
      %p151 = scmp.eq.s32.totalorder %s22, 0
      %p152 = por %p150, %p151
      %s153 = ssub.s32 %s23, %s42
      %s154 = ssub.s32 %s24, %s38
      %s155 = sor.u32 %s153, %s154
      %p156 = scmp.eq.s32.totalorder %s155, 0
      %s158 = sadd.s32 %s157, 1
      %s159 = scalar_select %p156, %s157, %s158
      %p162 = pneg %p156
      %p163 = scmp.eq.s32.totalorder %s16, 1
      %p164 = por %p162, %p163
      %p165 = scmp.ne.s32.totalorder %s157, %s160
      %p166 = scmp.eq.s32.totalorder %s16, 0
      %p167 = por %p165, %p166
      %p168 = scmp.ne.s32.totalorder %s157, %s160
      %p169 = scmp.eq.s32.totalorder %s21, 1
      %p170 = por %p168, %p169
      %p171 = scmp.ne.s32.totalorder %s160, %s161
      %p172 = scmp.eq.s32.totalorder %s21, 0
      %p173 = por %p171, %p172
      %p174 = scmp.ne.s32.totalorder %s160, %s161
      %p175 = scmp.eq.s32.totalorder %s22, 1
      %p176 = por %p174, %p175
      %p178 = scmp.ne.s32.totalorder %s161, %s177
      %p179 = scmp.eq.s32.totalorder %s22, 0
      %p180 = por %p178, %p179
      %s181 = ssub.s32 %s23, %s42
      %s182 = ssub.s32 %s24, %s38
      %s183 = sor.u32 %s181, %s182
      %p184 = scmp.eq.s32.totalorder %s183, 0
      %s186 = sadd.s32 %s185, 1
      %s187 = scalar_select %p184, %s185, %s186
      %p190 = pneg %p184
      %p191 = scmp.eq.s32.totalorder %s16, 1
      %p192 = por %p190, %p191
      %p193 = scmp.ne.s32.totalorder %s185, %s188
      %p194 = scmp.eq.s32.totalorder %s16, 0
      %p195 = por %p193, %p194
      %p196 = scmp.ne.s32.totalorder %s185, %s188
      %p197 = scmp.eq.s32.totalorder %s21, 1
      %p198 = por %p196, %p197
      %p199 = scmp.ne.s32.totalorder %s188, %s189
      %p200 = scmp.eq.s32.totalorder %s21, 0
      %p201 = por %p199, %p200
      %p202 = scmp.ne.s32.totalorder %s188, %s189
      %p203 = scmp.eq.s32.totalorder %s22, 1
      %p204 = por %p202, %p203
      %p206 = scmp.ne.s32.totalorder %s189, %s205
      %p207 = scmp.eq.s32.totalorder %s22, 0
      %p208 = por %p206, %p207
      %s209 = ssub.s32 %s23, %s42
      %s210 = ssub.s32 %s24, %s38
      %s211 = sor.u32 %s209, %s210
      %p212 = scmp.eq.s32.totalorder %s211, 0
      %s214 = sadd.s32 %s213, 1
      %s215 = scalar_select %p212, %s213, %s214
      %p218 = pneg %p212
      %p219 = scmp.eq.s32.totalorder %s16, 1
      %p220 = por %p218, %p219
      %p221 = scmp.ne.s32.totalorder %s213, %s216
      %p222 = scmp.eq.s32.totalorder %s16, 0
      %p223 = por %p221, %p222
      %p224 = scmp.ne.s32.totalorder %s213, %s216
      %p225 = scmp.eq.s32.totalorder %s21, 1
      %p226 = por %p224, %p225
      %p227 = scmp.ne.s32.totalorder %s216, %s217
      %p228 = scmp.eq.s32.totalorder %s21, 0
      %p229 = por %p227, %p228
      %p230 = scmp.ne.s32.totalorder %s216, %s217
      %p231 = scmp.eq.s32.totalorder %s22, 1
      %p232 = por %p230, %p231
      %p234 = scmp.ne.s32.totalorder %s217, %s233
      %p235 = scmp.eq.s32.totalorder %s22, 0
      %p236 = por %p234, %p235
      %p237 = scmp.le.s32.totalorder 1, %s16
      %p238 = scmp.lt.s32.totalorder %s16, 3
      %p239 = pnand %p237, %p238
      %p240 = pneg %p239
      // Predicated region
      $region9: #{gnn_forward.10} parent=5 // pred_check
        _
      $region10: #{gnn_forward.10} parent=5 // pred_check_branch
        %242 = sbr.rel (%p239) target = $region12
      $region11: #{gnn_forward.10} parent=5 // pred_region
        %s243 = ssub.s32 %s16, 1
        // Predicated region
        $region13: #{gnn_forward.10} parent=11 // pred_check
          %p244 = pneg %p91
        $region14: #{gnn_forward.10} parent=11 // pred_check_branch
          %246 = sbr.rel (%p244) target = $region16
        $region15: #{gnn_forward.10} parent=11 // pred_region
          %s247 = smul.u32 32, %s28
          %p248 = scmp.lt.s32.totalorder %s247, 31
          %s249 = scalar_select %p248, %s247, 31
          %p250 = scmp.lt.s32.totalorder %s27, 0
          %s251 = scalar_select %p250, %s27, 0
          %s252 = sadd.s32 %s251, %s249
          %s253 = smul.addr %s252, 4
          %s254 = scalar_lea.vmem %s1, %s253
          %s255 = smul.u32 32, %s28
        $region16: #{gnn_forward.10} parent=11 // pred_fallthru
          _
        // Predicated region
        $region17: #{gnn_forward.10} parent=11 // pred_check
          %p256 = pneg %p117
        $region18: #{gnn_forward.10} parent=11 // pred_check_branch
          %258 = sbr.rel (%p256) target = $region20
        $region19: #{gnn_forward.10} parent=11 // pred_region
          %p259 = scmp.lt.s32.totalorder %s27, 0
          %s260 = scalar_select %p259, %s27, 0
          %s261 = scalar_lea.vmem %s2, %s260
        $region20: #{gnn_forward.10} parent=11 // pred_fallthru
          _
      $region12: #{gnn_forward.10} parent=5 // pred_fallthru
        _
      %p262 = scmp.lt.s32.totalorder %s16, 2
      // Predicated region
      $region21: #{gnn_forward.10} parent=5 // pred_check
        %p263 = pneg %p262
      $region22: #{gnn_forward.10} parent=5 // pred_check_branch
        %265 = sbr.rel (%p263) target = $region24
      $region23: #{gnn_forward.10} parent=5 // pred_region
        // Predicated region
        $region25: #{gnn_forward.10} parent=23 // pred_check
          %p266 = pneg %p57
        $region26: #{gnn_forward.10} parent=23 // pred_check_branch
          %268 = sbr.rel (%p266) target = $region28
        $region27: #{gnn_forward.10} parent=23 // pred_region
          %s269 = smul.u32 16, %s23
          %s270 = smul.u32 2, %s25
          %p271 = scmp.lt.s32.totalorder %s269, 31
          %s272 = scalar_select %p271, %s269, 31
          %p273 = scmp.lt.s32.totalorder %s270, 1
          %s274 = scalar_select %p273, %s270, 1
          %s275 = smul.addr %s272, 2
          %s276 = sadd.s32 %s274, %s275
          %s277 = smul.addr %s276, 4
          %s278 = scalar_lea.vmem %s0, %s277
          %s279 = smul.u32 16, %s23
          %s280 = smul.u32 2, %s25
        $region28: #{gnn_forward.10} parent=23 // pred_fallthru
          _
        // Predicated region
        $region29: #{gnn_forward.10} parent=23 // pred_check
          %p281 = pneg %p139
        $region30: #{gnn_forward.10} parent=23 // pred_check_branch
          %283 = sbr.rel (%p281) target = $region32
        $region31: #{gnn_forward.10} parent=23 // pred_region
          %s284 = smul.u32 16, %s23
          %p285 = scmp.lt.s32.totalorder %s284, 31
          %s286 = scalar_select %p285, %s284, 31
          %p287 = scmp.lt.s32.totalorder %s24, 0
          %s288 = scalar_select %p287, %s24, 0
          %s289 = sadd.s32 %s288, %s286
          %s290 = smul.addr %s289, 8
          %s291 = scalar_lea.vmem %s3, %s290
          %s292 = smul.u32 16, %s23
        $region32: #{gnn_forward.10} parent=23 // pred_fallthru
          _
        // Predicated region
        $region33: #{gnn_forward.10} parent=23 // pred_check
          %p293 = pneg %p167
        $region34: #{gnn_forward.10} parent=23 // pred_check_branch
          %295 = sbr.rel (%p293) target = $region36
        $region35: #{gnn_forward.10} parent=23 // pred_region
          %s296 = smul.u32 16, %s23
          %p297 = scmp.lt.s32.totalorder %s296, 31
          %s298 = scalar_select %p297, %s296, 31
          %p299 = scmp.lt.s32.totalorder %s24, 0
          %s300 = scalar_select %p299, %s24, 0
          %s301 = sadd.s32 %s300, %s298
          %s302 = smul.addr %s301, 8
          %s303 = scalar_lea.vmem %s4, %s302
          %s304 = smul.u32 16, %s23
        $region36: #{gnn_forward.10} parent=23 // pred_fallthru
          _
      $region24: #{gnn_forward.10} parent=5 // pred_fallthru
        _
      %p305 = scmp.le.s32.totalorder 1, %s16
      %p306 = scmp.lt.s32.totalorder %s16, 3
      %p307 = pnand %p305, %p306
      %p308 = pneg %p307
      // Predicated region
      $region37: #{gnn_forward.10} parent=5 // pred_check
        _
      $region38: #{gnn_forward.10} parent=5 // pred_check_branch
        %310 = sbr.rel (%p307) target = $region40
      $region39: #{gnn_forward.10} parent=5 // pred_region
        %s311 = ssub.s32 %s16, 1
        %s312 = smul.u32 16, %s26
        %s313 = smul.u32 2, %s28
        %p314 = scmp.lt.s32.totalorder %s312, 31
        %s315 = scalar_select %p314, %s312, 31
        %p316 = scmp.lt.s32.totalorder %s313, 1
        %s317 = scalar_select %p316, %s313, 1
        %s318 = smul.addr %s315, 2
        %s319 = sadd.s32 %s317, %s318
        %s320 = smul.addr %s319, 4
        %s321 = scalar_lea.vmem %s0, %s320
        %p322 = pneg %p63
        %p323 = pneg %p60
        %s324 = smul.u32 32, %s28
        %p325 = scmp.lt.s32.totalorder %s324, 31
        %s326 = scalar_select %p325, %s324, 31
        %p327 = scmp.lt.s32.totalorder %s27, 0
        %s328 = scalar_select %p327, %s27, 0
        %s329 = sadd.s32 %s328, %s326
        %s330 = smul.addr %s329, 4
        %s331 = scalar_lea.vmem %s1, %s330
        %p332 = pneg %p91
        %p333 = pneg %p88
        %p334 = scmp.lt.s32.totalorder %s27, 0
        %s335 = scalar_select %p334, %s27, 0
        %s336 = scalar_lea.vmem %s2, %s335
        %p337 = pneg %p117
        %p338 = pneg %p114
        %s339 = smul.u32 16, %s26
        %p340 = scmp.lt.s32.totalorder %s339, 31
        %s341 = scalar_select %p340, %s339, 31
        %p342 = scmp.lt.s32.totalorder %s27, 0
        %s343 = scalar_select %p342, %s27, 0
        %s344 = sadd.s32 %s343, %s341
        %s345 = smul.addr %s344, 8
        %s346 = scalar_lea.vmem %s3, %s345
        %p347 = pneg %p145
        %p348 = pneg %p142
        %s349 = smul.u32 16, %s26
        %p350 = scmp.lt.s32.totalorder %s349, 31
        %s351 = scalar_select %p350, %s349, 31
        %p352 = scmp.lt.s32.totalorder %s27, 0
        %s353 = scalar_select %p352, %s27, 0
        %s354 = sadd.s32 %s353, %s351
        %s355 = smul.addr %s354, 8
        %s356 = scalar_lea.vmem %s4, %s355
        %p357 = pneg %p173
        %p358 = pneg %p170
        %p359 = pneg %p201
        %p360 = pneg %p198
        %s361 = sand.u32 %s188, 1
        %s362 = scalar_lea.sflag [#allocation3], %s361
        %s363 = sand.u32 %s188, 1
        %s364 = smul.addr %s363, 128
        %s365 = scalar_lea.vmem [#allocation2], %s364
        %p366 = pneg %p229
        %p367 = pneg %p226
        %s368 = smul.u32 16, %s26
        %p369 = scmp.lt.s32.totalorder %s368, 31
        %s370 = scalar_select %p369, %s368, 31
        %p371 = scmp.lt.s32.totalorder %s27, 0
        %s372 = scalar_select %p371, %s27, 0
        %s373 = sadd.s32 %s372, %s370
        %s374 = smul.addr %s373, 8
        %s375 = scalar_lea.vmem %s6, %s374
        %s376 = smul.u32 16, %s26
        %s377 = smul.u32 2, %s28
        %p378 = scmp.lt.s32.totalorder %s376, 31
        %s379 = scalar_select %p378, %s376, 31
        %p380 = scmp.lt.s32.totalorder %s377, 1
        %s381 = scalar_select %p380, %s377, 1
        %s382 = smul.addr %s379, 2
        %s383 = sadd.s32 %s381, %s382
        %s384 = smul.addr %s383, 4
        %s385 = scalar_lea.vmem %s0, %s384
        %s386 = smul.u32 16, %s26
        %s387 = smul.u32 2, %s28
        %s388 = smul.u32 32, %s28
        %p389 = scmp.lt.s32.totalorder %s388, 31
        %s390 = scalar_select %p389, %s388, 31
        %p391 = scmp.lt.s32.totalorder %s27, 0
        %s392 = scalar_select %p391, %s27, 0
        %s393 = sadd.s32 %s392, %s390
        %s394 = smul.addr %s393, 4
        %s395 = scalar_lea.vmem %s1, %s394
        %s396 = smul.u32 32, %s28
        %p397 = scmp.lt.s32.totalorder %s27, 0
        %s398 = scalar_select %p397, %s27, 0
        %s399 = scalar_lea.vmem %s2, %s398
        %s400 = smul.u32 16, %s26
        %p401 = scmp.lt.s32.totalorder %s400, 31
        %s402 = scalar_select %p401, %s400, 31
        %p403 = scmp.lt.s32.totalorder %s27, 0
        %s404 = scalar_select %p403, %s27, 0
        %s405 = sadd.s32 %s404, %s402
        %s406 = smul.addr %s405, 8
        %s407 = scalar_lea.vmem %s3, %s406
        %s408 = smul.u32 16, %s26
        %s409 = smul.u32 16, %s26
        %p410 = scmp.lt.s32.totalorder %s409, 31
        %s411 = scalar_select %p410, %s409, 31
        %p412 = scmp.lt.s32.totalorder %s27, 0
        %s413 = scalar_select %p412, %s27, 0
        %s414 = sadd.s32 %s413, %s411
        %s415 = smul.addr %s414, 8
        %s416 = scalar_lea.vmem %s4, %s415
        %s417 = smul.u32 16, %s26
        %s418 = smul.u32 16, %s26
        %s419 = smul.u32 16, %s26
        %p420 = scmp.lt.s32.totalorder %s419, 31
        %s421 = scalar_select %p420, %s419, 31
        %p422 = scmp.lt.s32.totalorder %s27, 0
        %s423 = scalar_select %p422, %s27, 0
        %s424 = sadd.s32 %s423, %s421
        %s425 = smul.addr %s424, 8
        %s426 = scalar_lea.vmem %s6, %s425
        %s427 = smul.u32 16, %s26
        %v429 = vld [vmem:[%s385] sm:$0xff]
        %v430 = vld [vmem:[%s385 + $0x8] sm:$0xff]
        %v431 = vld [vmem:[%s385 + $0x10] sm:$0xff]
        %v432 = vld [vmem:[%s385 + $0x18] sm:$0xff]
        %v433 = vld [vmem:[%s385 + $0x20] sm:$0xff]
        %v434 = vld [vmem:[%s385 + $0x28] sm:$0xff]
        %v435 = vld [vmem:[%s385 + $0x30] sm:$0xff]
        %v436 = vld [vmem:[%s385 + $0x38] sm:$0xff]
        %v437 = vld [vmem:[%s385 + $0x40] sm:$0xff]
        %v438 = vld [vmem:[%s385 + $0x48] sm:$0xff]
        %v439 = vld [vmem:[%s385 + $0x50] sm:$0xff]
        %v440 = vld [vmem:[%s385 + $0x58] sm:$0xff]
        %v441 = vld [vmem:[%s385 + $0x60] sm:$0xff]
        %v442 = vld [vmem:[%s385 + $0x68] sm:$0xff]
        %v443 = vld [vmem:[%s385 + $0x70] sm:$0xff]
        %v444 = vld [vmem:[%s385 + $0x78] sm:$0xff]
        %v445 = vld [vmem:[%s395] sm:$0xf]
        %v446 = vld [vmem:[%s395 + $0x4] sm:$0xf]
        %v447 = vld [vmem:[%s395 + $0x8] sm:$0xf]
        %v448 = vld [vmem:[%s395 + $0xc] sm:$0xf]
        %v449 = vld [vmem:[%s395 + $0x10] sm:$0xf]
        %v450 = vld [vmem:[%s395 + $0x14] sm:$0xf]
        %v451 = vld [vmem:[%s395 + $0x18] sm:$0xf]
        %v452 = vld [vmem:[%s395 + $0x1c] sm:$0xf]
        %v453 = vld [vmem:[%s395 + $0x20] sm:$0xf]
        %v454 = vld [vmem:[%s395 + $0x24] sm:$0xf]
        %v455 = vld [vmem:[%s395 + $0x28] sm:$0xf]
        %v456 = vld [vmem:[%s395 + $0x2c] sm:$0xf]
        %v457 = vld [vmem:[%s395 + $0x30] sm:$0xf]
        %v458 = vld [vmem:[%s395 + $0x34] sm:$0xf]
        %v459 = vld [vmem:[%s395 + $0x38] sm:$0xf]
        %v460 = vld [vmem:[%s395 + $0x3c] sm:$0xf]
        %v461 = vld [vmem:[%s395 + $0x40] sm:$0xf]
        %v462 = vld [vmem:[%s395 + $0x44] sm:$0xf]
        %v463 = vld [vmem:[%s395 + $0x48] sm:$0xf]
        %v464 = vld [vmem:[%s395 + $0x4c] sm:$0xf]
        %v465 = vld [vmem:[%s395 + $0x50] sm:$0xf]
        %v466 = vld [vmem:[%s395 + $0x54] sm:$0xf]
        %v467 = vld [vmem:[%s395 + $0x58] sm:$0xf]
        %v468 = vld [vmem:[%s395 + $0x5c] sm:$0xf]
        %v469 = vld [vmem:[%s395 + $0x60] sm:$0xf]
        %v470 = vld [vmem:[%s395 + $0x64] sm:$0xf]
        %v471 = vld [vmem:[%s395 + $0x68] sm:$0xf]
        %v472 = vld [vmem:[%s395 + $0x6c] sm:$0xf]
        %v473 = vld [vmem:[%s395 + $0x70] sm:$0xf]
        %v474 = vld [vmem:[%s395 + $0x74] sm:$0xf]
        %v475 = vld [vmem:[%s395 + $0x78] sm:$0xf]
        %v476 = vld [vmem:[%s395 + $0x7c] sm:$0xf]
        %v477 = vld [vmem:[%s399] sm:$0x1]
        %v479 = vlaneseq
        %v480 = vshrl.u32 %v479, 7
        %v481 = vsub.s32 0, %v480
        %v482 = vrot.slane %v477, %v481
        %v500 = vunpack.c.l.b16 %v429
        %v501 = vunpack.c.h.b16 %v429
        %v502 = vunpack.c.l.b16 %v430
        %v503 = vunpack.c.h.b16 %v430
        %v504 = vunpack.c.l.b16 %v431
        %v505 = vunpack.c.h.b16 %v431
        %v506 = vunpack.c.l.b16 %v432
        %v507 = vunpack.c.h.b16 %v432
        %v508 = vunpack.c.l.b16 %v433
        %v509 = vunpack.c.h.b16 %v433
        %v510 = vunpack.c.l.b16 %v434
        %v511 = vunpack.c.h.b16 %v434
        %v512 = vunpack.c.l.b16 %v435
        %v513 = vunpack.c.h.b16 %v435
        %v514 = vunpack.c.l.b16 %v436
        %v515 = vunpack.c.h.b16 %v436
        %v516 = vunpack.c.l.b16 %v437
        %v517 = vunpack.c.h.b16 %v437
        %v518 = vunpack.c.l.b16 %v438
        %v519 = vunpack.c.h.b16 %v438
        %v520 = vunpack.c.l.b16 %v439
        %v521 = vunpack.c.h.b16 %v439
        %v522 = vunpack.c.l.b16 %v440
        %v523 = vunpack.c.h.b16 %v440
        %v524 = vunpack.c.l.b16 %v441
        %v525 = vunpack.c.h.b16 %v441
        %v526 = vunpack.c.l.b16 %v442
        %v527 = vunpack.c.h.b16 %v442
        %v528 = vunpack.c.l.b16 %v443
        %v529 = vunpack.c.h.b16 %v443
        %v530 = vunpack.c.l.b16 %v444
        %v531 = vunpack.c.h.b16 %v444
        %v532 = vpack.c.b16 %v502, %v500
        %v533 = vpack.c.b16 %v503, %v501
        %v534 = vpack.c.b16 %v506, %v504
        %v535 = vpack.c.b16 %v507, %v505
        %v536 = vpack.c.b16 %v510, %v508
        %v537 = vpack.c.b16 %v511, %v509
        %v538 = vpack.c.b16 %v514, %v512
        %v539 = vpack.c.b16 %v515, %v513
        %v540 = vpack.c.b16 %v518, %v516
        %v541 = vpack.c.b16 %v519, %v517
        %v542 = vpack.c.b16 %v522, %v520
        %v543 = vpack.c.b16 %v523, %v521
        %v544 = vpack.c.b16 %v526, %v524
        %v545 = vpack.c.b16 %v527, %v525
        %v546 = vpack.c.b16 %v530, %v528
        %v547 = vpack.c.b16 %v531, %v529
        %v596 = vunpack.c.l.b16 %v445
        %v597 = vunpack.c.l.b16 %v446
        %v598 = vunpack.c.l.b16 %v447
        %v599 = vunpack.c.l.b16 %v448
        %v600 = vunpack.c.l.b16 %v449
        %v601 = vunpack.c.l.b16 %v450
        %v602 = vunpack.c.l.b16 %v451
        %v603 = vunpack.c.l.b16 %v452
        %v604 = vunpack.c.l.b16 %v453
        %v605 = vunpack.c.l.b16 %v454
        %v606 = vunpack.c.l.b16 %v455
        %v607 = vunpack.c.l.b16 %v456
        %v608 = vunpack.c.l.b16 %v457
        %v609 = vunpack.c.l.b16 %v458
        %v610 = vunpack.c.l.b16 %v459
        %v611 = vunpack.c.l.b16 %v460
        %v612 = vunpack.c.l.b16 %v461
        %v613 = vunpack.c.l.b16 %v462
        %v614 = vunpack.c.l.b16 %v463
        %v615 = vunpack.c.l.b16 %v464
        %v616 = vunpack.c.l.b16 %v465
        %v617 = vunpack.c.l.b16 %v466
        %v618 = vunpack.c.l.b16 %v467
        %v619 = vunpack.c.l.b16 %v468
        %v620 = vunpack.c.l.b16 %v469
        %v621 = vunpack.c.l.b16 %v470
        %v622 = vunpack.c.l.b16 %v471
        %v623 = vunpack.c.l.b16 %v472
        %v624 = vunpack.c.l.b16 %v473
        %v625 = vunpack.c.l.b16 %v474
        %v626 = vunpack.c.l.b16 %v475
        %v627 = vunpack.c.l.b16 %v476
        %v628 = vpack.c.b16 %v597, %v596
        %v629 = vpack.c.b16 %v599, %v598
        %v630 = vpack.c.b16 %v601, %v600
        %v631 = vpack.c.b16 %v603, %v602
        %v632 = vpack.c.b16 %v605, %v604
        %v633 = vpack.c.b16 %v607, %v606
        %v634 = vpack.c.b16 %v609, %v608
        %v635 = vpack.c.b16 %v611, %v610
        %v636 = vpack.c.b16 %v613, %v612
        %v637 = vpack.c.b16 %v615, %v614
        %v638 = vpack.c.b16 %v617, %v616
        %v639 = vpack.c.b16 %v619, %v618
        %v640 = vpack.c.b16 %v621, %v620
        %v641 = vpack.c.b16 %v623, %v622
        %v642 = vpack.c.b16 %v625, %v624
        %v643 = vpack.c.b16 %v627, %v626
        %660 = vmatprep.subr.bf16.mxu0 0
        %661 = vmatpush1.bf16.msra.mxu0 %v635
        %662 = vmatprep.subr.bf16.mxu0 0
        %663 = vmatpush1.bf16.msra.mxu0 %v634
        %664 = vmatprep.subr.bf16.mxu0 0
        %665 = vmatpush1.bf16.msra.mxu0 %v633
        %666 = vmatprep.subr.bf16.mxu0 0
        %667 = vmatpush1.bf16.msra.mxu0 %v632
        %668 = vmatprep.subr.bf16.mxu0 0
        %669 = vmatpush1.bf16.msra.mxu0 %v631
        %670 = vmatprep.subr.bf16.mxu0 0
        %671 = vmatpush1.bf16.msra.mxu0 %v630
        %672 = vmatprep.subr.bf16.mxu0 0
        %673 = vmatpush1.bf16.msra.mxu0 %v629
        %674 = vmatprep.subr.bf16.mxu0 0
        %675 = vmatpush1.bf16.msra.mxu0 %v628
        %676 = vmatprep.subr.bf16.mxu0 0
        %677 = vmatpush2.bf16.msra.mxu0 %v643
        %678 = vmatprep.subr.bf16.mxu0 0
        %679 = vmatpush2.bf16.msra.mxu0 %v642
        %680 = vmatprep.subr.bf16.mxu0 0
        %681 = vmatpush2.bf16.msra.mxu0 %v641
        %682 = vmatprep.subr.bf16.mxu0 0
        %683 = vmatpush2.bf16.msra.mxu0 %v640
        %684 = vmatprep.subr.bf16.mxu0 0
        %685 = vmatpush2.bf16.msra.mxu0 %v639
        %686 = vmatprep.subr.bf16.mxu0 0
        %687 = vmatpush2.bf16.msra.mxu0 %v638
        %688 = vmatprep.subr.bf16.mxu0 0
        %689 = vmatpush2.bf16.msra.mxu0 %v637
        %690 = vmatprep.subr.bf16.mxu0 0
        %691 = vmatpush2.bf16.msra.mxu0 %v636
        %692 = vmatprep.mubr.bf16.mxu0 %v533
        %693 = vmatmul.mubr.bf16.gmra.mxu0 %v532
        %v694 = vpop.f32.mrf.mxu0
        %v695 = vadd.f32 %v482, %v694
        %v696 = vpop.f32.mrf.mxu0
        %v697 = vpop.f32.mrf.mxu0
        %v698 = vadd.f32 %v482, %v697
        %v699 = vpop.f32.mrf.mxu0
        %700 = vmatprep.mubr.bf16.mxu0 %v535
        %701 = vmatmul.mubr.bf16.gmra.mxu0 %v534
        %v702 = vpop.f32.mrf.mxu0
        %v703 = vadd.f32 %v482, %v702
        %v704 = vpop.f32.mrf.mxu0
        %v705 = vpop.f32.mrf.mxu0
        %v706 = vadd.f32 %v482, %v705
        %v707 = vpop.f32.mrf.mxu0
        %708 = vmatprep.mubr.bf16.mxu0 %v537
        %709 = vmatmul.mubr.bf16.gmra.mxu0 %v536
        %v710 = vpop.f32.mrf.mxu0
        %v711 = vadd.f32 %v482, %v710
        %v712 = vpop.f32.mrf.mxu0
        %v713 = vpop.f32.mrf.mxu0
        %v714 = vadd.f32 %v482, %v713
        %v715 = vpop.f32.mrf.mxu0
        %716 = vmatprep.mubr.bf16.mxu0 %v539
        %717 = vmatmul.mubr.bf16.gmra.mxu0 %v538
        %v718 = vpop.f32.mrf.mxu0
        %v719 = vadd.f32 %v482, %v718
        %v720 = vpop.f32.mrf.mxu0
        %v721 = vpop.f32.mrf.mxu0
        %v722 = vadd.f32 %v482, %v721
        %v723 = vpop.f32.mrf.mxu0
        %724 = vmatprep.mubr.bf16.mxu0 %v541
        %725 = vmatmul.mubr.bf16.gmra.mxu0 %v540
        %v726 = vpop.f32.mrf.mxu0
        %v727 = vadd.f32 %v482, %v726
        %v728 = vpop.f32.mrf.mxu0
        %v729 = vpop.f32.mrf.mxu0
        %v730 = vadd.f32 %v482, %v729
        %v731 = vpop.f32.mrf.mxu0
        %732 = vmatprep.mubr.bf16.mxu0 %v543
        %733 = vmatmul.mubr.bf16.gmra.mxu0 %v542
        %v734 = vpop.f32.mrf.mxu0
        %v735 = vadd.f32 %v482, %v734
        %v736 = vpop.f32.mrf.mxu0
        %v737 = vpop.f32.mrf.mxu0
        %v738 = vadd.f32 %v482, %v737
        %v739 = vpop.f32.mrf.mxu0
        %740 = vmatprep.mubr.bf16.mxu0 %v545
        %741 = vmatmul.mubr.bf16.gmra.mxu0 %v544
        %v742 = vpop.f32.mrf.mxu0
        %v743 = vadd.f32 %v482, %v742
        %v744 = vpop.f32.mrf.mxu0
        %v745 = vpop.f32.mrf.mxu0
        %v746 = vadd.f32 %v482, %v745
        %v747 = vpop.f32.mrf.mxu0
        %748 = vmatprep.mubr.bf16.mxu0 %v547
        %749 = vmatmul.mubr.bf16.gmra.mxu0 %v546
        %v750 = vpop.f32.mrf.mxu0
        %v751 = vadd.f32 %v482, %v750
        %v752 = vpop.f32.mrf.mxu0
        %v753 = vpop.f32.mrf.mxu0
        %v754 = vadd.f32 %v482, %v753
        %v755 = vpop.f32.mrf.mxu0
        %756 = vdwg.mxu0
        %v757 = vld [vmem:[%s407] sm:$0xff]
        %v758 = vld [vmem:[%s407 + $0x8] sm:$0xff]
        %v759 = vld [vmem:[%s407 + $0x10] sm:$0xff]
        %v760 = vld [vmem:[%s407 + $0x18] sm:$0xff]
        %v761 = vld [vmem:[%s407 + $0x20] sm:$0xff]
        %v762 = vld [vmem:[%s407 + $0x28] sm:$0xff]
        %v763 = vld [vmem:[%s407 + $0x30] sm:$0xff]
        %v764 = vld [vmem:[%s407 + $0x38] sm:$0xff]
        %v765 = vld [vmem:[%s407 + $0x40] sm:$0xff]
        %v766 = vld [vmem:[%s407 + $0x48] sm:$0xff]
        %v767 = vld [vmem:[%s407 + $0x50] sm:$0xff]
        %v768 = vld [vmem:[%s407 + $0x58] sm:$0xff]
        %v769 = vld [vmem:[%s407 + $0x60] sm:$0xff]
        %v770 = vld [vmem:[%s407 + $0x68] sm:$0xff]
        %v771 = vld [vmem:[%s407 + $0x70] sm:$0xff]
        %v772 = vld [vmem:[%s407 + $0x78] sm:$0xff]
        %v773 = vadd.f32 %v695, %v757
        %v774 = vadd.f32 %v698, %v758
        %v775 = vadd.f32 %v703, %v759
        %v776 = vadd.f32 %v706, %v760
        %v777 = vadd.f32 %v711, %v761
        %v778 = vadd.f32 %v714, %v762
        %v779 = vadd.f32 %v719, %v763
        %v780 = vadd.f32 %v722, %v764
        %v781 = vadd.f32 %v727, %v765
        %v782 = vadd.f32 %v730, %v766
        %v783 = vadd.f32 %v735, %v767
        %v784 = vadd.f32 %v738, %v768
        %v785 = vadd.f32 %v743, %v769
        %v786 = vadd.f32 %v746, %v770
        %v787 = vadd.f32 %v751, %v771
        %v788 = vadd.f32 %v754, %v772
        %789 = vst [vmem:[%s365] sm:$0xff] %v773
        %790 = vst [vmem:[%s365 + $0x8] sm:$0xff] %v774
        %791 = vst [vmem:[%s365 + $0x10] sm:$0xff] %v775
        %792 = vst [vmem:[%s365 + $0x18] sm:$0xff] %v776
        %793 = vst [vmem:[%s365 + $0x20] sm:$0xff] %v777
        %794 = vst [vmem:[%s365 + $0x28] sm:$0xff] %v778
        %795 = vst [vmem:[%s365 + $0x30] sm:$0xff] %v779
        %796 = vst [vmem:[%s365 + $0x38] sm:$0xff] %v780
        %797 = vst [vmem:[%s365 + $0x40] sm:$0xff] %v781
        %798 = vst [vmem:[%s365 + $0x48] sm:$0xff] %v782
        %799 = vst [vmem:[%s365 + $0x50] sm:$0xff] %v783
        %800 = vst [vmem:[%s365 + $0x58] sm:$0xff] %v784
        %801 = vst [vmem:[%s365 + $0x60] sm:$0xff] %v785
        %802 = vst [vmem:[%s365 + $0x68] sm:$0xff] %v786
        %803 = vst [vmem:[%s365 + $0x70] sm:$0xff] %v787
        %804 = vst [vmem:[%s365 + $0x78] sm:$0xff] %v788
        %v805 = vld [vmem:[%s416] sm:$0xff]
        %v806 = vld [vmem:[%s416 + $0x8] sm:$0xff]
        %v807 = vld [vmem:[%s416 + $0x10] sm:$0xff]
        %v808 = vld [vmem:[%s416 + $0x18] sm:$0xff]
        %v809 = vld [vmem:[%s416 + $0x20] sm:$0xff]
        %v810 = vld [vmem:[%s416 + $0x28] sm:$0xff]
        %v811 = vld [vmem:[%s416 + $0x30] sm:$0xff]
        %v812 = vld [vmem:[%s416 + $0x38] sm:$0xff]
        %v813 = vld [vmem:[%s416 + $0x40] sm:$0xff]
        %v814 = vld [vmem:[%s416 + $0x48] sm:$0xff]
        %v815 = vld [vmem:[%s416 + $0x50] sm:$0xff]
        %v816 = vld [vmem:[%s416 + $0x58] sm:$0xff]
        %v817 = vld [vmem:[%s416 + $0x60] sm:$0xff]
        %v818 = vld [vmem:[%s416 + $0x68] sm:$0xff]
        %v819 = vld [vmem:[%s416 + $0x70] sm:$0xff]
        %v820 = vld [vmem:[%s416 + $0x78] sm:$0xff]
        %v821 = vadd.f32 %v805, %v773
        %v822 = vadd.f32 %v806, %v774
        %v823 = vadd.f32 %v807, %v775
        %v824 = vadd.f32 %v808, %v776
        %v825 = vadd.f32 %v809, %v777
        %v826 = vadd.f32 %v810, %v778
        %v827 = vadd.f32 %v811, %v779
        %v828 = vadd.f32 %v812, %v780
        %v829 = vadd.f32 %v813, %v781
        %v830 = vadd.f32 %v814, %v782
        %v831 = vadd.f32 %v815, %v783
        %v832 = vadd.f32 %v816, %v784
        %v833 = vadd.f32 %v817, %v785
        %v834 = vadd.f32 %v818, %v786
        %v835 = vadd.f32 %v819, %v787
        %v836 = vadd.f32 %v820, %v788
        %837 = vst [vmem:[%s426] sm:$0xff] %v821
        %838 = vst [vmem:[%s426 + $0x8] sm:$0xff] %v822
        %839 = vst [vmem:[%s426 + $0x10] sm:$0xff] %v823
        %840 = vst [vmem:[%s426 + $0x18] sm:$0xff] %v824
        %841 = vst [vmem:[%s426 + $0x20] sm:$0xff] %v825
        %842 = vst [vmem:[%s426 + $0x28] sm:$0xff] %v826
        %843 = vst [vmem:[%s426 + $0x30] sm:$0xff] %v827
        %844 = vst [vmem:[%s426 + $0x38] sm:$0xff] %v828
        %845 = vst [vmem:[%s426 + $0x40] sm:$0xff] %v829
        %846 = vst [vmem:[%s426 + $0x48] sm:$0xff] %v830
        %847 = vst [vmem:[%s426 + $0x50] sm:$0xff] %v831
        %848 = vst [vmem:[%s426 + $0x58] sm:$0xff] %v832
        %849 = vst [vmem:[%s426 + $0x60] sm:$0xff] %v833
        %850 = vst [vmem:[%s426 + $0x68] sm:$0xff] %v834
        %851 = vst [vmem:[%s426 + $0x70] sm:$0xff] %v835
        %852 = vst [vmem:[%s426 + $0x78] sm:$0xff] %v836
        %s853 = sand.u32 %s188, 1
        %s854 = scalar_lea.sflag [#allocation3], %s853
        %s855 = sand.u32 %s188, 1
        %s856 = smul.addr %s855, 128
        %s857 = scalar_lea.vmem [#allocation2], %s856
        %s858 = smul.u32 16, %s26
        %p859 = scmp.lt.s32.totalorder %s858, 31
        %s860 = scalar_select %p859, %s858, 31
        %p861 = scmp.lt.s32.totalorder %s27, 0
        %s862 = scalar_select %p861, %s27, 0
        %s863 = sadd.s32 %s862, %s860
        %s864 = smul.addr %s863, 8
        %s865 = scalar_lea.vmem %s6, %s864
        // Predicated region
        $region41: #{gnn_forward.10} parent=39 // pred_check
          %p866 = pneg %p198
        $region42: #{gnn_forward.10} parent=39 // pred_check_branch
          %868 = sbr.rel (%p866) target = $region44
        $region43: #{gnn_forward.10} parent=39 // pred_region
          %s869 = smul.u32 16, %s26
          %s871 = ssub.s32 2048, 2048
          %872 = vsyncadd %s854, %s871
          %s873 = sadd.s32 %s27, %s869
          %s874 = smul.addr %s873, 128
          %s875 = scalar_lea.hbm %s5, %s874
          %s876 = sshll.u32 %s857, 4
          %s877 = int_to_ptr.vmem [resolvable:$true] %s876
          %882 = dma.vmem_to_hbm [thread:$0]  %s877, 2048, %s875, %s854, 128, 128, 8
        $region44: #{gnn_forward.10} parent=39 // pred_fallthru
          _
        // Predicated region
        $region45: #{gnn_forward.10} parent=39 // pred_check
          %p883 = pneg %p226
        $region46: #{gnn_forward.10} parent=39 // pred_check_branch
          %885 = sbr.rel (%p883) target = $region48
        $region47: #{gnn_forward.10} parent=39 // pred_region
          %s886 = smul.u32 16, %s26
        $region48: #{gnn_forward.10} parent=39 // pred_fallthru
          _
      $region40: #{gnn_forward.10} parent=5 // pred_fallthru
        _
      %p887 = scmp.le.s32.totalorder 2, %s16
      // Predicated region
      $region49: #{gnn_forward.10} parent=5 // pred_check
        %p888 = pneg %p887
      $region50: #{gnn_forward.10} parent=5 // pred_check_branch
        %890 = sbr.rel (%p888) target = $region52
      $region51: #{gnn_forward.10} parent=5 // pred_region
        %s891 = ssub.s32 %s16, 2
        // Predicated region
        $region53: #{gnn_forward.10} parent=51 // pred_check
          %p892 = pneg %p204
        $region54: #{gnn_forward.10} parent=51 // pred_check_branch
          %894 = sbr.rel (%p892) target = $region56
        $region55: #{gnn_forward.10} parent=51 // pred_region
          %s895 = sand.u32 %s189, 1
          %s896 = scalar_lea.sflag [#allocation3], %s895
          %s897 = sand.u32 %s189, 1
          %s898 = smul.addr %s897, 128
          %s899 = scalar_lea.vmem [#allocation2], %s898
          %900 = dma.done %s896, 2048
        $region56: #{gnn_forward.10} parent=51 // pred_fallthru
          _
        // Predicated region
        $region57: #{gnn_forward.10} parent=51 // pred_check
          %p901 = pneg %p232
        $region58: #{gnn_forward.10} parent=51 // pred_check_branch
          %903 = sbr.rel (%p901) target = $region60
        $region59: #{gnn_forward.10} parent=51 // pred_region
          %s904 = smul.u32 16, %s29
          %p905 = scmp.lt.s32.totalorder %s904, 31
          %s906 = scalar_select %p905, %s904, 31
          %p907 = scmp.lt.s32.totalorder %s30, 0
          %s908 = scalar_select %p907, %s30, 0
          %s909 = sadd.s32 %s908, %s906
          %s910 = smul.addr %s909, 8
          %s911 = scalar_lea.vmem %s6, %s910
        $region60: #{gnn_forward.10} parent=51 // pred_fallthru
          _
      $region52: #{gnn_forward.10} parent=5 // pred_fallthru
        _
    $region6: #{gnn_forward.10} parent=1 // loop_footer
      %s20 = sadd.s32 1, %s16
    $region7: #{gnn_forward.10} parent=1 // loop_footer_branch
      %15 = sbr.rel target = $region3
    $region8: #{gnn_forward.10} parent=1 // loop_exit
      _
    %912 = vsyncpa [#allocation3], 1
    %s913 = scalar_lea.sflag [#allocation3], 1
    %914 = vsyncpa %s913, 1

// kernel: gnn_forward.11
$region0: #{gnn_forward.11}
  #allocation0 [shape = 'u32[]', space=smem, size = 0x4, offset = 0x4, fixed_abs, tag = 'smem constant byte address 0x4 - core index']
  #allocation1 [shape = 'u32[144,128]{1,0:T(1,128)}', space=vmem, size = 0x12000, scoped, tag = 'internal scratch']
  %s0 = inlined_call_operand.vmem [shape: f32[256,128], index: 0, kind: input, shape index: {}]
  %s1 = inlined_call_operand.vmem [shape: bf16[128,128], index: 1, kind: input, shape index: {}]
  %s2 = inlined_call_operand.vmem [shape: f32[1,128], index: 2, kind: input, shape index: {}]
  %s3 = inlined_call_operand.vmem [shape: f32[256,128], index: 3, kind: output, shape index: {}]
  %s4 = sld [smem:[#allocation0]]
  $region45: #{gnn_forward.11} parent=0
    _
  %s6 = ssub.s32 1, %s4
  %s7 = scalar_select 0, %s6, %s4
  loop: start=0, step=1, limit=4
  $region2: #{gnn_forward.11} parent=0 // loop_pre_header
    _
  $region3: #{gnn_forward.11} parent=0 // loop_header
    %s9 = sphi 0, %s13
    %p10 = scmp.ge.s32.totalorder %s9, 4
    %s16 = sphi 0, %s35
    %s17 = sphi 0, %s31
    %s18 = sphi 0, %s27
    %s19 = sphi 0, %s16
    %s20 = sphi 0, %s17
    %s21 = sphi 0, %s18
    %s22 = sphi 0, %s19
    %s23 = sphi 0, %s20
    %s24 = sphi 0, %s21
    %s40 = sphi 0, %s42
    %s43 = sphi 0, %s40
    %s44 = sphi 0, %s43
    %s60 = sphi 0, %s44
    %s68 = sphi 0, %s70
    %s71 = sphi 0, %s68
    %s72 = sphi 0, %s71
    %s88 = sphi 0, %s72
    %s94 = sphi 0, %s96
    %s97 = sphi 0, %s94
    %s98 = sphi 0, %s97
    %s114 = sphi 0, %s98
    %s122 = sphi 0, %s124
    %s125 = sphi 0, %s122
    %s126 = sphi 0, %s125
    %s142 = sphi 0, %s126
  $region4: #{gnn_forward.11} parent=0 // loop_header_branch
    %12 = sbr.rel (%p10) target = $region8
  $region5: #{gnn_forward.11} parent=0 // loop_body
    %s14 = ssub.s32 %s9, 1
    %s15 = ssub.s32 %s9, 2
    %s25 = sadd.s32 1, %s18
    %p26 = scmp.ge.s32.totalorder %s25, 1
    %s27 = scalar_select %p26, 0, %s25
    %s28 = sadd.s32 1, %s17
    %s29 = scalar_select %p26, %s28, %s17
    %p30 = scmp.ge.s32.totalorder %s29, 1
    %s31 = scalar_select %p30, 0, %s29
    %s32 = sadd.s32 1, %s16
    %s33 = scalar_select %p30, %s32, %s16
    %p34 = scmp.ge.s32.totalorder %s33, 2
    %s35 = scalar_select %p34, 0, %s33
    %s36 = ssub.s32 %s16, %s35
    %s37 = ssub.s32 %s18, %s27
    %s38 = sor.u32 %s36, %s37
    %p39 = scmp.eq.s32.totalorder %s38, 0
    %s41 = sadd.s32 %s40, 1
    %s42 = scalar_select %p39, %s40, %s41
    %p45 = pneg %p39
    %p46 = scmp.eq.s32.totalorder %s9, 1
    %p47 = por %p45, %p46
    %p48 = scmp.ne.s32.totalorder %s40, %s43
    %p49 = scmp.eq.s32.totalorder %s9, 0
    %p50 = por %p48, %p49
    %p51 = scmp.ne.s32.totalorder %s40, %s43
    %p52 = scmp.eq.s32.totalorder %s14, 1
    %p53 = por %p51, %p52
    %p54 = scmp.ne.s32.totalorder %s43, %s44
    %p55 = scmp.eq.s32.totalorder %s14, 0
    %p56 = por %p54, %p55
    %p57 = scmp.ne.s32.totalorder %s43, %s44
    %p58 = scmp.eq.s32.totalorder %s15, 1
    %p59 = por %p57, %p58
    %p61 = scmp.ne.s32.totalorder %s44, %s60
    %p62 = scmp.eq.s32.totalorder %s15, 0
    %p63 = por %p61, %p62
    %s64 = ssub.s32 %s18, %s27
    %s65 = ssub.s32 %s17, %s31
    %s66 = sor.u32 %s64, %s65
    %p67 = scmp.eq.s32.totalorder %s66, 0
    %s69 = sadd.s32 %s68, 1
    %s70 = scalar_select %p67, %s68, %s69
    %p73 = pneg %p67
    %p74 = scmp.eq.s32.totalorder %s9, 1
    %p75 = por %p73, %p74
    %p76 = scmp.ne.s32.totalorder %s68, %s71
    %p77 = scmp.eq.s32.totalorder %s9, 0
    %p78 = por %p76, %p77
    %p79 = scmp.ne.s32.totalorder %s68, %s71
    %p80 = scmp.eq.s32.totalorder %s14, 1
    %p81 = por %p79, %p80
    %p82 = scmp.ne.s32.totalorder %s71, %s72
    %p83 = scmp.eq.s32.totalorder %s14, 0
    %p84 = por %p82, %p83
    %p85 = scmp.ne.s32.totalorder %s71, %s72
    %p86 = scmp.eq.s32.totalorder %s15, 1
    %p87 = por %p85, %p86
    %p89 = scmp.ne.s32.totalorder %s72, %s88
    %p90 = scmp.eq.s32.totalorder %s15, 0
    %p91 = por %p89, %p90
    %s92 = ssub.s32 %s17, %s31
    %p93 = scmp.eq.s32.totalorder %s92, 0
    %s95 = sadd.s32 %s94, 1
    %s96 = scalar_select %p93, %s94, %s95
    %p99 = pneg %p93
    %p100 = scmp.eq.s32.totalorder %s9, 1
    %p101 = por %p99, %p100
    %p102 = scmp.ne.s32.totalorder %s94, %s97
    %p103 = scmp.eq.s32.totalorder %s9, 0
    %p104 = por %p102, %p103
    %p105 = scmp.ne.s32.totalorder %s94, %s97
    %p106 = scmp.eq.s32.totalorder %s14, 1
    %p107 = por %p105, %p106
    %p108 = scmp.ne.s32.totalorder %s97, %s98
    %p109 = scmp.eq.s32.totalorder %s14, 0
    %p110 = por %p108, %p109
    %p111 = scmp.ne.s32.totalorder %s97, %s98
    %p112 = scmp.eq.s32.totalorder %s15, 1
    %p113 = por %p111, %p112
    %p115 = scmp.ne.s32.totalorder %s98, %s114
    %p116 = scmp.eq.s32.totalorder %s15, 0
    %p117 = por %p115, %p116
    %s118 = ssub.s32 %s16, %s35
    %s119 = ssub.s32 %s17, %s31
    %s120 = sor.u32 %s118, %s119
    %p121 = scmp.eq.s32.totalorder %s120, 0
    %s123 = sadd.s32 %s122, 1
    %s124 = scalar_select %p121, %s122, %s123
    %p127 = pneg %p121
    %p128 = scmp.eq.s32.totalorder %s9, 1
    %p129 = por %p127, %p128
    %p130 = scmp.ne.s32.totalorder %s122, %s125
    %p131 = scmp.eq.s32.totalorder %s9, 0
    %p132 = por %p130, %p131
    %p133 = scmp.ne.s32.totalorder %s122, %s125
    %p134 = scmp.eq.s32.totalorder %s14, 1
    %p135 = por %p133, %p134
    %p136 = scmp.ne.s32.totalorder %s125, %s126
    %p137 = scmp.eq.s32.totalorder %s14, 0
    %p138 = por %p136, %p137
    %p139 = scmp.ne.s32.totalorder %s125, %s126
    %p140 = scmp.eq.s32.totalorder %s15, 1
    %p141 = por %p139, %p140
    %p143 = scmp.ne.s32.totalorder %s126, %s142
    %p144 = scmp.eq.s32.totalorder %s15, 0
    %p145 = por %p143, %p144
    %p146 = scmp.le.s32.totalorder 1, %s9
    %p147 = scmp.lt.s32.totalorder %s9, 3
    %p148 = pnand %p146, %p147
    %p149 = pneg %p148
    // Predicated region
    $region9: #{gnn_forward.11} parent=5 // pred_check
      _
    $region10: #{gnn_forward.11} parent=5 // pred_check_branch
      %151 = sbr.rel (%p148) target = $region12
    $region11: #{gnn_forward.11} parent=5 // pred_region
      %s152 = ssub.s32 %s9, 1
      // Predicated region
      $region13: #{gnn_forward.11} parent=11 // pred_check
        %p153 = pneg %p84
      $region14: #{gnn_forward.11} parent=11 // pred_check_branch
        %155 = sbr.rel (%p153) target = $region16
      $region15: #{gnn_forward.11} parent=11 // pred_region
        %s156 = smul.u32 16, %s21
        %p157 = scmp.lt.s32.totalorder %s156, 15
        %s158 = scalar_select %p157, %s156, 15
        %p159 = scmp.lt.s32.totalorder %s20, 0
        %s160 = scalar_select %p159, %s20, 0
        %s161 = sadd.s32 %s160, %s158
        %s162 = smul.addr %s161, 4
        %s163 = scalar_lea.vmem %s1, %s162
        %s164 = smul.u32 16, %s21
      $region16: #{gnn_forward.11} parent=11 // pred_fallthru
        _
      // Predicated region
      $region17: #{gnn_forward.11} parent=11 // pred_check
        %p165 = pneg %p110
      $region18: #{gnn_forward.11} parent=11 // pred_check_branch
        %167 = sbr.rel (%p165) target = $region20
      $region19: #{gnn_forward.11} parent=11 // pred_region
        %p168 = scmp.lt.s32.totalorder %s20, 0
        %s169 = scalar_select %p168, %s20, 0
        %s170 = scalar_lea.vmem %s2, %s169
      $region20: #{gnn_forward.11} parent=11 // pred_fallthru
        _
    $region12: #{gnn_forward.11} parent=5 // pred_fallthru
      _
    %p171 = scmp.lt.s32.totalorder %s9, 2
    // Predicated region
    $region21: #{gnn_forward.11} parent=5 // pred_check
      %p172 = pneg %p171
    $region22: #{gnn_forward.11} parent=5 // pred_check_branch
      %174 = sbr.rel (%p172) target = $region24
    $region23: #{gnn_forward.11} parent=5 // pred_region
      // Predicated region
      $region25: #{gnn_forward.11} parent=23 // pred_check
        %p175 = pneg %p50
      $region26: #{gnn_forward.11} parent=23 // pred_check_branch
        %177 = sbr.rel (%p175) target = $region28
      $region27: #{gnn_forward.11} parent=23 // pred_region
        %s178 = smul.u32 16, %s16
        %p179 = scmp.lt.s32.totalorder %s178, 31
        %s180 = scalar_select %p179, %s178, 31
        %p181 = scmp.lt.s32.totalorder %s18, 0
        %s182 = scalar_select %p181, %s18, 0
        %s183 = sadd.s32 %s182, %s180
        %s184 = smul.addr %s183, 8
        %s185 = scalar_lea.vmem %s0, %s184
        %s186 = smul.u32 16, %s16
      $region28: #{gnn_forward.11} parent=23 // pred_fallthru
        _
    $region24: #{gnn_forward.11} parent=5 // pred_fallthru
      _
    %p187 = scmp.le.s32.totalorder 1, %s9
    %p188 = scmp.lt.s32.totalorder %s9, 3
    %p189 = pnand %p187, %p188
    %p190 = pneg %p189
    // Predicated region
    $region29: #{gnn_forward.11} parent=5 // pred_check
      _
    $region30: #{gnn_forward.11} parent=5 // pred_check_branch
      %192 = sbr.rel (%p189) target = $region32
    $region31: #{gnn_forward.11} parent=5 // pred_region
      %s193 = ssub.s32 %s9, 1
      %s194 = smul.u32 16, %s19
      %p195 = scmp.lt.s32.totalorder %s194, 31
      %s196 = scalar_select %p195, %s194, 31
      %p197 = scmp.lt.s32.totalorder %s21, 0
      %s198 = scalar_select %p197, %s21, 0
      %s199 = sadd.s32 %s198, %s196
      %s200 = smul.addr %s199, 8
      %s201 = scalar_lea.vmem %s0, %s200
      %p202 = pneg %p56
      %p203 = pneg %p53
      %s204 = smul.u32 16, %s21
      %p205 = scmp.lt.s32.totalorder %s204, 15
      %s206 = scalar_select %p205, %s204, 15
      %p207 = scmp.lt.s32.totalorder %s20, 0
      %s208 = scalar_select %p207, %s20, 0
      %s209 = sadd.s32 %s208, %s206
      %s210 = smul.addr %s209, 4
      %s211 = scalar_lea.vmem %s1, %s210
      %p212 = pneg %p84
      %p213 = pneg %p81
      %p214 = scmp.lt.s32.totalorder %s20, 0
      %s215 = scalar_select %p214, %s20, 0
      %s216 = scalar_lea.vmem %s2, %s215
      %p217 = pneg %p110
      %p218 = pneg %p107
      %p219 = pneg %p138
      %p220 = pneg %p135
      %s221 = smul.u32 16, %s19
      %p222 = scmp.lt.s32.totalorder %s221, 31
      %s223 = scalar_select %p222, %s221, 31
      %p224 = scmp.lt.s32.totalorder %s20, 0
      %s225 = scalar_select %p224, %s20, 0
      %s226 = sadd.s32 %s225, %s223
      %s227 = smul.addr %s226, 8
      %s228 = scalar_lea.vmem %s3, %s227
      %s229 = smul.u32 16, %s19
      %p230 = scmp.lt.s32.totalorder %s229, 31
      %s231 = scalar_select %p230, %s229, 31
      %p232 = scmp.lt.s32.totalorder %s21, 0
      %s233 = scalar_select %p232, %s21, 0
      %s234 = sadd.s32 %s233, %s231
      %s235 = smul.addr %s234, 8
      %s236 = scalar_lea.vmem %s0, %s235
      %s237 = smul.u32 16, %s19
      %s238 = smul.u32 16, %s21
      %p239 = scmp.lt.s32.totalorder %s238, 15
      %s240 = scalar_select %p239, %s238, 15
      %p241 = scmp.lt.s32.totalorder %s20, 0
      %s242 = scalar_select %p241, %s20, 0
      %s243 = sadd.s32 %s242, %s240
      %s244 = smul.addr %s243, 4
      %s245 = scalar_lea.vmem %s1, %s244
      %s246 = smul.u32 16, %s21
      %p247 = scmp.lt.s32.totalorder %s20, 0
      %s248 = scalar_select %p247, %s20, 0
      %s249 = scalar_lea.vmem %s2, %s248
      %s250 = smul.u32 16, %s19
      %p251 = scmp.lt.s32.totalorder %s250, 31
      %s252 = scalar_select %p251, %s250, 31
      %p253 = scmp.lt.s32.totalorder %s20, 0
      %s254 = scalar_select %p253, %s20, 0
      %s255 = sadd.s32 %s254, %s252
      %s256 = smul.addr %s255, 8
      %s257 = scalar_lea.vmem %s3, %s256
      %s258 = smul.u32 16, %s19
      %v260 = vld [vmem:[%s236] sm:$0xff]
      %v261 = vld [vmem:[%s236 + $0x8] sm:$0xff]
      %v262 = vld [vmem:[%s236 + $0x10] sm:$0xff]
      %v263 = vld [vmem:[%s236 + $0x18] sm:$0xff]
      %v264 = vld [vmem:[%s236 + $0x20] sm:$0xff]
      %v265 = vld [vmem:[%s236 + $0x28] sm:$0xff]
      %v266 = vld [vmem:[%s236 + $0x30] sm:$0xff]
      %v267 = vld [vmem:[%s236 + $0x38] sm:$0xff]
      %v268 = vld [vmem:[%s236 + $0x40] sm:$0xff]
      %v269 = vld [vmem:[%s236 + $0x48] sm:$0xff]
      %v270 = vld [vmem:[%s236 + $0x50] sm:$0xff]
      %v271 = vld [vmem:[%s236 + $0x58] sm:$0xff]
      %v272 = vld [vmem:[%s236 + $0x60] sm:$0xff]
      %v273 = vld [vmem:[%s236 + $0x68] sm:$0xff]
      %v274 = vld [vmem:[%s236 + $0x70] sm:$0xff]
      %v275 = vld [vmem:[%s236 + $0x78] sm:$0xff]
      %v276 = vpack.c.bf16 %v261, %v260
      %v277 = vpack.c.bf16 %v263, %v262
      %v278 = vpack.c.bf16 %v265, %v264
      %v279 = vpack.c.bf16 %v267, %v266
      %v280 = vpack.c.bf16 %v269, %v268
      %v281 = vpack.c.bf16 %v271, %v270
      %v282 = vpack.c.bf16 %v273, %v272
      %v283 = vpack.c.bf16 %v275, %v274
      %v284 = vld [vmem:[%s245] sm:$0xf]
      %v285 = vld [vmem:[%s245 + $0x4] sm:$0xf]
      %v286 = vld [vmem:[%s245 + $0x8] sm:$0xf]
      %v287 = vld [vmem:[%s245 + $0xc] sm:$0xf]
      %v288 = vld [vmem:[%s245 + $0x10] sm:$0xf]
      %v289 = vld [vmem:[%s245 + $0x14] sm:$0xf]
      %v290 = vld [vmem:[%s245 + $0x18] sm:$0xf]
      %v291 = vld [vmem:[%s245 + $0x1c] sm:$0xf]
      %v292 = vld [vmem:[%s245 + $0x20] sm:$0xf]
      %v293 = vld [vmem:[%s245 + $0x24] sm:$0xf]
      %v294 = vld [vmem:[%s245 + $0x28] sm:$0xf]
      %v295 = vld [vmem:[%s245 + $0x2c] sm:$0xf]
      %v296 = vld [vmem:[%s245 + $0x30] sm:$0xf]
      %v297 = vld [vmem:[%s245 + $0x34] sm:$0xf]
      %v298 = vld [vmem:[%s245 + $0x38] sm:$0xf]
      %v299 = vld [vmem:[%s245 + $0x3c] sm:$0xf]
      %v300 = vld [vmem:[%s249] sm:$0x1]
      %v302 = vlaneseq
      %v303 = vshrl.u32 %v302, 7
      %v304 = vsub.s32 0, %v303
      %v305 = vrot.slane %v300, %v304
      %v323 = vunpack.c.l.b16 %v284
      %v324 = vunpack.c.l.b16 %v285
      %v325 = vunpack.c.l.b16 %v286
      %v326 = vunpack.c.l.b16 %v287
      %v327 = vunpack.c.l.b16 %v288
      %v328 = vunpack.c.l.b16 %v289
      %v329 = vunpack.c.l.b16 %v290
      %v330 = vunpack.c.l.b16 %v291
      %v331 = vunpack.c.l.b16 %v292
      %v332 = vunpack.c.l.b16 %v293
      %v333 = vunpack.c.l.b16 %v294
      %v334 = vunpack.c.l.b16 %v295
      %v335 = vunpack.c.l.b16 %v296
      %v336 = vunpack.c.l.b16 %v297
      %v337 = vunpack.c.l.b16 %v298
      %v338 = vunpack.c.l.b16 %v299
      %v339 = vpack.c.b16 %v324, %v323
      %v340 = vpack.c.b16 %v326, %v325
      %v341 = vpack.c.b16 %v328, %v327
      %v342 = vpack.c.b16 %v330, %v329
      %v343 = vpack.c.b16 %v332, %v331
      %v344 = vpack.c.b16 %v334, %v333
      %v345 = vpack.c.b16 %v336, %v335
      %v346 = vpack.c.b16 %v338, %v337
      %355 = vmatprep.subr.bf16.mxu0 0
      %356 = vmatpush1.bf16.msra.mxu0 %v346
      %357 = vmatprep.subr.bf16.mxu0 0
      %358 = vmatpush1.bf16.msra.mxu0 %v345
      %359 = vmatprep.subr.bf16.mxu0 0
      %360 = vmatpush1.bf16.msra.mxu0 %v344
      %361 = vmatprep.subr.bf16.mxu0 0
      %362 = vmatpush1.bf16.msra.mxu0 %v343
      %363 = vmatprep.subr.bf16.mxu0 0
      %364 = vmatpush1.bf16.msra.mxu0 %v342
      %365 = vmatprep.subr.bf16.mxu0 0
      %366 = vmatpush1.bf16.msra.mxu0 %v341
      %367 = vmatprep.subr.bf16.mxu0 0
      %368 = vmatpush1.bf16.msra.mxu0 %v340
      %369 = vmatprep.subr.bf16.mxu0 0
      %370 = vmatpush1.bf16.msra.mxu0 %v339
      %371 = vmatprep.subr.bf16.mxu0 0
      %372 = vmatpush2.bf16.msra.mxu0 0
      %373 = vmatprep.subr.bf16.mxu0 0
      %374 = vmatpush2.bf16.msra.mxu0 0
      %375 = vmatprep.subr.bf16.mxu0 0
      %376 = vmatpush2.bf16.msra.mxu0 0
      %377 = vmatprep.subr.bf16.mxu0 0
      %378 = vmatpush2.bf16.msra.mxu0 0
      %379 = vmatprep.subr.bf16.mxu0 0
      %380 = vmatpush2.bf16.msra.mxu0 0
      %381 = vmatprep.subr.bf16.mxu0 0
      %382 = vmatpush2.bf16.msra.mxu0 0
      %383 = vmatprep.subr.bf16.mxu0 0
      %384 = vmatpush2.bf16.msra.mxu0 0
      %385 = vmatprep.subr.bf16.mxu0 0
      %386 = vmatpush2.bf16.msra.mxu0 0
      %387 = vmatprep.mubr.bf16.mxu0 0
      %388 = vmatmul.mubr.bf16.gmra.mxu0 %v276
      %v389 = vpop.f32.mrf.mxu0
      %v390 = vadd.f32 %v305, %v389
      %v391 = vpop.f32.mrf.mxu0
      %v392 = vpop.f32.mrf.mxu0
      %v393 = vadd.f32 %v305, %v392
      %v394 = vpop.f32.mrf.mxu0
      %395 = vmatprep.mubr.bf16.mxu0 0
      %396 = vmatmul.mubr.bf16.gmra.mxu0 %v277
      %v397 = vpop.f32.mrf.mxu0
      %v398 = vadd.f32 %v305, %v397
      %v399 = vpop.f32.mrf.mxu0
      %v400 = vpop.f32.mrf.mxu0
      %v401 = vadd.f32 %v305, %v400
      %v402 = vpop.f32.mrf.mxu0
      %403 = vmatprep.mubr.bf16.mxu0 0
      %404 = vmatmul.mubr.bf16.gmra.mxu0 %v278
      %v405 = vpop.f32.mrf.mxu0
      %v406 = vadd.f32 %v305, %v405
      %v407 = vpop.f32.mrf.mxu0
      %v408 = vpop.f32.mrf.mxu0
      %v409 = vadd.f32 %v305, %v408
      %v410 = vpop.f32.mrf.mxu0
      %411 = vmatprep.mubr.bf16.mxu0 0
      %412 = vmatmul.mubr.bf16.gmra.mxu0 %v279
      %v413 = vpop.f32.mrf.mxu0
      %v414 = vadd.f32 %v305, %v413
      %v415 = vpop.f32.mrf.mxu0
      %v416 = vpop.f32.mrf.mxu0
      %v417 = vadd.f32 %v305, %v416
      %v418 = vpop.f32.mrf.mxu0
      %419 = vmatprep.mubr.bf16.mxu0 0
      %420 = vmatmul.mubr.bf16.gmra.mxu0 %v280
      %v421 = vpop.f32.mrf.mxu0
      %v422 = vadd.f32 %v305, %v421
      %v423 = vpop.f32.mrf.mxu0
      %v424 = vpop.f32.mrf.mxu0
      %v425 = vadd.f32 %v305, %v424
      %v426 = vpop.f32.mrf.mxu0
      %427 = vmatprep.mubr.bf16.mxu0 0
      %428 = vmatmul.mubr.bf16.gmra.mxu0 %v281
      %v429 = vpop.f32.mrf.mxu0
      %v430 = vadd.f32 %v305, %v429
      %v431 = vpop.f32.mrf.mxu0
      %v432 = vpop.f32.mrf.mxu0
      %v433 = vadd.f32 %v305, %v432
      %v434 = vpop.f32.mrf.mxu0
      %435 = vmatprep.mubr.bf16.mxu0 0
      %436 = vmatmul.mubr.bf16.gmra.mxu0 %v282
      %v437 = vpop.f32.mrf.mxu0
      %v438 = vadd.f32 %v305, %v437
      %v439 = vpop.f32.mrf.mxu0
      %v440 = vpop.f32.mrf.mxu0
      %v441 = vadd.f32 %v305, %v440
      %v442 = vpop.f32.mrf.mxu0
      %443 = vmatprep.mubr.bf16.mxu0 0
      %444 = vmatmul.mubr.bf16.gmra.mxu0 %v283
      %v445 = vpop.f32.mrf.mxu0
      %v446 = vadd.f32 %v305, %v445
      %v447 = vpop.f32.mrf.mxu0
      %v448 = vpop.f32.mrf.mxu0
      %v449 = vadd.f32 %v305, %v448
      %v450 = vpop.f32.mrf.mxu0
      %451 = vdwg.mxu0
      %452 = vst [vmem:[%s257] sm:$0xff] %v390
      %453 = vst [vmem:[%s257 + $0x8] sm:$0xff] %v393
      %454 = vst [vmem:[%s257 + $0x10] sm:$0xff] %v398
      %455 = vst [vmem:[%s257 + $0x18] sm:$0xff] %v401
      %456 = vst [vmem:[%s257 + $0x20] sm:$0xff] %v406
      %457 = vst [vmem:[%s257 + $0x28] sm:$0xff] %v409
      %458 = vst [vmem:[%s257 + $0x30] sm:$0xff] %v414
      %459 = vst [vmem:[%s257 + $0x38] sm:$0xff] %v417
      %460 = vst [vmem:[%s257 + $0x40] sm:$0xff] %v422
      %461 = vst [vmem:[%s257 + $0x48] sm:$0xff] %v425
      %462 = vst [vmem:[%s257 + $0x50] sm:$0xff] %v430
      %463 = vst [vmem:[%s257 + $0x58] sm:$0xff] %v433
      %464 = vst [vmem:[%s257 + $0x60] sm:$0xff] %v438
      %465 = vst [vmem:[%s257 + $0x68] sm:$0xff] %v441
      %466 = vst [vmem:[%s257 + $0x70] sm:$0xff] %v446
      %467 = vst [vmem:[%s257 + $0x78] sm:$0xff] %v449
      %s468 = smul.u32 16, %s19
      %p469 = scmp.lt.s32.totalorder %s468, 31
      %s470 = scalar_select %p469, %s468, 31
      %p471 = scmp.lt.s32.totalorder %s20, 0
      %s472 = scalar_select %p471, %s20, 0
      %s473 = sadd.s32 %s472, %s470
      %s474 = smul.addr %s473, 8
      %s475 = scalar_lea.vmem %s3, %s474
      // Predicated region
      $region33: #{gnn_forward.11} parent=31 // pred_check
        %p476 = pneg %p135
      $region34: #{gnn_forward.11} parent=31 // pred_check_branch
        %478 = sbr.rel (%p476) target = $region36
      $region35: #{gnn_forward.11} parent=31 // pred_region
        %s479 = smul.u32 16, %s19
      $region36: #{gnn_forward.11} parent=31 // pred_fallthru
        _
    $region32: #{gnn_forward.11} parent=5 // pred_fallthru
      _
    %p480 = scmp.le.s32.totalorder 2, %s9
    // Predicated region
    $region37: #{gnn_forward.11} parent=5 // pred_check
      %p481 = pneg %p480
    $region38: #{gnn_forward.11} parent=5 // pred_check_branch
      %483 = sbr.rel (%p481) target = $region40
    $region39: #{gnn_forward.11} parent=5 // pred_region
      %s484 = ssub.s32 %s9, 2
      // Predicated region
      $region41: #{gnn_forward.11} parent=39 // pred_check
        %p485 = pneg %p141
      $region42: #{gnn_forward.11} parent=39 // pred_check_branch
        %487 = sbr.rel (%p485) target = $region44
      $region43: #{gnn_forward.11} parent=39 // pred_region
        %s488 = smul.u32 16, %s22
        %p489 = scmp.lt.s32.totalorder %s488, 31
        %s490 = scalar_select %p489, %s488, 31
        %p491 = scmp.lt.s32.totalorder %s23, 0
        %s492 = scalar_select %p491, %s23, 0
        %s493 = sadd.s32 %s492, %s490
        %s494 = smul.addr %s493, 8
        %s495 = scalar_lea.vmem %s3, %s494
      $region44: #{gnn_forward.11} parent=39 // pred_fallthru
        _
    $region40: #{gnn_forward.11} parent=5 // pred_fallthru
      _
  $region6: #{gnn_forward.11} parent=0 // loop_footer
    %s13 = sadd.s32 1, %s9
  $region7: #{gnn_forward.11} parent=0 // loop_footer_branch
    %8 = sbr.rel target = $region3
  $region8: #{gnn_forward.11} parent=0 // loop_exit
    _

</llo_original>
